<compile_context>
chip_gen: v7x
topology: tpu7x:2x2x1
jax: 0.10.0
libtpu: 0.0.40
codegen_flags: <defaults>
</compile_context>

<pallas_src>
import jax
import jax.numpy as jnp
from jax.experimental import pallas as pl
from jax.experimental.pallas import tpu as pltpu  # noqa: F401  (TPU backend)

# ----------------------------- config ---------------------------------------
BATCH = 2
SEQ = 8
BS = BATCH * SEQ
HIDDEN = 32
HEADS = 2
HEAD_DIM = HIDDEN // HEADS
FFN = 64
VOCAB = 100
NUM_TAGS = 4
LAYERS = 2
LN_EPS = 1e-12

LANE = 128          # lane-dense block width (per-head block / output width)
VOCAB_PAD = 128     # word-embedding table rows padded to one lane tile
FFN_PAD = LANE      # FFN hidden padded to 128 lanes (pads are exact zeros)
CLF_PAD = LANE      # classifier hidden padded to 128 lanes


# --------------------------- fused Pallas kernel -----------------------------
def _fused_bert_kernel(ids_ref, mask_ref, word_emb_ref, pos_type_ref,
                       emb_ln_g_ref, emb_ln_b_ref,
                       wqkv_ref, bqkv_ref, wo_ref, bo_ref,
                       ln1_g_ref, ln1_b_ref,
                       wffn1_ref, bffn1_ref, wffn2_ref, bffn2_ref,
                       ln2_g_ref, ln2_b_ref,
                       clf_w1_ref, clf_b1_ref, clf_w2_ref, clf_b2_ref,
                       o_ref):
    """Embedding lookup + whole BERT encoder + classifier head, VMEM-resident."""

    def layer_norm(x, g, b):
        mean = jnp.mean(x, axis=-1, keepdims=True)
        var = jnp.mean((x - mean) ** 2, axis=-1, keepdims=True)
        return (x - mean) * jax.lax.rsqrt(var + LN_EPS) * g + b

    def mm(a, w):
        # operands already in their matmul dtype; f32 accumulation on the MXU.
        return jnp.dot(a, w, preferred_element_type=jnp.float32)

    # ---- embedding: one-hot gather (exact), + pre-tiled pos/type embeddings --
    ids = ids_ref[...]                                            # [BS, 1] int32
    vocab_iota = jax.lax.broadcasted_iota(jnp.int32, (BS, VOCAB_PAD), 1)
    onehot = (vocab_iota == ids).astype(jnp.float32)              # [BS, 128]
    emb = mm(onehot, word_emb_ref[...]) + pos_type_ref[...]       # [BS, H] f32

    h = layer_norm(emb, emb_ln_g_ref[...], emb_ln_b_ref[...])
    h_bf = h.astype(jnp.bfloat16)

    # ---- additive attention-mask bias, built in-kernel, per (head, batch) ----
    maskf = mask_ref[...].astype(jnp.float32)                     # [B, S]
    bias = (1.0 - maskf) * -1e9
    bias_bh = jnp.concatenate([bias] * HEADS, axis=0)[:, None, :]  # [HEADS*B,1,S]

    for li in range(LAYERS):                     # static unroll, LAYERS=2
        # ---- fused QKV projection, per-head 128-lane output blocks -----------
        # block order: [Q_h0, Q_h1, K_h0, K_h1, V_h0, V_h1]; 1/sqrt(D) folded
        # into the Q blocks at pack time.
        qkv = mm(h_bf, wqkv_ref[li]) + bqkv_ref[li]               # [BS, 6*128] f32

        def head_block(kind, hd):
            i = kind * HEADS + hd                                  # 128-aligned
            return qkv[:, i * LANE:(i + 1) * LANE].reshape(BATCH, SEQ, LANE)

        q3 = jnp.concatenate([head_block(0, hd) for hd in range(HEADS)],
                             axis=0).astype(jnp.bfloat16)          # [HB, S, 128]
        k3 = jnp.concatenate([head_block(1, hd) for hd in range(HEADS)],
                             axis=0).astype(jnp.bfloat16)
        v3 = jnp.concatenate([head_block(2, hd) for hd in range(HEADS)],
                             axis=0).astype(jnp.bfloat16)

        # ---- attention: two batched contractions per layer -------------------
        s = jnp.einsum('bqd,bkd->bqk', q3, k3,
                       preferred_element_type=jnp.float32)         # [HB, S, S]
        s = s + bias_bh                                            # padding mask
        s = s - jnp.max(s, axis=-1, keepdims=True)
        p = jnp.exp(s)
        p = p * pl.reciprocal(jnp.sum(p, axis=-1, keepdims=True), approx=True)
        ctx3 = jnp.einsum('bqk,bkd->bqd', p.astype(jnp.bfloat16), v3,
                          preferred_element_type=jnp.float32)      # [HB, S, 128]

        # head merge = free 128-lane-block concat; Wo rows padded to match.
        ctx_cat = jnp.concatenate(
            [ctx3[hd * BATCH:(hd + 1) * BATCH].reshape(BS, LANE)
             for hd in range(HEADS)], axis=-1).astype(jnp.bfloat16)  # [BS, 2*128]

        # ---- attention output projection + residual + LN1 --------------------
        attn_out = mm(ctx_cat, wo_ref[li]) + bo_ref[li]
        h = layer_norm(attn_out + h, ln1_g_ref[li], ln1_b_ref[li])
        h_bf = h.astype(jnp.bfloat16)

        # ---- FFN (GELU) + residual + LN2 --------------------------------------
        # TODO(synk): HF BERT default hidden_act is the exact erf GELU; the
        # tanh approximation is used here for guaranteed Mosaic lowering.
        ffn = mm(h_bf, wffn1_ref[li]) + bffn1_ref[li]              # [BS, 128]
        ffn = jax.nn.gelu(ffn, approximate=True)
        ffn = mm(ffn.astype(jnp.bfloat16), wffn2_ref[li]) + bffn2_ref[li]
        h = layer_norm(ffn + h, ln2_g_ref[li], ln2_b_ref[li])
        h_bf = h.astype(jnp.bfloat16)

    # ---- classifier on the full [BS, H] tile (MXU idle; FLOPs negligible) ----
    # Linear -> Dropout(0.5, identity in eval) -> ReLU -> Linear (128-padded).
    ch = mm(h_bf, clf_w1_ref[...]) + clf_b1_ref[...]               # [BS, 128]
    ch = jnp.maximum(ch, 0.0)
    logits = mm(ch.astype(jnp.bfloat16), clf_w2_ref[...]) + clf_b2_ref[...]

    # Only the [CLS] rows (b*SEQ) are written; output stays lane-dense [B, 128].
    for b in range(BATCH):
        o_ref[b:b + 1, :] = logits[b * SEQ:b * SEQ + 1, :]


# ----------------------------- parameters ------------------------------------
def init_params(key):
    def dense(k, fan_in, fan_out):
        kw, _ = jax.random.split(k)
        w = jax.random.normal(kw, (fan_in, fan_out), jnp.float32) * (fan_in ** -0.5)
        b = jnp.zeros((1, fan_out), jnp.float32)
        return w, b

    keys = jax.random.split(key, 4 + LAYERS)
    params = {
        "word_emb": jax.random.normal(keys[0], (VOCAB, HIDDEN), jnp.float32) * 0.02,
        "pos_emb": jax.random.normal(keys[1], (SEQ, HIDDEN), jnp.float32) * 0.02,
        "type_emb": jax.random.normal(keys[2], (2, HIDDEN), jnp.float32) * 0.02,
        "emb_ln_g": jnp.ones((1, HIDDEN), jnp.float32),
        "emb_ln_b": jnp.zeros((1, HIDDEN), jnp.float32),
        "layers": [],
    }
    for li in range(LAYERS):
        ks = jax.random.split(keys[4 + li], 6)
        layer = {}
        layer["wq"], layer["bq"] = dense(ks[0], HIDDEN, HIDDEN)
        layer["wk"], layer["bk"] = dense(ks[1], HIDDEN, HIDDEN)
        layer["wv"], layer["bv"] = dense(ks[2], HIDDEN, HIDDEN)
        layer["wo"], layer["bo"] = dense(ks[3], HIDDEN, HIDDEN)
        layer["w_ffn1"], layer["b_ffn1"] = dense(ks[4], HIDDEN, FFN)
        layer["w_ffn2"], layer["b_ffn2"] = dense(ks[5], FFN, HIDDEN)
        layer["ln1_g"] = jnp.ones((1, HIDDEN), jnp.float32)
        layer["ln1_b"] = jnp.zeros((1, HIDDEN), jnp.float32)
        layer["ln2_g"] = jnp.ones((1, HIDDEN), jnp.float32)
        layer["ln2_b"] = jnp.zeros((1, HIDDEN), jnp.float32)
        params["layers"].append(layer)

    kc = jax.random.split(keys[3], 2)
    params["clf_w1"], params["clf_b1"] = dense(kc[0], HIDDEN, HIDDEN)
    params["clf_w2"], params["clf_b2"] = dense(kc[1], HIDDEN, NUM_TAGS)
    return params


def pack_params(params):
    """Stack per-layer weights on a leading layer axis, lay every matmul output
    split on a 128-lane boundary (per-head QKV blocks, padded FFN / classifier),
    pre-tile pos+type embeddings to the [B*S, H] activation layout, fold the
    attention scale into Q, and cast matmul weights to bf16."""
    L = params["layers"]
    scale = 1.0 / float(HEAD_DIM) ** 0.5

    def stack(name, dtype=jnp.float32):
        return jnp.stack([l[name] for l in L]).astype(dtype)

    # Word-embedding table padded to a full 128-row lane tile (rows >= VOCAB are
    # zero and never selected by the in-kernel one-hot gather).
    word_emb = (jnp.zeros((VOCAB_PAD, HIDDEN), jnp.float32)
                .at[:VOCAB].set(params["word_emb"]))

    # Position + token-type(0) embeddings pre-tiled to [B*S, H].
    pos_type = (jnp.tile(params["pos_emb"], (BATCH, 1))
                + params["type_emb"][0][None, :])

    def per_head_cols(w, b, scale_fac=1.0):
        # w: [H, H] -> [H, HEADS*128]; head h occupies lanes [h*128, h*128+D).
        wp = jnp.zeros((HIDDEN, HEADS * LANE), jnp.float32)
        bp = jnp.zeros((1, HEADS * LANE), jnp.float32)
        for hd in range(HEADS):
            wp = wp.at[:, hd * LANE:hd * LANE + HEAD_DIM].set(
                w[:, hd * HEAD_DIM:(hd + 1) * HEAD_DIM] * scale_fac)
            bp = bp.at[:, hd * LANE:hd * LANE + HEAD_DIM].set(
                b[:, hd * HEAD_DIM:(hd + 1) * HEAD_DIM] * scale_fac)
        return wp, bp

    wqkv_l, bqkv_l, wo_l = [], [], []
    for l in L:
        wq, bq = per_head_cols(l["wq"], l["bq"], scale)   # fold 1/sqrt(D) into Q
        wk, bk = per_head_cols(l["wk"], l["bk"])
        wv, bv = per_head_cols(l["wv"], l["bv"])
        wqkv_l.append(jnp.concatenate([wq, wk, wv], axis=1))     # [H, 6*128]
        bqkv_l.append(jnp.concatenate([bq, bk, bv], axis=1))     # [1, 6*128]
        wo_p = jnp.zeros((HEADS * LANE, HIDDEN), jnp.float32)    # rows per head
        for hd in range(HEADS):
            wo_p = wo_p.at[hd * LANE:hd * LANE + HEAD_DIM, :].set(
                l["wo"][hd * HEAD_DIM:(hd + 1) * HEAD_DIM, :])
        wo_l.append(wo_p)

    def pad_cols(w, b, out_pad):
        wp = jnp.zeros((w.shape[0], out_pad), jnp.float32).at[:, :w.shape[1]].set(w)
        bp = jnp.zeros((1, out_pad), jnp.float32).at[:, :b.shape[1]].set(b)
        return wp, bp

    def pad_rows(w, in_pad):
        return jnp.zeros((in_pad, w.shape[1]), jnp.float32).at[:w.shape[0], :].set(w)

    wffn1_l, bffn1_l, wffn2_l = [], [], []
    for l in L:
        w1p, b1p = pad_cols(l["w_ffn1"], l["b_ffn1"], FFN_PAD)
        wffn1_l.append(w1p)
        bffn1_l.append(b1p)
        wffn2_l.append(pad_rows(l["w_ffn2"], FFN_PAD))

    clf_w1p, clf_b1p = pad_cols(params["clf_w1"], params["clf_b1"], CLF_PAD)
    clf_w2p = pad_rows(jnp.zeros((HIDDEN, LANE), jnp.float32)
                       .at[:, :NUM_TAGS].set(params["clf_w2"]), CLF_PAD)
    clf_b2p = jnp.zeros((1, LANE), jnp.float32).at[:, :NUM_TAGS].set(params["clf_b2"])

    return {
        "word_emb": word_emb,
        "pos_type": pos_type,
        "emb_ln_g": params["emb_ln_g"],
        "emb_ln_b": params["emb_ln_b"],
        "wqkv": jnp.stack(wqkv_l).astype(jnp.bfloat16),
        "bqkv": jnp.stack(bqkv_l),
        "wo": jnp.stack(wo_l).astype(jnp.bfloat16),
        "bo": stack("bo"),
        "ln1_g": stack("ln1_g"), "ln1_b": stack("ln1_b"),
        "wffn1": jnp.stack(wffn1_l).astype(jnp.bfloat16),
        "bffn1": jnp.stack(bffn1_l),
        "wffn2": jnp.stack(wffn2_l).astype(jnp.bfloat16),
        "bffn2": stack("b_ffn2"),
        "ln2_g": stack("ln2_g"), "ln2_b": stack("ln2_b"),
        "clf_w1": clf_w1p.astype(jnp.bfloat16),
        "clf_b1": clf_b1p,
        "clf_w2": clf_w2p.astype(jnp.bfloat16),
        "clf_b2": clf_b2p,
    }


# ------------------------------ forward ---------------------------------------
@jax.jit
def bert_forward(packed, token_ids, attention_mask):
    # TODO(synk): the HF tokenizer (string -> ids / padding / truncation) is
    # pure string processing with no Pallas equivalent; token ids and the
    # attention mask are consumed directly.
    ids = token_ids.reshape(BS, 1).astype(jnp.int32)      # free row-major reshape
    mask = attention_mask.astype(jnp.int32)

    logits_pad = pl.pallas_call(
        _fused_bert_kernel,
        out_shape=jax.ShapeDtypeStruct((BATCH, LANE), jnp.float32),
    )(ids, mask,
      packed["word_emb"], packed["pos_type"],
      packed["emb_ln_g"], packed["emb_ln_b"],
      packed["wqkv"], packed["bqkv"], packed["wo"], packed["bo"],
      packed["ln1_g"], packed["ln1_b"],
      packed["wffn1"], packed["bffn1"], packed["wffn2"], packed["bffn2"],
      packed["ln2_g"], packed["ln2_b"],
      packed["clf_w1"], packed["clf_b1"], packed["clf_w2"], packed["clf_b2"])

    return logits_pad[:, :NUM_TAGS]                        # [B, NUM_TAGS]


# ------------------------------- main ------------------------------------------
if __name__ == "__main__":
    key = jax.random.PRNGKey(0)
    k_tok, k_params = jax.random.split(key)
    token_ids = jax.random.randint(k_tok, (BATCH, SEQ), 0, VOCAB, dtype=jnp.int32)
    attention_mask = jnp.ones((BATCH, SEQ), jnp.int32)   # synthetic batch: no padding
    params = init_params(k_params)
    packed = pack_params(params)

    logits = bert_forward(packed, token_ids, attention_mask)
    jax.block_until_ready(logits)
    assert logits.shape == (BATCH, NUM_TAGS)
    assert logits.dtype == jnp.float32
    print("KERNEL_OK")
</pallas_src>

<mosaic_0001>
module attributes {stable_mosaic.version = 11 : i64} {
  func.func @_fused_bert_kernel(%arg0: memref<16x1xi32, #tpu.memory_space<vmem>>, %arg1: memref<2x8xi32, #tpu.memory_space<vmem>>, %arg2: memref<128x32xf32, #tpu.memory_space<vmem>>, %arg3: memref<16x32xf32, #tpu.memory_space<vmem>>, %arg4: memref<1x32xf32, #tpu.memory_space<vmem>>, %arg5: memref<1x32xf32, #tpu.memory_space<vmem>>, %arg6: memref<2x32x768xbf16, #tpu.memory_space<vmem>>, %arg7: memref<2x1x768xf32, #tpu.memory_space<vmem>>, %arg8: memref<2x256x32xbf16, #tpu.memory_space<vmem>>, %arg9: memref<2x1x32xf32, #tpu.memory_space<vmem>>, %arg10: memref<2x1x32xf32, #tpu.memory_space<vmem>>, %arg11: memref<2x1x32xf32, #tpu.memory_space<vmem>>, %arg12: memref<2x32x128xbf16, #tpu.memory_space<vmem>>, %arg13: memref<2x1x128xf32, #tpu.memory_space<vmem>>, %arg14: memref<2x128x32xbf16, #tpu.memory_space<vmem>>, %arg15: memref<2x1x32xf32, #tpu.memory_space<vmem>>, %arg16: memref<2x1x32xf32, #tpu.memory_space<vmem>>, %arg17: memref<2x1x32xf32, #tpu.memory_space<vmem>>, %arg18: memref<32x128xbf16, #tpu.memory_space<vmem>>, %arg19: memref<1x128xf32, #tpu.memory_space<vmem>>, %arg20: memref<128x128xbf16, #tpu.memory_space<vmem>>, %arg21: memref<1x128xf32, #tpu.memory_space<vmem>>, %arg22: memref<2x128xf32, #tpu.memory_space<vmem>>) attributes {dimension_semantics = [], scalar_prefetch = 0 : i64, scratch_operands = 0 : i64, tpu.core_type = #tpu.core_type<tc>} {
    %c0 = arith.constant 0 : index
    %c0_0 = arith.constant 0 : index
    %0 = vector.load %arg0[%c0, %c0_0] : memref<16x1xi32, #tpu.memory_space<vmem>>, vector<16x1xi32>
    %1 = tpu.iota {dimensions = array<i32: 1>} : vector<16x128xi32>
    %2 = vector.broadcast %0 : vector<16x1xi32> to vector<16x128xi32>
    %3 = arith.cmpi eq, %1, %2 : vector<16x128xi32>
    %4 = arith.extui %3 : vector<16x128xi1> to vector<16x128xi32>
    %5 = arith.sitofp %4 : vector<16x128xi32> to vector<16x128xf32>
    %c0_1 = arith.constant 0 : index
    %c0_2 = arith.constant 0 : index
    %6 = vector.load %arg2[%c0_1, %c0_2] : memref<128x32xf32, #tpu.memory_space<vmem>>, vector<128x32xf32>
    %cst = arith.constant dense<0.000000e+00> : vector<16x32xf32>
    %7 = tpu.matmul %5, %6, %cst {dimension_numbers = #tpu.dot_dimension_numbers<[1], [0], [0], [1], [0, 0, 1, 1], [], []>} : vector<16x128xf32>, vector<128x32xf32>, vector<16x32xf32> -> vector<16x32xf32>
    %c0_3 = arith.constant 0 : index
    %c0_4 = arith.constant 0 : index
    %8 = vector.load %arg3[%c0_3, %c0_4] : memref<16x32xf32, #tpu.memory_space<vmem>>, vector<16x32xf32>
    %9 = arith.addf %7, %8 : vector<16x32xf32>
    %c0_5 = arith.constant 0 : index
    %c0_6 = arith.constant 0 : index
    %10 = vector.load %arg4[%c0_5, %c0_6] : memref<1x32xf32, #tpu.memory_space<vmem>>, vector<1x32xf32>
    %c0_7 = arith.constant 0 : index
    %c0_8 = arith.constant 0 : index
    %11 = vector.load %arg5[%c0_7, %c0_8] : memref<1x32xf32, #tpu.memory_space<vmem>>, vector<1x32xf32>
    %cst_9 = arith.constant dense<0.000000e+00> : vector<16xf32>
    %12 = vector.multi_reduction <add>, %9, %cst_9 [1] : vector<16x32xf32> to vector<16xf32>
    %13 = vector.shape_cast %12 : vector<16xf32> to vector<16x1xf32>
    %cst_10 = arith.constant 3.200000e+01 : f32
    %14 = vector.broadcast %cst_10 : f32 to vector<16x1xf32>
    %15 = arith.divf %13, %14 : vector<16x1xf32>
    %16 = vector.broadcast %15 : vector<16x1xf32> to vector<16x32xf32>
    %17 = arith.subf %9, %16 : vector<16x32xf32>
    %18 = arith.mulf %17, %17 : vector<16x32xf32>
    %cst_11 = arith.constant dense<0.000000e+00> : vector<16xf32>
    %19 = vector.multi_reduction <add>, %18, %cst_11 [1] : vector<16x32xf32> to vector<16xf32>
    %20 = vector.shape_cast %19 : vector<16xf32> to vector<16x1xf32>
    %cst_12 = arith.constant 3.200000e+01 : f32
    %21 = vector.broadcast %cst_12 : f32 to vector<16x1xf32>
    %22 = arith.divf %20, %21 : vector<16x1xf32>
    %23 = vector.broadcast %15 : vector<16x1xf32> to vector<16x32xf32>
    %24 = arith.subf %9, %23 : vector<16x32xf32>
    %cst_13 = arith.constant 9.99999996E-13 : f32
    %25 = vector.broadcast %cst_13 : f32 to vector<16x1xf32>
    %26 = arith.addf %22, %25 : vector<16x1xf32>
    %27 = math.rsqrt %26 : vector<16x1xf32>
    %28 = vector.broadcast %27 : vector<16x1xf32> to vector<16x32xf32>
    %29 = arith.mulf %24, %28 : vector<16x32xf32>
    %30 = vector.broadcast %10 : vector<1x32xf32> to vector<16x32xf32>
    %31 = arith.mulf %29, %30 : vector<16x32xf32>
    %32 = vector.broadcast %11 : vector<1x32xf32> to vector<16x32xf32>
    %33 = arith.addf %31, %32 : vector<16x32xf32>
    %34 = arith.truncf %33 : vector<16x32xf32> to vector<16x32xbf16>
    %c0_14 = arith.constant 0 : index
    %c0_15 = arith.constant 0 : index
    %35 = vector.load %arg1[%c0_14, %c0_15] : memref<2x8xi32, #tpu.memory_space<vmem>>, vector<2x8xi32>
    %36 = arith.sitofp %35 : vector<2x8xi32> to vector<2x8xf32>
    %cst_16 = arith.constant 1.000000e+00 : f32
    %37 = vector.broadcast %cst_16 : f32 to vector<2x8xf32>
    %38 = arith.subf %37, %36 : vector<2x8xf32>
    %cst_17 = arith.constant -1.000000e+09 : f32
    %39 = vector.broadcast %cst_17 : f32 to vector<2x8xf32>
    %40 = arith.mulf %38, %39 : vector<2x8xf32>
    %41 = tpu.concatenate %40, %40 in 0 : vector<2x8xf32>, vector<2x8xf32> -> vector<4x8xf32>
    %42 = vector.shape_cast %41 : vector<4x8xf32> to vector<4x1x8xf32>
    %c0_18 = arith.constant 0 : index
    %c0_19 = arith.constant 0 : index
    %c0_20 = arith.constant 0 : index
    %43 = vector.load %arg6[%c0_18, %c0_19, %c0_20] : memref<2x32x768xbf16, #tpu.memory_space<vmem>>, vector<1x32x768xbf16>
    %44 = vector.shape_cast %43 : vector<1x32x768xbf16> to vector<32x768xbf16>
    %cst_21 = arith.constant dense<0.000000e+00> : vector<16x768xf32>
    %45 = tpu.matmul %34, %44, %cst_21 {dimension_numbers = #tpu.dot_dimension_numbers<[1], [0], [0], [1], [0, 0, 1, 1], [], []>} : vector<16x32xbf16>, vector<32x768xbf16>, vector<16x768xf32> -> vector<16x768xf32>
    %c0_22 = arith.constant 0 : index
    %c0_23 = arith.constant 0 : index
    %c0_24 = arith.constant 0 : index
    %46 = vector.load %arg7[%c0_22, %c0_23, %c0_24] : memref<2x1x768xf32, #tpu.memory_space<vmem>>, vector<1x1x768xf32>
    %47 = vector.shape_cast %46 : vector<1x1x768xf32> to vector<1x768xf32>
    %48 = vector.broadcast %47 : vector<1x768xf32> to vector<16x768xf32>
    %49 = arith.addf %45, %48 : vector<16x768xf32>
    %50 = vector.extract_strided_slice %49 {offsets = [0, 0], sizes = [16, 128], strides = [1, 1]} : vector<16x768xf32> to vector<16x128xf32>
    %51 = vector.shape_cast %50 : vector<16x128xf32> to vector<2x8x128xf32>
    %52 = vector.extract_strided_slice %49 {offsets = [0, 128], sizes = [16, 128], strides = [1, 1]} : vector<16x768xf32> to vector<16x128xf32>
    %53 = vector.shape_cast %52 : vector<16x128xf32> to vector<2x8x128xf32>
    %54 = tpu.concatenate %51, %53 in 0 : vector<2x8x128xf32>, vector<2x8x128xf32> -> vector<4x8x128xf32>
    %55 = arith.truncf %54 : vector<4x8x128xf32> to vector<4x8x128xbf16>
    %56 = vector.extract_strided_slice %49 {offsets = [0, 256], sizes = [16, 128], strides = [1, 1]} : vector<16x768xf32> to vector<16x128xf32>
    %57 = vector.shape_cast %56 : vector<16x128xf32> to vector<2x8x128xf32>
    %58 = vector.extract_strided_slice %49 {offsets = [0, 384], sizes = [16, 128], strides = [1, 1]} : vector<16x768xf32> to vector<16x128xf32>
    %59 = vector.shape_cast %58 : vector<16x128xf32> to vector<2x8x128xf32>
    %60 = tpu.concatenate %57, %59 in 0 : vector<2x8x128xf32>, vector<2x8x128xf32> -> vector<4x8x128xf32>
    %61 = arith.truncf %60 : vector<4x8x128xf32> to vector<4x8x128xbf16>
    %62 = vector.extract_strided_slice %49 {offsets = [0, 512], sizes = [16, 128], strides = [1, 1]} : vector<16x768xf32> to vector<16x128xf32>
    %63 = vector.shape_cast %62 : vector<16x128xf32> to vector<2x8x128xf32>
    %64 = vector.extract_strided_slice %49 {offsets = [0, 640], sizes = [16, 128], strides = [1, 1]} : vector<16x768xf32> to vector<16x128xf32>
    %65 = vector.shape_cast %64 : vector<16x128xf32> to vector<2x8x128xf32>
    %66 = tpu.concatenate %63, %65 in 0 : vector<2x8x128xf32>, vector<2x8x128xf32> -> vector<4x8x128xf32>
    %67 = arith.truncf %66 : vector<4x8x128xf32> to vector<4x8x128xbf16>
    "tpu.trace_start"() <{level = 10 : i32, message = "bqd,bkd->bqk"}> : () -> ()
    %cst_25 = arith.constant dense<0.000000e+00> : vector<4x8x8xf32>
    %68 = tpu.matmul %55, %61, %cst_25 {dimension_numbers = #tpu.dot_dimension_numbers<[2], [2], [1], [1], [0, 0, 0, 1, 1, 1], [0], [0]>} : vector<4x8x128xbf16>, vector<4x8x128xbf16>, vector<4x8x8xf32> -> vector<4x8x8xf32>
    "tpu.trace_stop"() : () -> ()
    %69 = vector.broadcast %42 : vector<4x1x8xf32> to vector<4x8x8xf32>
    %70 = arith.addf %68, %69 : vector<4x8x8xf32>
    %cst_26 = arith.constant dense<0xFF800000> : vector<4x8xf32>
    %71 = vector.multi_reduction <maximumf>, %70, %cst_26 [2] : vector<4x8x8xf32> to vector<4x8xf32>
    %72 = vector.shape_cast %71 : vector<4x8xf32> to vector<4x8x1xf32>
    %73 = vector.broadcast %72 : vector<4x8x1xf32> to vector<4x8x8xf32>
    %74 = arith.subf %70, %73 : vector<4x8x8xf32>
    %75 = math.exp %74 : vector<4x8x8xf32>
    %cst_27 = arith.constant dense<0.000000e+00> : vector<4x8xf32>
    %76 = vector.multi_reduction <add>, %75, %cst_27 [2] : vector<4x8x8xf32> to vector<4x8xf32>
    %77 = vector.shape_cast %76 : vector<4x8xf32> to vector<4x8x1xf32>
    %78 = tpu.reciprocal %77 {approx = true} : vector<4x8x1xf32> -> vector<4x8x1xf32>
    %79 = vector.broadcast %78 : vector<4x8x1xf32> to vector<4x8x8xf32>
    %80 = arith.mulf %75, %79 : vector<4x8x8xf32>
    %81 = arith.truncf %80 : vector<4x8x8xf32> to vector<4x8x8xbf16>
    "tpu.trace_start"() <{level = 10 : i32, message = "bqk,bkd->bqd"}> : () -> ()
    %cst_28 = arith.constant dense<0.000000e+00> : vector<4x8x128xf32>
    %82 = tpu.matmul %81, %67, %cst_28 {dimension_numbers = #tpu.dot_dimension_numbers<[2], [1], [1], [2], [0, 0, 0, 1, 1, 2], [0], [0]>} : vector<4x8x8xbf16>, vector<4x8x128xbf16>, vector<4x8x128xf32> -> vector<4x8x128xf32>
    "tpu.trace_stop"() : () -> ()
    %83 = vector.extract_strided_slice %82 {offsets = [0, 0, 0], sizes = [2, 8, 128], strides = [1, 1, 1]} : vector<4x8x128xf32> to vector<2x8x128xf32>
    %84 = vector.shape_cast %83 : vector<2x8x128xf32> to vector<16x128xf32>
    %85 = vector.extract_strided_slice %82 {offsets = [2, 0, 0], sizes = [2, 8, 128], strides = [1, 1, 1]} : vector<4x8x128xf32> to vector<2x8x128xf32>
    %86 = vector.shape_cast %85 : vector<2x8x128xf32> to vector<16x128xf32>
    %87 = tpu.concatenate %84, %86 in 1 : vector<16x128xf32>, vector<16x128xf32> -> vector<16x256xf32>
    %88 = arith.truncf %87 : vector<16x256xf32> to vector<16x256xbf16>
    %c0_29 = arith.constant 0 : index
    %c0_30 = arith.constant 0 : index
    %c0_31 = arith.constant 0 : index
    %89 = vector.load %arg8[%c0_29, %c0_30, %c0_31] : memref<2x256x32xbf16, #tpu.memory_space<vmem>>, vector<1x256x32xbf16>
    %90 = vector.shape_cast %89 : vector<1x256x32xbf16> to vector<256x32xbf16>
    %cst_32 = arith.constant dense<0.000000e+00> : vector<16x32xf32>
    %91 = tpu.matmul %88, %90, %cst_32 {dimension_numbers = #tpu.dot_dimension_numbers<[1], [0], [0], [1], [0, 0, 1, 1], [], []>} : vector<16x256xbf16>, vector<256x32xbf16>, vector<16x32xf32> -> vector<16x32xf32>
    %c0_33 = arith.constant 0 : index
    %c0_34 = arith.constant 0 : index
    %c0_35 = arith.constant 0 : index
    %92 = vector.load %arg9[%c0_33, %c0_34, %c0_35] : memref<2x1x32xf32, #tpu.memory_space<vmem>>, vector<1x1x32xf32>
    %93 = vector.shape_cast %92 : vector<1x1x32xf32> to vector<1x32xf32>
    %94 = vector.broadcast %93 : vector<1x32xf32> to vector<16x32xf32>
    %95 = arith.addf %91, %94 : vector<16x32xf32>
    %96 = arith.addf %95, %33 : vector<16x32xf32>
    %c0_36 = arith.constant 0 : index
    %c0_37 = arith.constant 0 : index
    %c0_38 = arith.constant 0 : index
    %97 = vector.load %arg10[%c0_36, %c0_37, %c0_38] : memref<2x1x32xf32, #tpu.memory_space<vmem>>, vector<1x1x32xf32>
    %98 = vector.shape_cast %97 : vector<1x1x32xf32> to vector<1x32xf32>
    %c0_39 = arith.constant 0 : index
    %c0_40 = arith.constant 0 : index
    %c0_41 = arith.constant 0 : index
    %99 = vector.load %arg11[%c0_39, %c0_40, %c0_41] : memref<2x1x32xf32, #tpu.memory_space<vmem>>, vector<1x1x32xf32>
    %100 = vector.shape_cast %99 : vector<1x1x32xf32> to vector<1x32xf32>
    %cst_42 = arith.constant dense<0.000000e+00> : vector<16xf32>
    %101 = vector.multi_reduction <add>, %96, %cst_42 [1] : vector<16x32xf32> to vector<16xf32>
    %102 = vector.shape_cast %101 : vector<16xf32> to vector<16x1xf32>
    %cst_43 = arith.constant 3.200000e+01 : f32
    %103 = vector.broadcast %cst_43 : f32 to vector<16x1xf32>
    %104 = arith.divf %102, %103 : vector<16x1xf32>
    %105 = vector.broadcast %104 : vector<16x1xf32> to vector<16x32xf32>
    %106 = arith.subf %96, %105 : vector<16x32xf32>
    %107 = arith.mulf %106, %106 : vector<16x32xf32>
    %cst_44 = arith.constant dense<0.000000e+00> : vector<16xf32>
    %108 = vector.multi_reduction <add>, %107, %cst_44 [1] : vector<16x32xf32> to vector<16xf32>
    %109 = vector.shape_cast %108 : vector<16xf32> to vector<16x1xf32>
    %cst_45 = arith.constant 3.200000e+01 : f32
    %110 = vector.broadcast %cst_45 : f32 to vector<16x1xf32>
    %111 = arith.divf %109, %110 : vector<16x1xf32>
    %112 = vector.broadcast %104 : vector<16x1xf32> to vector<16x32xf32>
    %113 = arith.subf %96, %112 : vector<16x32xf32>
    %cst_46 = arith.constant 9.99999996E-13 : f32
    %114 = vector.broadcast %cst_46 : f32 to vector<16x1xf32>
    %115 = arith.addf %111, %114 : vector<16x1xf32>
    %116 = math.rsqrt %115 : vector<16x1xf32>
    %117 = vector.broadcast %116 : vector<16x1xf32> to vector<16x32xf32>
    %118 = arith.mulf %113, %117 : vector<16x32xf32>
    %119 = vector.broadcast %98 : vector<1x32xf32> to vector<16x32xf32>
    %120 = arith.mulf %118, %119 : vector<16x32xf32>
    %121 = vector.broadcast %100 : vector<1x32xf32> to vector<16x32xf32>
    %122 = arith.addf %120, %121 : vector<16x32xf32>
    %123 = arith.truncf %122 : vector<16x32xf32> to vector<16x32xbf16>
    %c0_47 = arith.constant 0 : index
    %c0_48 = arith.constant 0 : index
    %c0_49 = arith.constant 0 : index
    %124 = vector.load %arg12[%c0_47, %c0_48, %c0_49] : memref<2x32x128xbf16, #tpu.memory_space<vmem>>, vector<1x32x128xbf16>
    %125 = vector.shape_cast %124 : vector<1x32x128xbf16> to vector<32x128xbf16>
    %cst_50 = arith.constant dense<0.000000e+00> : vector<16x128xf32>
    %126 = tpu.matmul %123, %125, %cst_50 {dimension_numbers = #tpu.dot_dimension_numbers<[1], [0], [0], [1], [0, 0, 1, 1], [], []>} : vector<16x32xbf16>, vector<32x128xbf16>, vector<16x128xf32> -> vector<16x128xf32>
    %c0_51 = arith.constant 0 : index
    %c0_52 = arith.constant 0 : index
    %c0_53 = arith.constant 0 : index
    %127 = vector.load %arg13[%c0_51, %c0_52, %c0_53] : memref<2x1x128xf32, #tpu.memory_space<vmem>>, vector<1x1x128xf32>
    %128 = vector.shape_cast %127 : vector<1x1x128xf32> to vector<1x128xf32>
    %129 = vector.broadcast %128 : vector<1x128xf32> to vector<16x128xf32>
    %130 = arith.addf %126, %129 : vector<16x128xf32>
    %131 = arith.mulf %130, %130 : vector<16x128xf32>
    %132 = arith.mulf %130, %131 : vector<16x128xf32>
    %cst_54 = arith.constant 4.471500e-02 : f32
    %133 = vector.broadcast %cst_54 : f32 to vector<16x128xf32>
    %134 = arith.mulf %133, %132 : vector<16x128xf32>
    %135 = arith.addf %130, %134 : vector<16x128xf32>
    %cst_55 = arith.constant 0.797884583 : f32
    %136 = vector.broadcast %cst_55 : f32 to vector<16x128xf32>
    %137 = arith.mulf %136, %135 : vector<16x128xf32>
    %138 = math.tanh %137 : vector<16x128xf32>
    %cst_56 = arith.constant 1.000000e+00 : f32
    %139 = vector.broadcast %cst_56 : f32 to vector<16x128xf32>
    %140 = arith.addf %139, %138 : vector<16x128xf32>
    %cst_57 = arith.constant 5.000000e-01 : f32
    %141 = vector.broadcast %cst_57 : f32 to vector<16x128xf32>
    %142 = arith.mulf %141, %140 : vector<16x128xf32>
    %143 = arith.mulf %130, %142 : vector<16x128xf32>
    %144 = arith.truncf %143 : vector<16x128xf32> to vector<16x128xbf16>
    %c0_58 = arith.constant 0 : index
    %c0_59 = arith.constant 0 : index
    %c0_60 = arith.constant 0 : index
    %145 = vector.load %arg14[%c0_58, %c0_59, %c0_60] : memref<2x128x32xbf16, #tpu.memory_space<vmem>>, vector<1x128x32xbf16>
    %146 = vector.shape_cast %145 : vector<1x128x32xbf16> to vector<128x32xbf16>
    %cst_61 = arith.constant dense<0.000000e+00> : vector<16x32xf32>
    %147 = tpu.matmul %144, %146, %cst_61 {dimension_numbers = #tpu.dot_dimension_numbers<[1], [0], [0], [1], [0, 0, 1, 1], [], []>} : vector<16x128xbf16>, vector<128x32xbf16>, vector<16x32xf32> -> vector<16x32xf32>
    %c0_62 = arith.constant 0 : index
    %c0_63 = arith.constant 0 : index
    %c0_64 = arith.constant 0 : index
    %148 = vector.load %arg15[%c0_62, %c0_63, %c0_64] : memref<2x1x32xf32, #tpu.memory_space<vmem>>, vector<1x1x32xf32>
    %149 = vector.shape_cast %148 : vector<1x1x32xf32> to vector<1x32xf32>
    %150 = vector.broadcast %149 : vector<1x32xf32> to vector<16x32xf32>
    %151 = arith.addf %147, %150 : vector<16x32xf32>
    %152 = arith.addf %151, %122 : vector<16x32xf32>
    %c0_65 = arith.constant 0 : index
    %c0_66 = arith.constant 0 : index
    %c0_67 = arith.constant 0 : index
    %153 = vector.load %arg16[%c0_65, %c0_66, %c0_67] : memref<2x1x32xf32, #tpu.memory_space<vmem>>, vector<1x1x32xf32>
    %154 = vector.shape_cast %153 : vector<1x1x32xf32> to vector<1x32xf32>
    %c0_68 = arith.constant 0 : index
    %c0_69 = arith.constant 0 : index
    %c0_70 = arith.constant 0 : index
    %155 = vector.load %arg17[%c0_68, %c0_69, %c0_70] : memref<2x1x32xf32, #tpu.memory_space<vmem>>, vector<1x1x32xf32>
    %156 = vector.shape_cast %155 : vector<1x1x32xf32> to vector<1x32xf32>
    %cst_71 = arith.constant dense<0.000000e+00> : vector<16xf32>
    %157 = vector.multi_reduction <add>, %152, %cst_71 [1] : vector<16x32xf32> to vector<16xf32>
    %158 = vector.shape_cast %157 : vector<16xf32> to vector<16x1xf32>
    %cst_72 = arith.constant 3.200000e+01 : f32
    %159 = vector.broadcast %cst_72 : f32 to vector<16x1xf32>
    %160 = arith.divf %158, %159 : vector<16x1xf32>
    %161 = vector.broadcast %160 : vector<16x1xf32> to vector<16x32xf32>
    %162 = arith.subf %152, %161 : vector<16x32xf32>
    %163 = arith.mulf %162, %162 : vector<16x32xf32>
    %cst_73 = arith.constant dense<0.000000e+00> : vector<16xf32>
    %164 = vector.multi_reduction <add>, %163, %cst_73 [1] : vector<16x32xf32> to vector<16xf32>
    %165 = vector.shape_cast %164 : vector<16xf32> to vector<16x1xf32>
    %cst_74 = arith.constant 3.200000e+01 : f32
    %166 = vector.broadcast %cst_74 : f32 to vector<16x1xf32>
    %167 = arith.divf %165, %166 : vector<16x1xf32>
    %168 = vector.broadcast %160 : vector<16x1xf32> to vector<16x32xf32>
    %169 = arith.subf %152, %168 : vector<16x32xf32>
    %cst_75 = arith.constant 9.99999996E-13 : f32
    %170 = vector.broadcast %cst_75 : f32 to vector<16x1xf32>
    %171 = arith.addf %167, %170 : vector<16x1xf32>
    %172 = math.rsqrt %171 : vector<16x1xf32>
    %173 = vector.broadcast %172 : vector<16x1xf32> to vector<16x32xf32>
    %174 = arith.mulf %169, %173 : vector<16x32xf32>
    %175 = vector.broadcast %154 : vector<1x32xf32> to vector<16x32xf32>
    %176 = arith.mulf %174, %175 : vector<16x32xf32>
    %177 = vector.broadcast %156 : vector<1x32xf32> to vector<16x32xf32>
    %178 = arith.addf %176, %177 : vector<16x32xf32>
    %179 = arith.truncf %178 : vector<16x32xf32> to vector<16x32xbf16>
    %c1 = arith.constant 1 : index
    %c0_76 = arith.constant 0 : index
    %c0_77 = arith.constant 0 : index
    %180 = vector.load %arg6[%c1, %c0_76, %c0_77] : memref<2x32x768xbf16, #tpu.memory_space<vmem>>, vector<1x32x768xbf16>
    %181 = vector.shape_cast %180 : vector<1x32x768xbf16> to vector<32x768xbf16>
    %cst_78 = arith.constant dense<0.000000e+00> : vector<16x768xf32>
    %182 = tpu.matmul %179, %181, %cst_78 {dimension_numbers = #tpu.dot_dimension_numbers<[1], [0], [0], [1], [0, 0, 1, 1], [], []>} : vector<16x32xbf16>, vector<32x768xbf16>, vector<16x768xf32> -> vector<16x768xf32>
    %c1_79 = arith.constant 1 : index
    %c0_80 = arith.constant 0 : index
    %c0_81 = arith.constant 0 : index
    %183 = vector.load %arg7[%c1_79, %c0_80, %c0_81] : memref<2x1x768xf32, #tpu.memory_space<vmem>>, vector<1x1x768xf32>
    %184 = vector.shape_cast %183 : vector<1x1x768xf32> to vector<1x768xf32>
    %185 = vector.broadcast %184 : vector<1x768xf32> to vector<16x768xf32>
    %186 = arith.addf %182, %185 : vector<16x768xf32>
    %187 = vector.extract_strided_slice %186 {offsets = [0, 0], sizes = [16, 128], strides = [1, 1]} : vector<16x768xf32> to vector<16x128xf32>
    %188 = vector.shape_cast %187 : vector<16x128xf32> to vector<2x8x128xf32>
    %189 = vector.extract_strided_slice %186 {offsets = [0, 128], sizes = [16, 128], strides = [1, 1]} : vector<16x768xf32> to vector<16x128xf32>
    %190 = vector.shape_cast %189 : vector<16x128xf32> to vector<2x8x128xf32>
    %191 = tpu.concatenate %188, %190 in 0 : vector<2x8x128xf32>, vector<2x8x128xf32> -> vector<4x8x128xf32>
    %192 = arith.truncf %191 : vector<4x8x128xf32> to vector<4x8x128xbf16>
    %193 = vector.extract_strided_slice %186 {offsets = [0, 256], sizes = [16, 128], strides = [1, 1]} : vector<16x768xf32> to vector<16x128xf32>
    %194 = vector.shape_cast %193 : vector<16x128xf32> to vector<2x8x128xf32>
    %195 = vector.extract_strided_slice %186 {offsets = [0, 384], sizes = [16, 128], strides = [1, 1]} : vector<16x768xf32> to vector<16x128xf32>
    %196 = vector.shape_cast %195 : vector<16x128xf32> to vector<2x8x128xf32>
    %197 = tpu.concatenate %194, %196 in 0 : vector<2x8x128xf32>, vector<2x8x128xf32> -> vector<4x8x128xf32>
    %198 = arith.truncf %197 : vector<4x8x128xf32> to vector<4x8x128xbf16>
    %199 = vector.extract_strided_slice %186 {offsets = [0, 512], sizes = [16, 128], strides = [1, 1]} : vector<16x768xf32> to vector<16x128xf32>
    %200 = vector.shape_cast %199 : vector<16x128xf32> to vector<2x8x128xf32>
    %201 = vector.extract_strided_slice %186 {offsets = [0, 640], sizes = [16, 128], strides = [1, 1]} : vector<16x768xf32> to vector<16x128xf32>
    %202 = vector.shape_cast %201 : vector<16x128xf32> to vector<2x8x128xf32>
    %203 = tpu.concatenate %200, %202 in 0 : vector<2x8x128xf32>, vector<2x8x128xf32> -> vector<4x8x128xf32>
    %204 = arith.truncf %203 : vector<4x8x128xf32> to vector<4x8x128xbf16>
    "tpu.trace_start"() <{level = 10 : i32, message = "bqd,bkd->bqk"}> : () -> ()
    %cst_82 = arith.constant dense<0.000000e+00> : vector<4x8x8xf32>
    %205 = tpu.matmul %192, %198, %cst_82 {dimension_numbers = #tpu.dot_dimension_numbers<[2], [2], [1], [1], [0, 0, 0, 1, 1, 1], [0], [0]>} : vector<4x8x128xbf16>, vector<4x8x128xbf16>, vector<4x8x8xf32> -> vector<4x8x8xf32>
    "tpu.trace_stop"() : () -> ()
    %206 = vector.broadcast %42 : vector<4x1x8xf32> to vector<4x8x8xf32>
    %207 = arith.addf %205, %206 : vector<4x8x8xf32>
    %cst_83 = arith.constant dense<0xFF800000> : vector<4x8xf32>
    %208 = vector.multi_reduction <maximumf>, %207, %cst_83 [2] : vector<4x8x8xf32> to vector<4x8xf32>
    %209 = vector.shape_cast %208 : vector<4x8xf32> to vector<4x8x1xf32>
    %210 = vector.broadcast %209 : vector<4x8x1xf32> to vector<4x8x8xf32>
    %211 = arith.subf %207, %210 : vector<4x8x8xf32>
    %212 = math.exp %211 : vector<4x8x8xf32>
    %cst_84 = arith.constant dense<0.000000e+00> : vector<4x8xf32>
    %213 = vector.multi_reduction <add>, %212, %cst_84 [2] : vector<4x8x8xf32> to vector<4x8xf32>
    %214 = vector.shape_cast %213 : vector<4x8xf32> to vector<4x8x1xf32>
    %215 = tpu.reciprocal %214 {approx = true} : vector<4x8x1xf32> -> vector<4x8x1xf32>
    %216 = vector.broadcast %215 : vector<4x8x1xf32> to vector<4x8x8xf32>
    %217 = arith.mulf %212, %216 : vector<4x8x8xf32>
    %218 = arith.truncf %217 : vector<4x8x8xf32> to vector<4x8x8xbf16>
    "tpu.trace_start"() <{level = 10 : i32, message = "bqk,bkd->bqd"}> : () -> ()
    %cst_85 = arith.constant dense<0.000000e+00> : vector<4x8x128xf32>
    %219 = tpu.matmul %218, %204, %cst_85 {dimension_numbers = #tpu.dot_dimension_numbers<[2], [1], [1], [2], [0, 0, 0, 1, 1, 2], [0], [0]>} : vector<4x8x8xbf16>, vector<4x8x128xbf16>, vector<4x8x128xf32> -> vector<4x8x128xf32>
    "tpu.trace_stop"() : () -> ()
    %220 = vector.extract_strided_slice %219 {offsets = [0, 0, 0], sizes = [2, 8, 128], strides = [1, 1, 1]} : vector<4x8x128xf32> to vector<2x8x128xf32>
    %221 = vector.shape_cast %220 : vector<2x8x128xf32> to vector<16x128xf32>
    %222 = vector.extract_strided_slice %219 {offsets = [2, 0, 0], sizes = [2, 8, 128], strides = [1, 1, 1]} : vector<4x8x128xf32> to vector<2x8x128xf32>
    %223 = vector.shape_cast %222 : vector<2x8x128xf32> to vector<16x128xf32>
    %224 = tpu.concatenate %221, %223 in 1 : vector<16x128xf32>, vector<16x128xf32> -> vector<16x256xf32>
    %225 = arith.truncf %224 : vector<16x256xf32> to vector<16x256xbf16>
    %c1_86 = arith.constant 1 : index
    %c0_87 = arith.constant 0 : index
    %c0_88 = arith.constant 0 : index
    %226 = vector.load %arg8[%c1_86, %c0_87, %c0_88] : memref<2x256x32xbf16, #tpu.memory_space<vmem>>, vector<1x256x32xbf16>
    %227 = vector.shape_cast %226 : vector<1x256x32xbf16> to vector<256x32xbf16>
    %cst_89 = arith.constant dense<0.000000e+00> : vector<16x32xf32>
    %228 = tpu.matmul %225, %227, %cst_89 {dimension_numbers = #tpu.dot_dimension_numbers<[1], [0], [0], [1], [0, 0, 1, 1], [], []>} : vector<16x256xbf16>, vector<256x32xbf16>, vector<16x32xf32> -> vector<16x32xf32>
    %c1_90 = arith.constant 1 : index
    %c0_91 = arith.constant 0 : index
    %c0_92 = arith.constant 0 : index
    %229 = vector.load %arg9[%c1_90, %c0_91, %c0_92] : memref<2x1x32xf32, #tpu.memory_space<vmem>>, vector<1x1x32xf32>
    %230 = vector.shape_cast %229 : vector<1x1x32xf32> to vector<1x32xf32>
    %231 = vector.broadcast %230 : vector<1x32xf32> to vector<16x32xf32>
    %232 = arith.addf %228, %231 : vector<16x32xf32>
    %233 = arith.addf %232, %178 : vector<16x32xf32>
    %c1_93 = arith.constant 1 : index
    %c0_94 = arith.constant 0 : index
    %c0_95 = arith.constant 0 : index
    %234 = vector.load %arg10[%c1_93, %c0_94, %c0_95] : memref<2x1x32xf32, #tpu.memory_space<vmem>>, vector<1x1x32xf32>
    %235 = vector.shape_cast %234 : vector<1x1x32xf32> to vector<1x32xf32>
    %c1_96 = arith.constant 1 : index
    %c0_97 = arith.constant 0 : index
    %c0_98 = arith.constant 0 : index
    %236 = vector.load %arg11[%c1_96, %c0_97, %c0_98] : memref<2x1x32xf32, #tpu.memory_space<vmem>>, vector<1x1x32xf32>
    %237 = vector.shape_cast %236 : vector<1x1x32xf32> to vector<1x32xf32>
    %cst_99 = arith.constant dense<0.000000e+00> : vector<16xf32>
    %238 = vector.multi_reduction <add>, %233, %cst_99 [1] : vector<16x32xf32> to vector<16xf32>
    %239 = vector.shape_cast %238 : vector<16xf32> to vector<16x1xf32>
    %cst_100 = arith.constant 3.200000e+01 : f32
    %240 = vector.broadcast %cst_100 : f32 to vector<16x1xf32>
    %241 = arith.divf %239, %240 : vector<16x1xf32>
    %242 = vector.broadcast %241 : vector<16x1xf32> to vector<16x32xf32>
    %243 = arith.subf %233, %242 : vector<16x32xf32>
    %244 = arith.mulf %243, %243 : vector<16x32xf32>
    %cst_101 = arith.constant dense<0.000000e+00> : vector<16xf32>
    %245 = vector.multi_reduction <add>, %244, %cst_101 [1] : vector<16x32xf32> to vector<16xf32>
    %246 = vector.shape_cast %245 : vector<16xf32> to vector<16x1xf32>
    %cst_102 = arith.constant 3.200000e+01 : f32
    %247 = vector.broadcast %cst_102 : f32 to vector<16x1xf32>
    %248 = arith.divf %246, %247 : vector<16x1xf32>
    %249 = vector.broadcast %241 : vector<16x1xf32> to vector<16x32xf32>
    %250 = arith.subf %233, %249 : vector<16x32xf32>
    %cst_103 = arith.constant 9.99999996E-13 : f32
    %251 = vector.broadcast %cst_103 : f32 to vector<16x1xf32>
    %252 = arith.addf %248, %251 : vector<16x1xf32>
    %253 = math.rsqrt %252 : vector<16x1xf32>
    %254 = vector.broadcast %253 : vector<16x1xf32> to vector<16x32xf32>
    %255 = arith.mulf %250, %254 : vector<16x32xf32>
    %256 = vector.broadcast %235 : vector<1x32xf32> to vector<16x32xf32>
    %257 = arith.mulf %255, %256 : vector<16x32xf32>
    %258 = vector.broadcast %237 : vector<1x32xf32> to vector<16x32xf32>
    %259 = arith.addf %257, %258 : vector<16x32xf32>
    %260 = arith.truncf %259 : vector<16x32xf32> to vector<16x32xbf16>
    %c1_104 = arith.constant 1 : index
    %c0_105 = arith.constant 0 : index
    %c0_106 = arith.constant 0 : index
    %261 = vector.load %arg12[%c1_104, %c0_105, %c0_106] : memref<2x32x128xbf16, #tpu.memory_space<vmem>>, vector<1x32x128xbf16>
    %262 = vector.shape_cast %261 : vector<1x32x128xbf16> to vector<32x128xbf16>
    %cst_107 = arith.constant dense<0.000000e+00> : vector<16x128xf32>
    %263 = tpu.matmul %260, %262, %cst_107 {dimension_numbers = #tpu.dot_dimension_numbers<[1], [0], [0], [1], [0, 0, 1, 1], [], []>} : vector<16x32xbf16>, vector<32x128xbf16>, vector<16x128xf32> -> vector<16x128xf32>
    %c1_108 = arith.constant 1 : index
    %c0_109 = arith.constant 0 : index
    %c0_110 = arith.constant 0 : index
    %264 = vector.load %arg13[%c1_108, %c0_109, %c0_110] : memref<2x1x128xf32, #tpu.memory_space<vmem>>, vector<1x1x128xf32>
    %265 = vector.shape_cast %264 : vector<1x1x128xf32> to vector<1x128xf32>
    %266 = vector.broadcast %265 : vector<1x128xf32> to vector<16x128xf32>
    %267 = arith.addf %263, %266 : vector<16x128xf32>
    %268 = arith.mulf %267, %267 : vector<16x128xf32>
    %269 = arith.mulf %267, %268 : vector<16x128xf32>
    %cst_111 = arith.constant 4.471500e-02 : f32
    %270 = vector.broadcast %cst_111 : f32 to vector<16x128xf32>
    %271 = arith.mulf %270, %269 : vector<16x128xf32>
    %272 = arith.addf %267, %271 : vector<16x128xf32>
    %cst_112 = arith.constant 0.797884583 : f32
    %273 = vector.broadcast %cst_112 : f32 to vector<16x128xf32>
    %274 = arith.mulf %273, %272 : vector<16x128xf32>
    %275 = math.tanh %274 : vector<16x128xf32>
    %cst_113 = arith.constant 1.000000e+00 : f32
    %276 = vector.broadcast %cst_113 : f32 to vector<16x128xf32>
    %277 = arith.addf %276, %275 : vector<16x128xf32>
    %cst_114 = arith.constant 5.000000e-01 : f32
    %278 = vector.broadcast %cst_114 : f32 to vector<16x128xf32>
    %279 = arith.mulf %278, %277 : vector<16x128xf32>
    %280 = arith.mulf %267, %279 : vector<16x128xf32>
    %281 = arith.truncf %280 : vector<16x128xf32> to vector<16x128xbf16>
    %c1_115 = arith.constant 1 : index
    %c0_116 = arith.constant 0 : index
    %c0_117 = arith.constant 0 : index
    %282 = vector.load %arg14[%c1_115, %c0_116, %c0_117] : memref<2x128x32xbf16, #tpu.memory_space<vmem>>, vector<1x128x32xbf16>
    %283 = vector.shape_cast %282 : vector<1x128x32xbf16> to vector<128x32xbf16>
    %cst_118 = arith.constant dense<0.000000e+00> : vector<16x32xf32>
    %284 = tpu.matmul %281, %283, %cst_118 {dimension_numbers = #tpu.dot_dimension_numbers<[1], [0], [0], [1], [0, 0, 1, 1], [], []>} : vector<16x128xbf16>, vector<128x32xbf16>, vector<16x32xf32> -> vector<16x32xf32>
    %c1_119 = arith.constant 1 : index
    %c0_120 = arith.constant 0 : index
    %c0_121 = arith.constant 0 : index
    %285 = vector.load %arg15[%c1_119, %c0_120, %c0_121] : memref<2x1x32xf32, #tpu.memory_space<vmem>>, vector<1x1x32xf32>
    %286 = vector.shape_cast %285 : vector<1x1x32xf32> to vector<1x32xf32>
    %287 = vector.broadcast %286 : vector<1x32xf32> to vector<16x32xf32>
    %288 = arith.addf %284, %287 : vector<16x32xf32>
    %289 = arith.addf %288, %259 : vector<16x32xf32>
    %c1_122 = arith.constant 1 : index
    %c0_123 = arith.constant 0 : index
    %c0_124 = arith.constant 0 : index
    %290 = vector.load %arg16[%c1_122, %c0_123, %c0_124] : memref<2x1x32xf32, #tpu.memory_space<vmem>>, vector<1x1x32xf32>
    %291 = vector.shape_cast %290 : vector<1x1x32xf32> to vector<1x32xf32>
    %c1_125 = arith.constant 1 : index
    %c0_126 = arith.constant 0 : index
    %c0_127 = arith.constant 0 : index
    %292 = vector.load %arg17[%c1_125, %c0_126, %c0_127] : memref<2x1x32xf32, #tpu.memory_space<vmem>>, vector<1x1x32xf32>
    %293 = vector.shape_cast %292 : vector<1x1x32xf32> to vector<1x32xf32>
    %cst_128 = arith.constant dense<0.000000e+00> : vector<16xf32>
    %294 = vector.multi_reduction <add>, %289, %cst_128 [1] : vector<16x32xf32> to vector<16xf32>
    %295 = vector.shape_cast %294 : vector<16xf32> to vector<16x1xf32>
    %cst_129 = arith.constant 3.200000e+01 : f32
    %296 = vector.broadcast %cst_129 : f32 to vector<16x1xf32>
    %297 = arith.divf %295, %296 : vector<16x1xf32>
    %298 = vector.broadcast %297 : vector<16x1xf32> to vector<16x32xf32>
    %299 = arith.subf %289, %298 : vector<16x32xf32>
    %300 = arith.mulf %299, %299 : vector<16x32xf32>
    %cst_130 = arith.constant dense<0.000000e+00> : vector<16xf32>
    %301 = vector.multi_reduction <add>, %300, %cst_130 [1] : vector<16x32xf32> to vector<16xf32>
    %302 = vector.shape_cast %301 : vector<16xf32> to vector<16x1xf32>
    %cst_131 = arith.constant 3.200000e+01 : f32
    %303 = vector.broadcast %cst_131 : f32 to vector<16x1xf32>
    %304 = arith.divf %302, %303 : vector<16x1xf32>
    %305 = vector.broadcast %297 : vector<16x1xf32> to vector<16x32xf32>
    %306 = arith.subf %289, %305 : vector<16x32xf32>
    %cst_132 = arith.constant 9.99999996E-13 : f32
    %307 = vector.broadcast %cst_132 : f32 to vector<16x1xf32>
    %308 = arith.addf %304, %307 : vector<16x1xf32>
    %309 = math.rsqrt %308 : vector<16x1xf32>
    %310 = vector.broadcast %309 : vector<16x1xf32> to vector<16x32xf32>
    %311 = arith.mulf %306, %310 : vector<16x32xf32>
    %312 = vector.broadcast %291 : vector<1x32xf32> to vector<16x32xf32>
    %313 = arith.mulf %311, %312 : vector<16x32xf32>
    %314 = vector.broadcast %293 : vector<1x32xf32> to vector<16x32xf32>
    %315 = arith.addf %313, %314 : vector<16x32xf32>
    %316 = arith.truncf %315 : vector<16x32xf32> to vector<16x32xbf16>
    %c0_133 = arith.constant 0 : index
    %c0_134 = arith.constant 0 : index
    %317 = vector.load %arg18[%c0_133, %c0_134] : memref<32x128xbf16, #tpu.memory_space<vmem>>, vector<32x128xbf16>
    %cst_135 = arith.constant dense<0.000000e+00> : vector<16x128xf32>
    %318 = tpu.matmul %316, %317, %cst_135 {dimension_numbers = #tpu.dot_dimension_numbers<[1], [0], [0], [1], [0, 0, 1, 1], [], []>} : vector<16x32xbf16>, vector<32x128xbf16>, vector<16x128xf32> -> vector<16x128xf32>
    %c0_136 = arith.constant 0 : index
    %c0_137 = arith.constant 0 : index
    %319 = vector.load %arg19[%c0_136, %c0_137] : memref<1x128xf32, #tpu.memory_space<vmem>>, vector<1x128xf32>
    %320 = vector.broadcast %319 : vector<1x128xf32> to vector<16x128xf32>
    %321 = arith.addf %318, %320 : vector<16x128xf32>
    %cst_138 = arith.constant 0.000000e+00 : f32
    %322 = vector.broadcast %cst_138 : f32 to vector<16x128xf32>
    %323 = arith.maximumf %321, %322 : vector<16x128xf32>
    %324 = arith.truncf %323 : vector<16x128xf32> to vector<16x128xbf16>
    %c0_139 = arith.constant 0 : index
    %c0_140 = arith.constant 0 : index
    %325 = vector.load %arg20[%c0_139, %c0_140] : memref<128x128xbf16, #tpu.memory_space<vmem>>, vector<128x128xbf16>
    %cst_141 = arith.constant dense<0.000000e+00> : vector<16x128xf32>
    %326 = tpu.matmul %324, %325, %cst_141 {dimension_numbers = #tpu.dot_dimension_numbers<[1], [0], [0], [1], [0, 0, 1, 1], [], []>} : vector<16x128xbf16>, vector<128x128xbf16>, vector<16x128xf32> -> vector<16x128xf32>
    %c0_142 = arith.constant 0 : index
    %c0_143 = arith.constant 0 : index
    %327 = vector.load %arg21[%c0_142, %c0_143] : memref<1x128xf32, #tpu.memory_space<vmem>>, vector<1x128xf32>
    %328 = vector.broadcast %327 : vector<1x128xf32> to vector<16x128xf32>
    %329 = arith.addf %326, %328 : vector<16x128xf32>
    %330 = vector.extract_strided_slice %329 {offsets = [0, 0], sizes = [1, 128], strides = [1, 1]} : vector<16x128xf32> to vector<1x128xf32>
    %c0_144 = arith.constant 0 : index
    %c0_145 = arith.constant 0 : index
    %331 = vector.load %arg22[%c0_144, %c0_145] : memref<2x128xf32, #tpu.memory_space<vmem>>, vector<1x128xf32>
    tpu.vector_store %arg22[%c0_144, %c0_145], %330 {strides = array<i32>} : memref<2x128xf32, #tpu.memory_space<vmem>>, vector<1x128xf32>,
    %332 = vector.extract_strided_slice %329 {offsets = [8, 0], sizes = [1, 128], strides = [1, 1]} : vector<16x128xf32> to vector<1x128xf32>
    %c1_146 = arith.constant 1 : index
    %c0_147 = arith.constant 0 : index
    %333 = vector.load %arg22[%c1_146, %c0_147] : memref<2x128xf32, #tpu.memory_space<vmem>>, vector<1x128xf32>
    tpu.vector_store %arg22[%c1_146, %c0_147], %332 {strides = array<i32>} : memref<2x128xf32, #tpu.memory_space<vmem>>, vector<1x128xf32>,
    return
  }
}

</mosaic_0001>

<llo_original>
// kernel: bert_forward.1
$region0: #{bert_forward.1}
  #allocation0 [shape = 'u32[]', space=smem, size = 0x4, offset = 0x4, fixed_abs, tag = 'smem constant byte address 0x4 - core index']
  #allocation1 [shape = 'u32[144,128]{1,0:T(1,128)}', space=vmem, size = 0x12000, scoped, tag = 'internal scratch']
  %s0 = inlined_call_operand.vmem [shape: s32[16,1], index: 0, kind: input, shape index: {}]
  %s1 = inlined_call_operand.vmem [shape: s32[2,8], index: 1, kind: input, shape index: {}]
  %s2 = inlined_call_operand.vmem [shape: f32[128,32], index: 2, kind: input, shape index: {}]
  %s3 = inlined_call_operand.vmem [shape: f32[16,32], index: 3, kind: input, shape index: {}]
  %s4 = inlined_call_operand.vmem [shape: f32[1,32], index: 4, kind: input, shape index: {}]
  %s5 = inlined_call_operand.vmem [shape: f32[1,32], index: 5, kind: input, shape index: {}]
  %s6 = inlined_call_operand.vmem [shape: bf16[2,32,768], index: 6, kind: input, shape index: {}]
  %s7 = inlined_call_operand.vmem [shape: f32[2,1,768], index: 7, kind: input, shape index: {}]
  %s8 = inlined_call_operand.vmem [shape: bf16[2,256,32], index: 8, kind: input, shape index: {}]
  %s9 = inlined_call_operand.vmem [shape: f32[2,1,32], index: 9, kind: input, shape index: {}]
  %s10 = inlined_call_operand.vmem [shape: f32[2,1,32], index: 10, kind: input, shape index: {}]
  %s11 = inlined_call_operand.vmem [shape: f32[2,1,32], index: 11, kind: input, shape index: {}]
  %s12 = inlined_call_operand.vmem [shape: bf16[2,32,128], index: 12, kind: input, shape index: {}]
  %s13 = inlined_call_operand.vmem [shape: f32[2,1,128], index: 13, kind: input, shape index: {}]
  %s14 = inlined_call_operand.vmem [shape: bf16[2,128,32], index: 14, kind: input, shape index: {}]
  %s15 = inlined_call_operand.vmem [shape: f32[2,1,32], index: 15, kind: input, shape index: {}]
  %s16 = inlined_call_operand.vmem [shape: f32[2,1,32], index: 16, kind: input, shape index: {}]
  %s17 = inlined_call_operand.vmem [shape: f32[2,1,32], index: 17, kind: input, shape index: {}]
  %s18 = inlined_call_operand.vmem [shape: bf16[32,128], index: 18, kind: input, shape index: {}]
  %s19 = inlined_call_operand.vmem [shape: f32[1,128], index: 19, kind: input, shape index: {}]
  %s20 = inlined_call_operand.vmem [shape: bf16[128,128], index: 20, kind: input, shape index: {}]
  %s21 = inlined_call_operand.vmem [shape: f32[1,128], index: 21, kind: input, shape index: {}]
  %s22 = inlined_call_operand.hbm [shape: f32[2,128], index: 22, kind: output, shape index: {}]
  %s23 = sld [smem:[#allocation0]]
  $region98: #{bert_forward.1} parent=0
    _
  %s25 = ssub.s32 1, %s23
  %s26 = scalar_select 0, %s25, %s23
  $region1: #{bert_forward.1} parent=0
    #allocation2 [shape = 'u8[1024]{0}', space=vmem, size = 0x400, scoped, tag = 'output window, operand 0, single buffered']
    #allocation3 [shape = 's32[1]{0}', space=sflag, size = 0x4, scoped, tag = 'scoped memory for bert_forward.1']
    %27 = vsyncpa [#allocation3], 0
    // Predicated region
    $region2: #{bert_forward.1} parent=1 // pred_check
      _
    $region3: #{bert_forward.1} parent=1 // pred_check_branch
      %29 = sbr.rel (0) target = $region5
    $region4: #{bert_forward.1} parent=1 // pred_region
      _
    $region5: #{bert_forward.1} parent=1 // pred_fallthru
      _
    // Predicated region
    $region6: #{bert_forward.1} parent=1 // pred_check
      _
    $region7: #{bert_forward.1} parent=1 // pred_check_branch
      %31 = sbr.rel (0) target = $region9
    $region8: #{bert_forward.1} parent=1 // pred_region
      _
    $region9: #{bert_forward.1} parent=1 // pred_fallthru
      _
    // Predicated region
    $region10: #{bert_forward.1} parent=1 // pred_check
      _
    $region11: #{bert_forward.1} parent=1 // pred_check_branch
      %33 = sbr.rel (0) target = $region13
    $region12: #{bert_forward.1} parent=1 // pred_region
      _
    $region13: #{bert_forward.1} parent=1 // pred_fallthru
      _
    // Predicated region
    $region14: #{bert_forward.1} parent=1 // pred_check
      _
    $region15: #{bert_forward.1} parent=1 // pred_check_branch
      %35 = sbr.rel (0) target = $region17
    $region16: #{bert_forward.1} parent=1 // pred_region
      _
    $region17: #{bert_forward.1} parent=1 // pred_fallthru
      _
    // Predicated region
    $region18: #{bert_forward.1} parent=1 // pred_check
      _
    $region19: #{bert_forward.1} parent=1 // pred_check_branch
      %37 = sbr.rel (0) target = $region21
    $region20: #{bert_forward.1} parent=1 // pred_region
      _
    $region21: #{bert_forward.1} parent=1 // pred_fallthru
      _
    // Predicated region
    $region22: #{bert_forward.1} parent=1 // pred_check
      _
    $region23: #{bert_forward.1} parent=1 // pred_check_branch
      %39 = sbr.rel (0) target = $region25
    $region24: #{bert_forward.1} parent=1 // pred_region
      _
    $region25: #{bert_forward.1} parent=1 // pred_fallthru
      _
    // Predicated region
    $region26: #{bert_forward.1} parent=1 // pred_check
      _
    $region27: #{bert_forward.1} parent=1 // pred_check_branch
      %41 = sbr.rel (0) target = $region29
    $region28: #{bert_forward.1} parent=1 // pred_region
      _
    $region29: #{bert_forward.1} parent=1 // pred_fallthru
      _
    // Predicated region
    $region30: #{bert_forward.1} parent=1 // pred_check
      _
    $region31: #{bert_forward.1} parent=1 // pred_check_branch
      %43 = sbr.rel (0) target = $region33
    $region32: #{bert_forward.1} parent=1 // pred_region
      _
    $region33: #{bert_forward.1} parent=1 // pred_fallthru
      _
    // Predicated region
    $region34: #{bert_forward.1} parent=1 // pred_check
      _
    $region35: #{bert_forward.1} parent=1 // pred_check_branch
      %45 = sbr.rel (0) target = $region37
    $region36: #{bert_forward.1} parent=1 // pred_region
      _
    $region37: #{bert_forward.1} parent=1 // pred_fallthru
      _
    // Predicated region
    $region38: #{bert_forward.1} parent=1 // pred_check
      _
    $region39: #{bert_forward.1} parent=1 // pred_check_branch
      %47 = sbr.rel (0) target = $region41
    $region40: #{bert_forward.1} parent=1 // pred_region
      _
    $region41: #{bert_forward.1} parent=1 // pred_fallthru
      _
    // Predicated region
    $region42: #{bert_forward.1} parent=1 // pred_check
      _
    $region43: #{bert_forward.1} parent=1 // pred_check_branch
      %49 = sbr.rel (0) target = $region45
    $region44: #{bert_forward.1} parent=1 // pred_region
      _
    $region45: #{bert_forward.1} parent=1 // pred_fallthru
      _
    // Predicated region
    $region46: #{bert_forward.1} parent=1 // pred_check
      _
    $region47: #{bert_forward.1} parent=1 // pred_check_branch
      %51 = sbr.rel (0) target = $region49
    $region48: #{bert_forward.1} parent=1 // pred_region
      _
    $region49: #{bert_forward.1} parent=1 // pred_fallthru
      _
    // Predicated region
    $region50: #{bert_forward.1} parent=1 // pred_check
      _
    $region51: #{bert_forward.1} parent=1 // pred_check_branch
      %53 = sbr.rel (0) target = $region53
    $region52: #{bert_forward.1} parent=1 // pred_region
      _
    $region53: #{bert_forward.1} parent=1 // pred_fallthru
      _
    // Predicated region
    $region54: #{bert_forward.1} parent=1 // pred_check
      _
    $region55: #{bert_forward.1} parent=1 // pred_check_branch
      %55 = sbr.rel (0) target = $region57
    $region56: #{bert_forward.1} parent=1 // pred_region
      _
    $region57: #{bert_forward.1} parent=1 // pred_fallthru
      _
    // Predicated region
    $region58: #{bert_forward.1} parent=1 // pred_check
      _
    $region59: #{bert_forward.1} parent=1 // pred_check_branch
      %57 = sbr.rel (0) target = $region61
    $region60: #{bert_forward.1} parent=1 // pred_region
      _
    $region61: #{bert_forward.1} parent=1 // pred_fallthru
      _
    // Predicated region
    $region62: #{bert_forward.1} parent=1 // pred_check
      _
    $region63: #{bert_forward.1} parent=1 // pred_check_branch
      %59 = sbr.rel (0) target = $region65
    $region64: #{bert_forward.1} parent=1 // pred_region
      _
    $region65: #{bert_forward.1} parent=1 // pred_fallthru
      _
    // Predicated region
    $region66: #{bert_forward.1} parent=1 // pred_check
      _
    $region67: #{bert_forward.1} parent=1 // pred_check_branch
      %61 = sbr.rel (0) target = $region69
    $region68: #{bert_forward.1} parent=1 // pred_region
      _
    $region69: #{bert_forward.1} parent=1 // pred_fallthru
      _
    // Predicated region
    $region70: #{bert_forward.1} parent=1 // pred_check
      _
    $region71: #{bert_forward.1} parent=1 // pred_check_branch
      %63 = sbr.rel (0) target = $region73
    $region72: #{bert_forward.1} parent=1 // pred_region
      _
    $region73: #{bert_forward.1} parent=1 // pred_fallthru
      _
    // Predicated region
    $region74: #{bert_forward.1} parent=1 // pred_check
      _
    $region75: #{bert_forward.1} parent=1 // pred_check_branch
      %65 = sbr.rel (0) target = $region77
    $region76: #{bert_forward.1} parent=1 // pred_region
      _
    $region77: #{bert_forward.1} parent=1 // pred_fallthru
      _
    // Predicated region
    $region78: #{bert_forward.1} parent=1 // pred_check
      _
    $region79: #{bert_forward.1} parent=1 // pred_check_branch
      %67 = sbr.rel (0) target = $region81
    $region80: #{bert_forward.1} parent=1 // pred_region
      _
    $region81: #{bert_forward.1} parent=1 // pred_fallthru
      _
    // Predicated region
    $region82: #{bert_forward.1} parent=1 // pred_check
      _
    $region83: #{bert_forward.1} parent=1 // pred_check_branch
      %69 = sbr.rel (0) target = $region85
    $region84: #{bert_forward.1} parent=1 // pred_region
      _
    $region85: #{bert_forward.1} parent=1 // pred_fallthru
      _
    // Predicated region
    $region86: #{bert_forward.1} parent=1 // pred_check
      _
    $region87: #{bert_forward.1} parent=1 // pred_check_branch
      %71 = sbr.rel (0) target = $region89
    $region88: #{bert_forward.1} parent=1 // pred_region
      _
    $region89: #{bert_forward.1} parent=1 // pred_fallthru
      _
    %v73 = vld [vmem:[%s0] sm:$0xff]
    %v74 = vld [vmem:[%s0 + $0x8] sm:$0xff]
    %v75 = vlaneseq
    %v76 = vand.u32 %v75, 127
    %77 = vset.pattern.permute.xlu0 0
    %78 = vperm.xlu0 %77, %v73
    %v79 = vpop.permute.xlu0 %78
    %80 = vset.pattern.permute.xlu0 0
    %81 = vperm.xlu0 %80, %v74
    %v82 = vpop.permute.xlu0 %81
    %vm83 = vcmp.eq.s32.totalorder %v76, %v79
    %vm84 = vcmp.eq.s32.totalorder %v76, %v82
    %v85 = vsel %vm83, 1, 0
    %v86 = vsel %vm84, 1, 0
    %v87 = vcvt.s32.f32 %v85
    %v88 = vcvt.s32.f32 %v86
    %v89 = vld [vmem:[%s2] sm:$0xff]
    %v90 = vld [vmem:[%s2 + $0x8] sm:$0xff]
    %v91 = vld [vmem:[%s2 + $0x10] sm:$0xff]
    %v92 = vld [vmem:[%s2 + $0x18] sm:$0xff]
    %v93 = vld [vmem:[%s2 + $0x20] sm:$0xff]
    %v94 = vld [vmem:[%s2 + $0x28] sm:$0xff]
    %v95 = vld [vmem:[%s2 + $0x30] sm:$0xff]
    %v96 = vld [vmem:[%s2 + $0x38] sm:$0xff]
    %v97 = vld [vmem:[%s2 + $0x40] sm:$0xff]
    %v98 = vld [vmem:[%s2 + $0x48] sm:$0xff]
    %v99 = vld [vmem:[%s2 + $0x50] sm:$0xff]
    %v100 = vld [vmem:[%s2 + $0x58] sm:$0xff]
    %v101 = vld [vmem:[%s2 + $0x60] sm:$0xff]
    %v102 = vld [vmem:[%s2 + $0x68] sm:$0xff]
    %v103 = vld [vmem:[%s2 + $0x70] sm:$0xff]
    %v104 = vld [vmem:[%s2 + $0x78] sm:$0xff]
    %v105 = vld [vmem:[%s3] sm:$0xff]
    %v106 = vld [vmem:[%s3 + $0x8] sm:$0xff]
    %107 = vmatprep.subr.mxu0 0.0
    %108 = vmatpush1.msra.mxu0 %v89
    %109 = vmatprep.subr.mxu0 0.0
    %110 = vmatpush1.msra.mxu0 %v90
    %111 = vmatprep.subr.mxu0 0.0
    %112 = vmatpush1.msra.mxu0 %v91
    %113 = vmatprep.subr.mxu0 0.0
    %114 = vmatpush1.msra.mxu0 %v92
    %115 = vmatprep.subr.mxu0 0.0
    %116 = vmatpush1.msra.mxu0 %v93
    %117 = vmatprep.subr.mxu0 0.0
    %118 = vmatpush1.msra.mxu0 %v94
    %119 = vmatprep.subr.mxu0 0.0
    %120 = vmatpush1.msra.mxu0 %v95
    %121 = vmatprep.subr.mxu0 0.0
    %122 = vmatpush1.msra.mxu0 %v96
    %123 = vmatprep.subr.mxu0 0.0
    %124 = vmatpush1.msra.mxu0 %v97
    %125 = vmatprep.subr.mxu0 0.0
    %126 = vmatpush1.msra.mxu0 %v98
    %127 = vmatprep.subr.mxu0 0.0
    %128 = vmatpush1.msra.mxu0 %v99
    %129 = vmatprep.subr.mxu0 0.0
    %130 = vmatpush1.msra.mxu0 %v100
    %131 = vmatprep.subr.mxu0 0.0
    %132 = vmatpush1.msra.mxu0 %v101
    %133 = vmatprep.subr.mxu0 0.0
    %134 = vmatpush1.msra.mxu0 %v102
    %135 = vmatprep.subr.mxu0 0.0
    %136 = vmatpush1.msra.mxu0 %v103
    %137 = vmatprep.subr.mxu0 0.0
    %138 = vmatpush1.msra.mxu0 %v104
    %139 = vmatprep.subr.mxu0 0.0
    %140 = vmatpush1.msra.mxu0 0.0
    %141 = vmatprep.subr.mxu0 0.0
    %142 = vmatpush1.msra.mxu0 0.0
    %143 = vmatprep.subr.mxu0 0.0
    %144 = vmatpush1.msra.mxu0 0.0
    %145 = vmatprep.subr.mxu0 0.0
    %146 = vmatpush1.msra.mxu0 0.0
    %147 = vmatprep.subr.mxu0 0.0
    %148 = vmatpush1.msra.mxu0 0.0
    %149 = vmatprep.subr.mxu0 0.0
    %150 = vmatpush1.msra.mxu0 0.0
    %151 = vmatprep.subr.mxu0 0.0
    %152 = vmatpush1.msra.mxu0 0.0
    %153 = vmatprep.subr.mxu0 0.0
    %154 = vmatpush1.msra.mxu0 0.0
    %155 = vmatprep.subr.mxu0 0.0
    %156 = vmatpush1.msra.mxu0 0.0
    %157 = vmatprep.subr.mxu0 0.0
    %158 = vmatpush1.msra.mxu0 0.0
    %159 = vmatprep.subr.mxu0 0.0
    %160 = vmatpush1.msra.mxu0 0.0
    %161 = vmatprep.subr.mxu0 0.0
    %162 = vmatpush1.msra.mxu0 0.0
    %163 = vmatprep.subr.mxu0 0.0
    %164 = vmatpush1.msra.mxu0 0.0
    %165 = vmatprep.subr.mxu0 0.0
    %166 = vmatpush1.msra.mxu0 0.0
    %167 = vmatprep.subr.mxu0 0.0
    %168 = vmatpush1.msra.mxu0 0.0
    %169 = vmatprep.subr.mxu0 0.0
    %170 = vmatpush1.msra.mxu0 0.0
    %171 = vmatprep.mubr.f32.mxu0 0.0
    %172 = vmatmul.mubr.f32.gmra.mrb[0].mxu0 %v87
    %v173 = vpop.f32.mrb[0].mxu0
    %v174 = vadd.f32 %v105, %v173
    %v175 = vpop.f32.mrb[0].mxu0
    %176 = vmatprep.mubr.f32.mxu0 0.0
    %177 = vmatmul.mubr.f32.gmra.mrb[0].mxu0 %v88
    %v178 = vpop.f32.mrb[0].mxu0
    %v179 = vadd.f32 %v106, %v178
    %v180 = vpop.f32.mrb[0].mxu0
    %181 = vdwg.mxu0
    %v182 = vld [vmem:[%s4] sm:$0x1]
    %v183 = vld [vmem:[%s5] sm:$0x1]
    %vm184 = vcmask 261120
    %v185 = vsel %vm184, %v174, 0.0
    %186 = vadd.xlane.f32.xlu0 %v185
    %v187 = vpop.xlane.xlu0 %186
    %v188 = vsel %vm184, %v179, 0.0
    %189 = vadd.xlane.f32.xlu0 %v188
    %v190 = vpop.xlane.xlu0 %189
    %v191 = vrcp.pop 32.0
    %v192 = vmul.f32 %v187, %v191
    %v193 = vmul.f32 %v190, %v191
    %v194 = vsub.f32 %v174, %v192
    %v195 = vsub.f32 %v179, %v193
    %v196 = vmul.f32 %v194, %v194
    %v197 = vmul.f32 %v195, %v195
    %v198 = vsel %vm184, %v196, 0.0
    %199 = vadd.xlane.f32.xlu0 %v198
    %v200 = vpop.xlane.xlu0 %199
    %v201 = vsel %vm184, %v197, 0.0
    %202 = vadd.xlane.f32.xlu0 %v201
    %v203 = vpop.xlane.xlu0 %202
    %v204 = vmul.f32 %v200, %v191
    %v205 = vmul.f32 %v203, %v191
    %v206 = vadd.f32 %v204, 1e-12
    %v207 = vadd.f32 %v205, 1e-12
    %v208 = vrsqrt.pop %v206
    %v209 = vrsqrt.pop %v207
    %v210 = vmul.f32 %v194, %v208
    %v211 = vmul.f32 %v195, %v209
    %v213 = vlaneseq
    %v214 = vshrl.u32 %v213, 7
    %v215 = vsub.s32 0, %v214
    %v216 = vrot.slane %v182, %v215
    %v218 = vmul.f32 %v210, %v216
    %v219 = vmul.f32 %v211, %v216
    %v221 = vlaneseq
    %v222 = vshrl.u32 %v221, 7
    %v223 = vsub.s32 0, %v222
    %v224 = vrot.slane %v183, %v223
    %v226 = vadd.f32 %v218, %v224
    %v227 = vadd.f32 %v219, %v224
    %v228 = vpack.c.bf16 %v227, %v226
    %v229 = vld [vmem:[%s1] sm:$0x3]
    %v230 = vcvt.s32.f32 %v229
    %v231 = vsub.f32 1.0, %v230
    %v232 = vmul.f32 %v231, -1e+09
    %v234 = vrot.slane %v232, 6
    %vm236 = vcmask 1041408
    %v237 = vsel %vm236, %v232, %v234
    %v240 = vunpack.c.l.s4 1966171168
    %v241 = vunpack.c.0.s8 %v240
    %v242 = vlaneseq
    %v243 = vshrl.u32 %v242, 7
    %v244 = vsub.s32 %v241, %v243
    %v245 = vrot.slane %v237, %v244
    %v246 = vcombine.high %v245, %v245
    %v248 = vunpack.c.l.s4 1966171168
    %v249 = vunpack.c.0.s8 %v248
    %v250 = vlaneseq
    %v251 = vshrl.u32 %v250, 7
    %v252 = vsub.s32 %v249, %v251
    %v253 = vrot.slane %v245, %v252
    %v255 = vunpack.c.l.s4 1966171168
    %v256 = vunpack.c.0.s8 %v255
    %v257 = vlaneseq
    %v258 = vshrl.u32 %v257, 7
    %v259 = vsub.s32 %v256, %v258
    %v260 = vrot.slane %v246, %v259
    %v261 = vcombine.high %v253, %v253
    %v262 = vcombine.high %v260, %v260
    %v263 = vld [vmem:[%s6] sm:$0xff]
    %v264 = vld [vmem:[%s6 + $0x8] sm:$0xff]
    %v265 = vld [vmem:[%s6 + $0x10] sm:$0xff]
    %v266 = vld [vmem:[%s6 + $0x18] sm:$0xff]
    %v267 = vld [vmem:[%s6 + $0x20] sm:$0xff]
    %v268 = vld [vmem:[%s6 + $0x28] sm:$0xff]
    %v269 = vld [vmem:[%s6 + $0x30] sm:$0xff]
    %v270 = vld [vmem:[%s6 + $0x38] sm:$0xff]
    %v271 = vld [vmem:[%s6 + $0x40] sm:$0xff]
    %v272 = vld [vmem:[%s6 + $0x48] sm:$0xff]
    %v273 = vld [vmem:[%s6 + $0x50] sm:$0xff]
    %v274 = vld [vmem:[%s6 + $0x58] sm:$0xff]
    %v275 = vld [vmem:[%s7] sm:$0x3f]
    %v277 = vlaneseq
    %v278 = vshrl.u32 %v277, 7
    %v279 = vsub.s32 0, %v278
    %v280 = vrot.slane %v275, %v279
    %v281 = vlaneseq
    %v282 = vshrl.u32 %v281, 7
    %v283 = vsub.s32 1, %v282
    %v284 = vrot.slane %v275, %v283
    %v285 = vlaneseq
    %v286 = vshrl.u32 %v285, 7
    %v287 = vsub.s32 2, %v286
    %v288 = vrot.slane %v275, %v287
    %v289 = vlaneseq
    %v290 = vshrl.u32 %v289, 7
    %v291 = vsub.s32 3, %v290
    %v292 = vrot.slane %v275, %v291
    %v293 = vlaneseq
    %v294 = vshrl.u32 %v293, 7
    %v295 = vsub.s32 4, %v294
    %v296 = vrot.slane %v275, %v295
    %v297 = vlaneseq
    %v298 = vshrl.u32 %v297, 7
    %v299 = vsub.s32 5, %v298
    %v300 = vrot.slane %v275, %v299
    %v319 = vunpack.c.l.b16 %v263
    %v320 = vunpack.c.h.b16 %v263
    %v321 = vunpack.c.l.b16 %v264
    %v322 = vunpack.c.h.b16 %v264
    %v323 = vunpack.c.l.b16 %v265
    %v324 = vunpack.c.h.b16 %v265
    %v325 = vunpack.c.l.b16 %v266
    %v326 = vunpack.c.h.b16 %v266
    %v327 = vunpack.c.l.b16 %v267
    %v328 = vunpack.c.h.b16 %v267
    %v329 = vunpack.c.l.b16 %v268
    %v330 = vunpack.c.h.b16 %v268
    %v331 = vunpack.c.l.b16 %v269
    %v332 = vunpack.c.h.b16 %v269
    %v333 = vunpack.c.l.b16 %v270
    %v334 = vunpack.c.h.b16 %v270
    %v335 = vunpack.c.l.b16 %v271
    %v336 = vunpack.c.h.b16 %v271
    %v337 = vunpack.c.l.b16 %v272
    %v338 = vunpack.c.h.b16 %v272
    %v339 = vunpack.c.l.b16 %v273
    %v340 = vunpack.c.h.b16 %v273
    %v341 = vunpack.c.l.b16 %v274
    %v342 = vunpack.c.h.b16 %v274
    %v343 = vpack.c.b16 %v325, %v319
    %v344 = vpack.c.b16 %v326, %v320
    %v345 = vpack.c.b16 %v327, %v321
    %v346 = vpack.c.b16 %v328, %v322
    %v347 = vpack.c.b16 %v329, %v323
    %v348 = vpack.c.b16 %v330, %v324
    %v349 = vpack.c.b16 %v337, %v331
    %v350 = vpack.c.b16 %v338, %v332
    %v351 = vpack.c.b16 %v339, %v333
    %v352 = vpack.c.b16 %v340, %v334
    %v353 = vpack.c.b16 %v341, %v335
    %v354 = vpack.c.b16 %v342, %v336
    %v368 = vsel %vm184, %v228, 0
    %370 = vmatprep.subr.bf16.mxu0 %v344
    %371 = vmatpush1.bf16.msra.mxu0 %v343
    %372 = vmatprep.subr.bf16.mxu0 %v350
    %373 = vmatpush1.bf16.msra.mxu0 %v349
    %374 = vmatprep.subr.bf16.mxu0 0
    %375 = vmatpush1.bf16.msra.mxu0 0
    %376 = vmatprep.subr.bf16.mxu0 0
    %377 = vmatpush1.bf16.msra.mxu0 0
    %378 = vmatprep.subr.bf16.mxu0 0
    %379 = vmatpush1.bf16.msra.mxu0 0
    %380 = vmatprep.subr.bf16.mxu0 0
    %381 = vmatpush1.bf16.msra.mxu0 0
    %382 = vmatprep.subr.bf16.mxu0 0
    %383 = vmatpush1.bf16.msra.mxu0 0
    %384 = vmatprep.subr.bf16.mxu0 0
    %385 = vmatpush1.bf16.msra.mxu0 0
    %386 = vmatprep.subr.bf16.mxu0 0
    %387 = vmatpush1.bf16.msra.mxu0 0
    %388 = vmatprep.subr.bf16.mxu0 0
    %389 = vmatpush1.bf16.msra.mxu0 0
    %390 = vmatprep.subr.bf16.mxu0 0
    %391 = vmatpush1.bf16.msra.mxu0 0
    %392 = vmatprep.subr.bf16.mxu0 0
    %393 = vmatpush1.bf16.msra.mxu0 0
    %394 = vmatprep.subr.bf16.mxu0 0
    %395 = vmatpush1.bf16.msra.mxu0 0
    %396 = vmatprep.subr.bf16.mxu0 0
    %397 = vmatpush1.bf16.msra.mxu0 0
    %398 = vmatprep.subr.bf16.mxu0 0
    %399 = vmatpush1.bf16.msra.mxu0 0
    %400 = vmatprep.subr.bf16.mxu0 0
    %401 = vmatpush1.bf16.msra.mxu0 0
    %402 = vmatprep.mubr.bf16.mxu0 0
    %403 = vmatmul.mubr.bf16.gmra.mrb[0].mxu0 %v368
    %v404 = vpop.f32.mrb[0].mxu0
    %v405 = vadd.f32 %v280, %v404
    %v406 = vpop.f32.mrb[0].mxu0
    %v407 = vadd.f32 %v284, %v406
    %v408 = vpop.f32.mrb[0].mxu0
    %v409 = vadd.f32 %v280, %v408
    %v410 = vpop.f32.mrb[0].mxu0
    %v411 = vadd.f32 %v284, %v410
    %412 = vdwg.mxu0
    %413 = vmatprep.subr.bf16.mxu0 %v346
    %414 = vmatpush1.bf16.msra.mxu0 %v345
    %415 = vmatprep.subr.bf16.mxu0 %v352
    %416 = vmatpush1.bf16.msra.mxu0 %v351
    %417 = vmatprep.subr.bf16.mxu0 0
    %418 = vmatpush1.bf16.msra.mxu0 0
    %419 = vmatprep.subr.bf16.mxu0 0
    %420 = vmatpush1.bf16.msra.mxu0 0
    %421 = vmatprep.subr.bf16.mxu0 0
    %422 = vmatpush1.bf16.msra.mxu0 0
    %423 = vmatprep.subr.bf16.mxu0 0
    %424 = vmatpush1.bf16.msra.mxu0 0
    %425 = vmatprep.subr.bf16.mxu0 0
    %426 = vmatpush1.bf16.msra.mxu0 0
    %427 = vmatprep.subr.bf16.mxu0 0
    %428 = vmatpush1.bf16.msra.mxu0 0
    %429 = vmatprep.subr.bf16.mxu0 0
    %430 = vmatpush1.bf16.msra.mxu0 0
    %431 = vmatprep.subr.bf16.mxu0 0
    %432 = vmatpush1.bf16.msra.mxu0 0
    %433 = vmatprep.subr.bf16.mxu0 0
    %434 = vmatpush1.bf16.msra.mxu0 0
    %435 = vmatprep.subr.bf16.mxu0 0
    %436 = vmatpush1.bf16.msra.mxu0 0
    %437 = vmatprep.subr.bf16.mxu0 0
    %438 = vmatpush1.bf16.msra.mxu0 0
    %439 = vmatprep.subr.bf16.mxu0 0
    %440 = vmatpush1.bf16.msra.mxu0 0
    %441 = vmatprep.subr.bf16.mxu0 0
    %442 = vmatpush1.bf16.msra.mxu0 0
    %443 = vmatprep.subr.bf16.mxu0 0
    %444 = vmatpush1.bf16.msra.mxu0 0
    %445 = vmatprep.mubr.bf16.mxu0 0
    %446 = vmatmul.mubr.bf16.gmra.mrb[0].mxu0 %v368
    %v447 = vpop.f32.mrb[0].mxu0
    %v448 = vadd.f32 %v288, %v447
    %v449 = vpop.f32.mrb[0].mxu0
    %v450 = vadd.f32 %v292, %v449
    %v451 = vpop.f32.mrb[0].mxu0
    %v452 = vadd.f32 %v288, %v451
    %v453 = vpop.f32.mrb[0].mxu0
    %v454 = vadd.f32 %v292, %v453
    %455 = vdwg.mxu0
    %456 = vmatprep.subr.bf16.mxu0 %v348
    %457 = vmatpush1.bf16.msra.mxu0 %v347
    %458 = vmatprep.subr.bf16.mxu0 %v354
    %459 = vmatpush1.bf16.msra.mxu0 %v353
    %460 = vmatprep.subr.bf16.mxu0 0
    %461 = vmatpush1.bf16.msra.mxu0 0
    %462 = vmatprep.subr.bf16.mxu0 0
    %463 = vmatpush1.bf16.msra.mxu0 0
    %464 = vmatprep.subr.bf16.mxu0 0
    %465 = vmatpush1.bf16.msra.mxu0 0
    %466 = vmatprep.subr.bf16.mxu0 0
    %467 = vmatpush1.bf16.msra.mxu0 0
    %468 = vmatprep.subr.bf16.mxu0 0
    %469 = vmatpush1.bf16.msra.mxu0 0
    %470 = vmatprep.subr.bf16.mxu0 0
    %471 = vmatpush1.bf16.msra.mxu0 0
    %472 = vmatprep.subr.bf16.mxu0 0
    %473 = vmatpush1.bf16.msra.mxu0 0
    %474 = vmatprep.subr.bf16.mxu0 0
    %475 = vmatpush1.bf16.msra.mxu0 0
    %476 = vmatprep.subr.bf16.mxu0 0
    %477 = vmatpush1.bf16.msra.mxu0 0
    %478 = vmatprep.subr.bf16.mxu0 0
    %479 = vmatpush1.bf16.msra.mxu0 0
    %480 = vmatprep.subr.bf16.mxu0 0
    %481 = vmatpush1.bf16.msra.mxu0 0
    %482 = vmatprep.subr.bf16.mxu0 0
    %483 = vmatpush1.bf16.msra.mxu0 0
    %484 = vmatprep.subr.bf16.mxu0 0
    %485 = vmatpush1.bf16.msra.mxu0 0
    %486 = vmatprep.subr.bf16.mxu0 0
    %487 = vmatpush1.bf16.msra.mxu0 0
    %488 = vmatprep.mubr.bf16.mxu0 0
    %489 = vmatmul.mubr.bf16.gmra.mrb[0].mxu0 %v368
    %v490 = vpop.f32.mrb[0].mxu0
    %v491 = vadd.f32 %v296, %v490
    %v492 = vpop.f32.mrb[0].mxu0
    %v493 = vadd.f32 %v300, %v492
    %v494 = vpop.f32.mrb[0].mxu0
    %v495 = vadd.f32 %v296, %v494
    %v496 = vpop.f32.mrb[0].mxu0
    %v497 = vadd.f32 %v300, %v496
    %498 = vdwg.mxu0
    %v499 = vpack.c.bf16 %v405, %v405
    %v500 = vpack.c.bf16 %v409, %v409
    %v501 = vpack.c.bf16 %v407, %v407
    %v502 = vpack.c.bf16 %v411, %v411
    %v503 = vpack.c.bf16 %v448, %v448
    %v504 = vpack.c.bf16 %v452, %v452
    %v505 = vpack.c.bf16 %v450, %v450
    %v506 = vpack.c.bf16 %v454, %v454
    %v507 = vpack.c.bf16 %v491, %v491
    %v508 = vpack.c.bf16 %v495, %v495
    %v509 = vpack.c.bf16 %v493, %v493
    %v510 = vpack.c.bf16 %v497, %v497
    %v511 = vlaneseq
    %v512 = vshrl.u32 %v511, 7
    %v513 = vsub.s32 0, %v512
    %v514 = vrot.slane %v253, %v513
    %v515 = vlaneseq
    %v516 = vshrl.u32 %v515, 7
    %v517 = vsub.s32 0, %v516
    %v518 = vrot.slane %v260, %v517
    %v519 = vlaneseq
    %v520 = vshrl.u32 %v519, 7
    %v521 = vsub.s32 0, %v520
    %v522 = vrot.slane %v261, %v521
    %v523 = vlaneseq
    %v524 = vshrl.u32 %v523, 7
    %v525 = vsub.s32 0, %v524
    %v526 = vrot.slane %v262, %v525
    %531 = vmatprep.subr.bf16.mxu0 0
    %532 = vmatpush1.bf16.xpose.msra.mxu0 %v503
    %533 = vmatprep.subr.bf16.mxu0 0
    %534 = vmatpush1.bf16.xpose.msra.mxu0 0
    %535 = vmatprep.subr.bf16.mxu0 0
    %536 = vmatpush1.bf16.xpose.msra.mxu0 0
    %537 = vmatprep.subr.bf16.mxu0 0
    %538 = vmatpush1.bf16.xpose.msra.mxu0 0
    %539 = vmatprep.subr.bf16.mxu0 0
    %540 = vmatpush1.bf16.xpose.msra.mxu0 0
    %541 = vmatprep.subr.bf16.mxu0 0
    %542 = vmatpush1.bf16.xpose.msra.mxu0 0
    %543 = vmatprep.subr.bf16.mxu0 0
    %544 = vmatpush1.bf16.xpose.msra.mxu0 0
    %545 = vmatprep.subr.bf16.mxu0 0
    %546 = vmatpush1.bf16.xpose.msra.mxu0 0
    %547 = vmatprep.subr.bf16.mxu0 0
    %548 = vmatpush1.bf16.xpose.msra.mxu0 0
    %549 = vmatprep.subr.bf16.mxu0 0
    %550 = vmatpush1.bf16.xpose.msra.mxu0 0
    %551 = vmatprep.subr.bf16.mxu0 0
    %552 = vmatpush1.bf16.xpose.msra.mxu0 0
    %553 = vmatprep.subr.bf16.mxu0 0
    %554 = vmatpush1.bf16.xpose.msra.mxu0 0
    %555 = vmatprep.subr.bf16.mxu0 0
    %556 = vmatpush1.bf16.xpose.msra.mxu0 0
    %557 = vmatprep.subr.bf16.mxu0 0
    %558 = vmatpush1.bf16.xpose.msra.mxu0 0
    %559 = vmatprep.subr.bf16.mxu0 0
    %560 = vmatpush1.bf16.xpose.msra.mxu0 0
    %561 = vmatprep.subr.bf16.mxu0 0
    %562 = vmatpush1.bf16.xpose.msra.mxu0 0
    %563 = vmatprep.mubr.bf16.mxu0 0
    %564 = vmatmul.mubr.bf16.gmra.mrb[0].mxu0 %v499
    %v565 = vpop.f32.mrb[0].mxu0
    %v566 = vadd.f32 %v514, %v565
    %v567 = vpop.f32.mrb[0].mxu0
    %v568 = vpop.f32.mrb[0].mxu0
    %v569 = vpop.f32.mrb[0].mxu0
    %570 = vdwg.mxu0
    %571 = vmatprep.subr.bf16.mxu0 0
    %572 = vmatpush1.bf16.xpose.msra.mxu0 %v504
    %573 = vmatprep.subr.bf16.mxu0 0
    %574 = vmatpush1.bf16.xpose.msra.mxu0 0
    %575 = vmatprep.subr.bf16.mxu0 0
    %576 = vmatpush1.bf16.xpose.msra.mxu0 0
    %577 = vmatprep.subr.bf16.mxu0 0
    %578 = vmatpush1.bf16.xpose.msra.mxu0 0
    %579 = vmatprep.subr.bf16.mxu0 0
    %580 = vmatpush1.bf16.xpose.msra.mxu0 0
    %581 = vmatprep.subr.bf16.mxu0 0
    %582 = vmatpush1.bf16.xpose.msra.mxu0 0
    %583 = vmatprep.subr.bf16.mxu0 0
    %584 = vmatpush1.bf16.xpose.msra.mxu0 0
    %585 = vmatprep.subr.bf16.mxu0 0
    %586 = vmatpush1.bf16.xpose.msra.mxu0 0
    %587 = vmatprep.subr.bf16.mxu0 0
    %588 = vmatpush1.bf16.xpose.msra.mxu0 0
    %589 = vmatprep.subr.bf16.mxu0 0
    %590 = vmatpush1.bf16.xpose.msra.mxu0 0
    %591 = vmatprep.subr.bf16.mxu0 0
    %592 = vmatpush1.bf16.xpose.msra.mxu0 0
    %593 = vmatprep.subr.bf16.mxu0 0
    %594 = vmatpush1.bf16.xpose.msra.mxu0 0
    %595 = vmatprep.subr.bf16.mxu0 0
    %596 = vmatpush1.bf16.xpose.msra.mxu0 0
    %597 = vmatprep.subr.bf16.mxu0 0
    %598 = vmatpush1.bf16.xpose.msra.mxu0 0
    %599 = vmatprep.subr.bf16.mxu0 0
    %600 = vmatpush1.bf16.xpose.msra.mxu0 0
    %601 = vmatprep.subr.bf16.mxu0 0
    %602 = vmatpush1.bf16.xpose.msra.mxu0 0
    %603 = vmatprep.mubr.bf16.mxu0 0
    %604 = vmatmul.mubr.bf16.gmra.mrb[0].mxu0 %v500
    %v605 = vpop.f32.mrb[0].mxu0
    %v606 = vadd.f32 %v518, %v605
    %v607 = vpop.f32.mrb[0].mxu0
    %v608 = vpop.f32.mrb[0].mxu0
    %v609 = vpop.f32.mrb[0].mxu0
    %610 = vdwg.mxu0
    %611 = vmatprep.subr.bf16.mxu0 0
    %612 = vmatpush1.bf16.xpose.msra.mxu0 %v505
    %613 = vmatprep.subr.bf16.mxu0 0
    %614 = vmatpush1.bf16.xpose.msra.mxu0 0
    %615 = vmatprep.subr.bf16.mxu0 0
    %616 = vmatpush1.bf16.xpose.msra.mxu0 0
    %617 = vmatprep.subr.bf16.mxu0 0
    %618 = vmatpush1.bf16.xpose.msra.mxu0 0
    %619 = vmatprep.subr.bf16.mxu0 0
    %620 = vmatpush1.bf16.xpose.msra.mxu0 0
    %621 = vmatprep.subr.bf16.mxu0 0
    %622 = vmatpush1.bf16.xpose.msra.mxu0 0
    %623 = vmatprep.subr.bf16.mxu0 0
    %624 = vmatpush1.bf16.xpose.msra.mxu0 0
    %625 = vmatprep.subr.bf16.mxu0 0
    %626 = vmatpush1.bf16.xpose.msra.mxu0 0
    %627 = vmatprep.subr.bf16.mxu0 0
    %628 = vmatpush1.bf16.xpose.msra.mxu0 0
    %629 = vmatprep.subr.bf16.mxu0 0
    %630 = vmatpush1.bf16.xpose.msra.mxu0 0
    %631 = vmatprep.subr.bf16.mxu0 0
    %632 = vmatpush1.bf16.xpose.msra.mxu0 0
    %633 = vmatprep.subr.bf16.mxu0 0
    %634 = vmatpush1.bf16.xpose.msra.mxu0 0
    %635 = vmatprep.subr.bf16.mxu0 0
    %636 = vmatpush1.bf16.xpose.msra.mxu0 0
    %637 = vmatprep.subr.bf16.mxu0 0
    %638 = vmatpush1.bf16.xpose.msra.mxu0 0
    %639 = vmatprep.subr.bf16.mxu0 0
    %640 = vmatpush1.bf16.xpose.msra.mxu0 0
    %641 = vmatprep.subr.bf16.mxu0 0
    %642 = vmatpush1.bf16.xpose.msra.mxu0 0
    %643 = vmatprep.mubr.bf16.mxu0 0
    %644 = vmatmul.mubr.bf16.gmra.mrb[0].mxu0 %v501
    %v645 = vpop.f32.mrb[0].mxu0
    %v646 = vadd.f32 %v522, %v645
    %v647 = vpop.f32.mrb[0].mxu0
    %v648 = vpop.f32.mrb[0].mxu0
    %v649 = vpop.f32.mrb[0].mxu0
    %650 = vdwg.mxu0
    %651 = vmatprep.subr.bf16.mxu0 0
    %652 = vmatpush1.bf16.xpose.msra.mxu0 %v506
    %653 = vmatprep.subr.bf16.mxu0 0
    %654 = vmatpush1.bf16.xpose.msra.mxu0 0
    %655 = vmatprep.subr.bf16.mxu0 0
    %656 = vmatpush1.bf16.xpose.msra.mxu0 0
    %657 = vmatprep.subr.bf16.mxu0 0
    %658 = vmatpush1.bf16.xpose.msra.mxu0 0
    %659 = vmatprep.subr.bf16.mxu0 0
    %660 = vmatpush1.bf16.xpose.msra.mxu0 0
    %661 = vmatprep.subr.bf16.mxu0 0
    %662 = vmatpush1.bf16.xpose.msra.mxu0 0
    %663 = vmatprep.subr.bf16.mxu0 0
    %664 = vmatpush1.bf16.xpose.msra.mxu0 0
    %665 = vmatprep.subr.bf16.mxu0 0
    %666 = vmatpush1.bf16.xpose.msra.mxu0 0
    %667 = vmatprep.subr.bf16.mxu0 0
    %668 = vmatpush1.bf16.xpose.msra.mxu0 0
    %669 = vmatprep.subr.bf16.mxu0 0
    %670 = vmatpush1.bf16.xpose.msra.mxu0 0
    %671 = vmatprep.subr.bf16.mxu0 0
    %672 = vmatpush1.bf16.xpose.msra.mxu0 0
    %673 = vmatprep.subr.bf16.mxu0 0
    %674 = vmatpush1.bf16.xpose.msra.mxu0 0
    %675 = vmatprep.subr.bf16.mxu0 0
    %676 = vmatpush1.bf16.xpose.msra.mxu0 0
    %677 = vmatprep.subr.bf16.mxu0 0
    %678 = vmatpush1.bf16.xpose.msra.mxu0 0
    %679 = vmatprep.subr.bf16.mxu0 0
    %680 = vmatpush1.bf16.xpose.msra.mxu0 0
    %681 = vmatprep.subr.bf16.mxu0 0
    %682 = vmatpush1.bf16.xpose.msra.mxu0 0
    %683 = vmatprep.mubr.bf16.mxu0 0
    %684 = vmatmul.mubr.bf16.gmra.mrb[0].mxu0 %v502
    %v685 = vpop.f32.mrb[0].mxu0
    %v686 = vadd.f32 %v526, %v685
    %v687 = vpop.f32.mrb[0].mxu0
    %v688 = vpop.f32.mrb[0].mxu0
    %v689 = vpop.f32.mrb[0].mxu0
    %690 = vdwg.mxu0
    %vm691 = vcmask 64512
    %v692 = vsel %vm691, %v566, -inf
    %693 = vmax.xlane.f32.xlu0 %v692
    %v694 = vpop.xlane.xlu0 %693
    %v695 = vsel %vm691, %v606, -inf
    %696 = vmax.xlane.f32.xlu0 %v695
    %v697 = vpop.xlane.xlu0 %696
    %v698 = vsel %vm691, %v646, -inf
    %699 = vmax.xlane.f32.xlu0 %v698
    %v700 = vpop.xlane.xlu0 %699
    %v701 = vsel %vm691, %v686, -inf
    %702 = vmax.xlane.f32.xlu0 %v701
    %v703 = vpop.xlane.xlu0 %702
    %v704 = vsub.f32 %v566, %v694
    %v705 = vsub.f32 %v606, %v697
    %v706 = vsub.f32 %v646, %v700
    %v707 = vsub.f32 %v686, %v703
    %v708 = vmul.f32 %v704, 1.442695
    %v709 = vpow.pop %v708
    %v710 = vmul.f32 %v705, 1.442695
    %v711 = vpow.pop %v710
    %v712 = vmul.f32 %v706, 1.442695
    %v713 = vpow.pop %v712
    %v714 = vmul.f32 %v707, 1.442695
    %v715 = vpow.pop %v714
    %v716 = vsel %vm691, %v709, 0.0
    %717 = vadd.xlane.f32.xlu0 %v716
    %v718 = vpop.xlane.xlu0 %717
    %v719 = vsel %vm691, %v711, 0.0
    %720 = vadd.xlane.f32.xlu0 %v719
    %v721 = vpop.xlane.xlu0 %720
    %v722 = vsel %vm691, %v713, 0.0
    %723 = vadd.xlane.f32.xlu0 %v722
    %v724 = vpop.xlane.xlu0 %723
    %v725 = vsel %vm691, %v715, 0.0
    %726 = vadd.xlane.f32.xlu0 %v725
    %v727 = vpop.xlane.xlu0 %726
    %v728 = vrcp.pop %v718
    %v729 = vrcp.pop %v721
    %v730 = vrcp.pop %v724
    %v731 = vrcp.pop %v727
    %v732 = vmul.f32 %v709, %v728
    %v733 = vmul.f32 %v711, %v729
    %v734 = vmul.f32 %v713, %v730
    %v735 = vmul.f32 %v715, %v731
    %v736 = vpack.c.bf16 %v732, %v732
    %v737 = vpack.c.bf16 %v733, %v733
    %v738 = vpack.c.bf16 %v734, %v734
    %v739 = vpack.c.bf16 %v735, %v735
    %v741 = vsel %vm691, %v736, 0
    %vm743 = vcmask 1043456
    %v745 = vsel %vm743, %v507, 0
    %747 = vmatprep.subr.bf16.mxu0 0
    %748 = vmatpush1.bf16.msra.mxu0 %v745
    %749 = vmatprep.subr.bf16.mxu0 0
    %750 = vmatpush1.bf16.msra.mxu0 0
    %751 = vmatprep.subr.bf16.mxu0 0
    %752 = vmatpush1.bf16.msra.mxu0 0
    %753 = vmatprep.subr.bf16.mxu0 0
    %754 = vmatpush1.bf16.msra.mxu0 0
    %755 = vmatprep.subr.bf16.mxu0 0
    %756 = vmatpush1.bf16.msra.mxu0 0
    %757 = vmatprep.subr.bf16.mxu0 0
    %758 = vmatpush1.bf16.msra.mxu0 0
    %759 = vmatprep.subr.bf16.mxu0 0
    %760 = vmatpush1.bf16.msra.mxu0 0
    %761 = vmatprep.subr.bf16.mxu0 0
    %762 = vmatpush1.bf16.msra.mxu0 0
    %763 = vmatprep.subr.bf16.mxu0 0
    %764 = vmatpush1.bf16.msra.mxu0 0
    %765 = vmatprep.subr.bf16.mxu0 0
    %766 = vmatpush1.bf16.msra.mxu0 0
    %767 = vmatprep.subr.bf16.mxu0 0
    %768 = vmatpush1.bf16.msra.mxu0 0
    %769 = vmatprep.subr.bf16.mxu0 0
    %770 = vmatpush1.bf16.msra.mxu0 0
    %771 = vmatprep.subr.bf16.mxu0 0
    %772 = vmatpush1.bf16.msra.mxu0 0
    %773 = vmatprep.subr.bf16.mxu0 0
    %774 = vmatpush1.bf16.msra.mxu0 0
    %775 = vmatprep.subr.bf16.mxu0 0
    %776 = vmatpush1.bf16.msra.mxu0 0
    %777 = vmatprep.subr.bf16.mxu0 0
    %778 = vmatpush1.bf16.msra.mxu0 0
    %779 = vmatprep.mubr.bf16.mxu0 0
    %780 = vmatmul.mubr.bf16.gmra.mrb[0].mxu0 %v741
    %v781 = vpop.f32.mrb[0].mxu0
    %v782 = vadd.f32 0.0, %v781
    %v783 = vpop.f32.mrb[0].mxu0
    %v784 = vpop.f32.mrb[0].mxu0
    %v785 = vpop.f32.mrb[0].mxu0
    %786 = vdwg.mxu0
    %v788 = vsel %vm691, %v737, 0
    %v791 = vsel %vm743, %v508, 0
    %793 = vmatprep.subr.bf16.mxu0 0
    %794 = vmatpush1.bf16.msra.mxu0 %v791
    %795 = vmatprep.subr.bf16.mxu0 0
    %796 = vmatpush1.bf16.msra.mxu0 0
    %797 = vmatprep.subr.bf16.mxu0 0
    %798 = vmatpush1.bf16.msra.mxu0 0
    %799 = vmatprep.subr.bf16.mxu0 0
    %800 = vmatpush1.bf16.msra.mxu0 0
    %801 = vmatprep.subr.bf16.mxu0 0
    %802 = vmatpush1.bf16.msra.mxu0 0
    %803 = vmatprep.subr.bf16.mxu0 0
    %804 = vmatpush1.bf16.msra.mxu0 0
    %805 = vmatprep.subr.bf16.mxu0 0
    %806 = vmatpush1.bf16.msra.mxu0 0
    %807 = vmatprep.subr.bf16.mxu0 0
    %808 = vmatpush1.bf16.msra.mxu0 0
    %809 = vmatprep.subr.bf16.mxu0 0
    %810 = vmatpush1.bf16.msra.mxu0 0
    %811 = vmatprep.subr.bf16.mxu0 0
    %812 = vmatpush1.bf16.msra.mxu0 0
    %813 = vmatprep.subr.bf16.mxu0 0
    %814 = vmatpush1.bf16.msra.mxu0 0
    %815 = vmatprep.subr.bf16.mxu0 0
    %816 = vmatpush1.bf16.msra.mxu0 0
    %817 = vmatprep.subr.bf16.mxu0 0
    %818 = vmatpush1.bf16.msra.mxu0 0
    %819 = vmatprep.subr.bf16.mxu0 0
    %820 = vmatpush1.bf16.msra.mxu0 0
    %821 = vmatprep.subr.bf16.mxu0 0
    %822 = vmatpush1.bf16.msra.mxu0 0
    %823 = vmatprep.subr.bf16.mxu0 0
    %824 = vmatpush1.bf16.msra.mxu0 0
    %825 = vmatprep.mubr.bf16.mxu0 0
    %826 = vmatmul.mubr.bf16.gmra.mrb[0].mxu0 %v788
    %v827 = vpop.f32.mrb[0].mxu0
    %v828 = vadd.f32 0.0, %v827
    %v829 = vpop.f32.mrb[0].mxu0
    %v830 = vpop.f32.mrb[0].mxu0
    %v831 = vpop.f32.mrb[0].mxu0
    %832 = vdwg.mxu0
    %v834 = vsel %vm691, %v738, 0
    %v837 = vsel %vm743, %v509, 0
    %839 = vmatprep.subr.bf16.mxu0 0
    %840 = vmatpush1.bf16.msra.mxu0 %v837
    %841 = vmatprep.subr.bf16.mxu0 0
    %842 = vmatpush1.bf16.msra.mxu0 0
    %843 = vmatprep.subr.bf16.mxu0 0
    %844 = vmatpush1.bf16.msra.mxu0 0
    %845 = vmatprep.subr.bf16.mxu0 0
    %846 = vmatpush1.bf16.msra.mxu0 0
    %847 = vmatprep.subr.bf16.mxu0 0
    %848 = vmatpush1.bf16.msra.mxu0 0
    %849 = vmatprep.subr.bf16.mxu0 0
    %850 = vmatpush1.bf16.msra.mxu0 0
    %851 = vmatprep.subr.bf16.mxu0 0
    %852 = vmatpush1.bf16.msra.mxu0 0
    %853 = vmatprep.subr.bf16.mxu0 0
    %854 = vmatpush1.bf16.msra.mxu0 0
    %855 = vmatprep.subr.bf16.mxu0 0
    %856 = vmatpush1.bf16.msra.mxu0 0
    %857 = vmatprep.subr.bf16.mxu0 0
    %858 = vmatpush1.bf16.msra.mxu0 0
    %859 = vmatprep.subr.bf16.mxu0 0
    %860 = vmatpush1.bf16.msra.mxu0 0
    %861 = vmatprep.subr.bf16.mxu0 0
    %862 = vmatpush1.bf16.msra.mxu0 0
    %863 = vmatprep.subr.bf16.mxu0 0
    %864 = vmatpush1.bf16.msra.mxu0 0
    %865 = vmatprep.subr.bf16.mxu0 0
    %866 = vmatpush1.bf16.msra.mxu0 0
    %867 = vmatprep.subr.bf16.mxu0 0
    %868 = vmatpush1.bf16.msra.mxu0 0
    %869 = vmatprep.subr.bf16.mxu0 0
    %870 = vmatpush1.bf16.msra.mxu0 0
    %871 = vmatprep.mubr.bf16.mxu0 0
    %872 = vmatmul.mubr.bf16.gmra.mrb[0].mxu0 %v834
    %v873 = vpop.f32.mrb[0].mxu0
    %v874 = vadd.f32 0.0, %v873
    %v875 = vpop.f32.mrb[0].mxu0
    %v876 = vpop.f32.mrb[0].mxu0
    %v877 = vpop.f32.mrb[0].mxu0
    %878 = vdwg.mxu0
    %v880 = vsel %vm691, %v739, 0
    %v883 = vsel %vm743, %v510, 0
    %885 = vmatprep.subr.bf16.mxu0 0
    %886 = vmatpush1.bf16.msra.mxu0 %v883
    %887 = vmatprep.subr.bf16.mxu0 0
    %888 = vmatpush1.bf16.msra.mxu0 0
    %889 = vmatprep.subr.bf16.mxu0 0
    %890 = vmatpush1.bf16.msra.mxu0 0
    %891 = vmatprep.subr.bf16.mxu0 0
    %892 = vmatpush1.bf16.msra.mxu0 0
    %893 = vmatprep.subr.bf16.mxu0 0
    %894 = vmatpush1.bf16.msra.mxu0 0
    %895 = vmatprep.subr.bf16.mxu0 0
    %896 = vmatpush1.bf16.msra.mxu0 0
    %897 = vmatprep.subr.bf16.mxu0 0
    %898 = vmatpush1.bf16.msra.mxu0 0
    %899 = vmatprep.subr.bf16.mxu0 0
    %900 = vmatpush1.bf16.msra.mxu0 0
    %901 = vmatprep.subr.bf16.mxu0 0
    %902 = vmatpush1.bf16.msra.mxu0 0
    %903 = vmatprep.subr.bf16.mxu0 0
    %904 = vmatpush1.bf16.msra.mxu0 0
    %905 = vmatprep.subr.bf16.mxu0 0
    %906 = vmatpush1.bf16.msra.mxu0 0
    %907 = vmatprep.subr.bf16.mxu0 0
    %908 = vmatpush1.bf16.msra.mxu0 0
    %909 = vmatprep.subr.bf16.mxu0 0
    %910 = vmatpush1.bf16.msra.mxu0 0
    %911 = vmatprep.subr.bf16.mxu0 0
    %912 = vmatpush1.bf16.msra.mxu0 0
    %913 = vmatprep.subr.bf16.mxu0 0
    %914 = vmatpush1.bf16.msra.mxu0 0
    %915 = vmatprep.subr.bf16.mxu0 0
    %916 = vmatpush1.bf16.msra.mxu0 0
    %917 = vmatprep.mubr.bf16.mxu0 0
    %918 = vmatmul.mubr.bf16.gmra.mrb[0].mxu0 %v880
    %v919 = vpop.f32.mrb[0].mxu0
    %v920 = vadd.f32 0.0, %v919
    %v921 = vpop.f32.mrb[0].mxu0
    %v922 = vpop.f32.mrb[0].mxu0
    %v923 = vpop.f32.mrb[0].mxu0
    %924 = vdwg.mxu0
    %v925 = vpack.c.bf16 %v828, %v782
    %v926 = vpack.c.bf16 %v920, %v874
    %v927 = vld [vmem:[%s8] sm:$0xf]
    %v928 = vld [vmem:[%s8 + $0x4] sm:$0xf]
    %v929 = vld [vmem:[%s8 + $0x8] sm:$0xf]
    %v930 = vld [vmem:[%s8 + $0xc] sm:$0xf]
    %v931 = vld [vmem:[%s8 + $0x10] sm:$0xf]
    %v932 = vld [vmem:[%s8 + $0x14] sm:$0xf]
    %v933 = vld [vmem:[%s8 + $0x18] sm:$0xf]
    %v934 = vld [vmem:[%s8 + $0x1c] sm:$0xf]
    %v935 = vld [vmem:[%s8 + $0x20] sm:$0xf]
    %v936 = vld [vmem:[%s8 + $0x24] sm:$0xf]
    %v937 = vld [vmem:[%s8 + $0x28] sm:$0xf]
    %v938 = vld [vmem:[%s8 + $0x2c] sm:$0xf]
    %v939 = vld [vmem:[%s8 + $0x30] sm:$0xf]
    %v940 = vld [vmem:[%s8 + $0x34] sm:$0xf]
    %v941 = vld [vmem:[%s8 + $0x38] sm:$0xf]
    %v942 = vld [vmem:[%s8 + $0x3c] sm:$0xf]
    %v943 = vld [vmem:[%s8 + $0x40] sm:$0xf]
    %v944 = vld [vmem:[%s8 + $0x44] sm:$0xf]
    %v945 = vld [vmem:[%s8 + $0x48] sm:$0xf]
    %v946 = vld [vmem:[%s8 + $0x4c] sm:$0xf]
    %v947 = vld [vmem:[%s8 + $0x50] sm:$0xf]
    %v948 = vld [vmem:[%s8 + $0x54] sm:$0xf]
    %v949 = vld [vmem:[%s8 + $0x58] sm:$0xf]
    %v950 = vld [vmem:[%s8 + $0x5c] sm:$0xf]
    %v951 = vld [vmem:[%s8 + $0x60] sm:$0xf]
    %v952 = vld [vmem:[%s8 + $0x64] sm:$0xf]
    %v953 = vld [vmem:[%s8 + $0x68] sm:$0xf]
    %v954 = vld [vmem:[%s8 + $0x6c] sm:$0xf]
    %v955 = vld [vmem:[%s8 + $0x70] sm:$0xf]
    %v956 = vld [vmem:[%s8 + $0x74] sm:$0xf]
    %v957 = vld [vmem:[%s8 + $0x78] sm:$0xf]
    %v958 = vld [vmem:[%s8 + $0x7c] sm:$0xf]
    %v959 = vld [vmem:[%s9] sm:$0x1]
    %v961 = vlaneseq
    %v962 = vshrl.u32 %v961, 7
    %v963 = vsub.s32 0, %v962
    %v964 = vrot.slane %v959, %v963
    %v998 = vunpack.c.l.b16 %v927
    %v999 = vunpack.c.l.b16 %v928
    %v1000 = vunpack.c.l.b16 %v929
    %v1001 = vunpack.c.l.b16 %v930
    %v1002 = vunpack.c.l.b16 %v931
    %v1003 = vunpack.c.l.b16 %v932
    %v1004 = vunpack.c.l.b16 %v933
    %v1005 = vunpack.c.l.b16 %v934
    %v1006 = vunpack.c.l.b16 %v935
    %v1007 = vunpack.c.l.b16 %v936
    %v1008 = vunpack.c.l.b16 %v937
    %v1009 = vunpack.c.l.b16 %v938
    %v1010 = vunpack.c.l.b16 %v939
    %v1011 = vunpack.c.l.b16 %v940
    %v1012 = vunpack.c.l.b16 %v941
    %v1013 = vunpack.c.l.b16 %v942
    %v1014 = vunpack.c.l.b16 %v943
    %v1015 = vunpack.c.l.b16 %v944
    %v1016 = vunpack.c.l.b16 %v945
    %v1017 = vunpack.c.l.b16 %v946
    %v1018 = vunpack.c.l.b16 %v947
    %v1019 = vunpack.c.l.b16 %v948
    %v1020 = vunpack.c.l.b16 %v949
    %v1021 = vunpack.c.l.b16 %v950
    %v1022 = vunpack.c.l.b16 %v951
    %v1023 = vunpack.c.l.b16 %v952
    %v1024 = vunpack.c.l.b16 %v953
    %v1025 = vunpack.c.l.b16 %v954
    %v1026 = vunpack.c.l.b16 %v955
    %v1027 = vunpack.c.l.b16 %v956
    %v1028 = vunpack.c.l.b16 %v957
    %v1029 = vunpack.c.l.b16 %v958
    %v1030 = vpack.c.b16 %v999, %v998
    %v1031 = vpack.c.b16 %v1001, %v1000
    %v1032 = vpack.c.b16 %v1003, %v1002
    %v1033 = vpack.c.b16 %v1005, %v1004
    %v1034 = vpack.c.b16 %v1007, %v1006
    %v1035 = vpack.c.b16 %v1009, %v1008
    %v1036 = vpack.c.b16 %v1011, %v1010
    %v1037 = vpack.c.b16 %v1013, %v1012
    %v1038 = vpack.c.b16 %v1015, %v1014
    %v1039 = vpack.c.b16 %v1017, %v1016
    %v1040 = vpack.c.b16 %v1019, %v1018
    %v1041 = vpack.c.b16 %v1021, %v1020
    %v1042 = vpack.c.b16 %v1023, %v1022
    %v1043 = vpack.c.b16 %v1025, %v1024
    %v1044 = vpack.c.b16 %v1027, %v1026
    %v1045 = vpack.c.b16 %v1029, %v1028
    %1062 = vmatprep.subr.bf16.mxu0 0
    %1063 = vmatpush1.bf16.msra.mxu0 %v1030
    %1064 = vmatprep.subr.bf16.mxu0 0
    %1065 = vmatpush1.bf16.msra.mxu0 %v1031
    %1066 = vmatprep.subr.bf16.mxu0 0
    %1067 = vmatpush1.bf16.msra.mxu0 %v1032
    %1068 = vmatprep.subr.bf16.mxu0 0
    %1069 = vmatpush1.bf16.msra.mxu0 %v1033
    %1070 = vmatprep.subr.bf16.mxu0 0
    %1071 = vmatpush1.bf16.msra.mxu0 %v1034
    %1072 = vmatprep.subr.bf16.mxu0 0
    %1073 = vmatpush1.bf16.msra.mxu0 %v1035
    %1074 = vmatprep.subr.bf16.mxu0 0
    %1075 = vmatpush1.bf16.msra.mxu0 %v1036
    %1076 = vmatprep.subr.bf16.mxu0 0
    %1077 = vmatpush1.bf16.msra.mxu0 %v1037
    %1078 = vmatprep.subr.bf16.mxu0 0
    %1079 = vmatpush1.bf16.msra.mxu0 %v1038
    %1080 = vmatprep.subr.bf16.mxu0 0
    %1081 = vmatpush1.bf16.msra.mxu0 %v1039
    %1082 = vmatprep.subr.bf16.mxu0 0
    %1083 = vmatpush1.bf16.msra.mxu0 %v1040
    %1084 = vmatprep.subr.bf16.mxu0 0
    %1085 = vmatpush1.bf16.msra.mxu0 %v1041
    %1086 = vmatprep.subr.bf16.mxu0 0
    %1087 = vmatpush1.bf16.msra.mxu0 %v1042
    %1088 = vmatprep.subr.bf16.mxu0 0
    %1089 = vmatpush1.bf16.msra.mxu0 %v1043
    %1090 = vmatprep.subr.bf16.mxu0 0
    %1091 = vmatpush1.bf16.msra.mxu0 %v1044
    %1092 = vmatprep.subr.bf16.mxu0 0
    %1093 = vmatpush1.bf16.msra.mxu0 %v1045
    %1094 = vmatprep.mubr.bf16.mxu0 %v926
    %1095 = vmatmul.mubr.bf16.gmra.mrb[0].mxu0 %v925
    %v1096 = vpop.f32.mrb[0].mxu0
    %v1097 = vadd.f32 %v964, %v1096
    %v1098 = vpop.f32.mrb[0].mxu0
    %v1099 = vpop.f32.mrb[0].mxu0
    %v1100 = vadd.f32 %v964, %v1099
    %v1101 = vpop.f32.mrb[0].mxu0
    %1102 = vdwg.mxu0
    %v1103 = vadd.f32 %v1097, %v226
    %v1104 = vadd.f32 %v1100, %v227
    %v1105 = vld [vmem:[%s10] sm:$0x1]
    %v1106 = vld [vmem:[%s11] sm:$0x1]
    %v1107 = vsel %vm184, %v1103, 0.0
    %1108 = vadd.xlane.f32.xlu0 %v1107
    %v1109 = vpop.xlane.xlu0 %1108
    %v1110 = vsel %vm184, %v1104, 0.0
    %1111 = vadd.xlane.f32.xlu0 %v1110
    %v1112 = vpop.xlane.xlu0 %1111
    %v1113 = vmul.f32 %v1109, %v191
    %v1114 = vmul.f32 %v1112, %v191
    %v1115 = vsub.f32 %v1103, %v1113
    %v1116 = vsub.f32 %v1104, %v1114
    %v1117 = vmul.f32 %v1115, %v1115
    %v1118 = vmul.f32 %v1116, %v1116
    %v1119 = vsel %vm184, %v1117, 0.0
    %1120 = vadd.xlane.f32.xlu0 %v1119
    %v1121 = vpop.xlane.xlu0 %1120
    %v1122 = vsel %vm184, %v1118, 0.0
    %1123 = vadd.xlane.f32.xlu0 %v1122
    %v1124 = vpop.xlane.xlu0 %1123
    %v1125 = vmul.f32 %v1121, %v191
    %v1126 = vmul.f32 %v1124, %v191
    %v1127 = vadd.f32 %v1125, 1e-12
    %v1128 = vadd.f32 %v1126, 1e-12
    %v1129 = vrsqrt.pop %v1127
    %v1130 = vrsqrt.pop %v1128
    %v1131 = vmul.f32 %v1115, %v1129
    %v1132 = vmul.f32 %v1116, %v1130
    %v1134 = vlaneseq
    %v1135 = vshrl.u32 %v1134, 7
    %v1136 = vsub.s32 0, %v1135
    %v1137 = vrot.slane %v1105, %v1136
    %v1139 = vmul.f32 %v1131, %v1137
    %v1140 = vmul.f32 %v1132, %v1137
    %v1142 = vlaneseq
    %v1143 = vshrl.u32 %v1142, 7
    %v1144 = vsub.s32 0, %v1143
    %v1145 = vrot.slane %v1106, %v1144
    %v1147 = vadd.f32 %v1139, %v1145
    %v1148 = vadd.f32 %v1140, %v1145
    %v1149 = vpack.c.bf16 %v1148, %v1147
    %v1150 = vld [vmem:[%s12] sm:$0xf]
    %v1151 = vld [vmem:[%s12 + $0x4] sm:$0xf]
    %v1152 = vld [vmem:[%s12 + $0x8] sm:$0xf]
    %v1153 = vld [vmem:[%s12 + $0xc] sm:$0xf]
    %v1154 = vld [vmem:[%s13] sm:$0x1]
    %v1156 = vlaneseq
    %v1157 = vshrl.u32 %v1156, 7
    %v1158 = vsub.s32 0, %v1157
    %v1159 = vrot.slane %v1154, %v1158
    %v1165 = vunpack.c.l.b16 %v1150
    %v1166 = vunpack.c.l.b16 %v1151
    %v1167 = vunpack.c.l.b16 %v1152
    %v1168 = vunpack.c.l.b16 %v1153
    %v1169 = vpack.c.b16 %v1166, %v1165
    %v1170 = vpack.c.b16 %v1168, %v1167
    %v1174 = vsel %vm184, %v1149, 0
    %1176 = vmatprep.subr.bf16.mxu0 0
    %1177 = vmatpush1.bf16.msra.mxu0 %v1169
    %1178 = vmatprep.subr.bf16.mxu0 0
    %1179 = vmatpush1.bf16.msra.mxu0 %v1170
    %1180 = vmatprep.subr.bf16.mxu0 0
    %1181 = vmatpush1.bf16.msra.mxu0 0
    %1182 = vmatprep.subr.bf16.mxu0 0
    %1183 = vmatpush1.bf16.msra.mxu0 0
    %1184 = vmatprep.subr.bf16.mxu0 0
    %1185 = vmatpush1.bf16.msra.mxu0 0
    %1186 = vmatprep.subr.bf16.mxu0 0
    %1187 = vmatpush1.bf16.msra.mxu0 0
    %1188 = vmatprep.subr.bf16.mxu0 0
    %1189 = vmatpush1.bf16.msra.mxu0 0
    %1190 = vmatprep.subr.bf16.mxu0 0
    %1191 = vmatpush1.bf16.msra.mxu0 0
    %1192 = vmatprep.subr.bf16.mxu0 0
    %1193 = vmatpush1.bf16.msra.mxu0 0
    %1194 = vmatprep.subr.bf16.mxu0 0
    %1195 = vmatpush1.bf16.msra.mxu0 0
    %1196 = vmatprep.subr.bf16.mxu0 0
    %1197 = vmatpush1.bf16.msra.mxu0 0
    %1198 = vmatprep.subr.bf16.mxu0 0
    %1199 = vmatpush1.bf16.msra.mxu0 0
    %1200 = vmatprep.subr.bf16.mxu0 0
    %1201 = vmatpush1.bf16.msra.mxu0 0
    %1202 = vmatprep.subr.bf16.mxu0 0
    %1203 = vmatpush1.bf16.msra.mxu0 0
    %1204 = vmatprep.subr.bf16.mxu0 0
    %1205 = vmatpush1.bf16.msra.mxu0 0
    %1206 = vmatprep.subr.bf16.mxu0 0
    %1207 = vmatpush1.bf16.msra.mxu0 0
    %1208 = vmatprep.mubr.bf16.mxu0 0
    %1209 = vmatmul.mubr.bf16.gmra.mrb[0].mxu0 %v1174
    %v1210 = vpop.f32.mrb[0].mxu0
    %v1211 = vadd.f32 %v1159, %v1210
    %v1212 = vpop.f32.mrb[0].mxu0
    %v1213 = vpop.f32.mrb[0].mxu0
    %v1214 = vadd.f32 %v1159, %v1213
    %v1215 = vpop.f32.mrb[0].mxu0
    %1216 = vdwg.mxu0
    %v1217 = vmul.f32 %v1211, %v1211
    %v1218 = vmul.f32 %v1214, %v1214
    %v1219 = vmul.f32 %v1211, %v1217
    %v1220 = vmul.f32 %v1214, %v1218
    %v1221 = vmul.f32 %v1219, 0.044715
    %v1222 = vmul.f32 %v1220, 0.044715
    %v1223 = vadd.f32 %v1211, %v1221
    %v1224 = vadd.f32 %v1214, %v1222
    %v1225 = vmul.f32 %v1223, 0.7978846
    %v1226 = vmul.f32 %v1224, 0.7978846
    %v1227 = vtanh.pop %v1225
    %v1228 = vtanh.pop %v1226
    %v1229 = vadd.f32 %v1227, 1.0
    %v1230 = vadd.f32 %v1228, 1.0
    %v1231 = vmul.f32 %v1229, 0.5
    %v1232 = vmul.f32 %v1230, 0.5
    %v1233 = vmul.f32 %v1211, %v1231
    %v1234 = vmul.f32 %v1214, %v1232
    %v1235 = vpack.c.bf16 %v1234, %v1233
    %v1236 = vld [vmem:[%s14] sm:$0xf]
    %v1237 = vld [vmem:[%s14 + $0x4] sm:$0xf]
    %v1238 = vld [vmem:[%s14 + $0x8] sm:$0xf]
    %v1239 = vld [vmem:[%s14 + $0xc] sm:$0xf]
    %v1240 = vld [vmem:[%s14 + $0x10] sm:$0xf]
    %v1241 = vld [vmem:[%s14 + $0x14] sm:$0xf]
    %v1242 = vld [vmem:[%s14 + $0x18] sm:$0xf]
    %v1243 = vld [vmem:[%s14 + $0x1c] sm:$0xf]
    %v1244 = vld [vmem:[%s14 + $0x20] sm:$0xf]
    %v1245 = vld [vmem:[%s14 + $0x24] sm:$0xf]
    %v1246 = vld [vmem:[%s14 + $0x28] sm:$0xf]
    %v1247 = vld [vmem:[%s14 + $0x2c] sm:$0xf]
    %v1248 = vld [vmem:[%s14 + $0x30] sm:$0xf]
    %v1249 = vld [vmem:[%s14 + $0x34] sm:$0xf]
    %v1250 = vld [vmem:[%s14 + $0x38] sm:$0xf]
    %v1251 = vld [vmem:[%s14 + $0x3c] sm:$0xf]
    %v1252 = vld [vmem:[%s15] sm:$0x1]
    %v1254 = vlaneseq
    %v1255 = vshrl.u32 %v1254, 7
    %v1256 = vsub.s32 0, %v1255
    %v1257 = vrot.slane %v1252, %v1256
    %v1275 = vunpack.c.l.b16 %v1236
    %v1276 = vunpack.c.l.b16 %v1237
    %v1277 = vunpack.c.l.b16 %v1238
    %v1278 = vunpack.c.l.b16 %v1239
    %v1279 = vunpack.c.l.b16 %v1240
    %v1280 = vunpack.c.l.b16 %v1241
    %v1281 = vunpack.c.l.b16 %v1242
    %v1282 = vunpack.c.l.b16 %v1243
    %v1283 = vunpack.c.l.b16 %v1244
    %v1284 = vunpack.c.l.b16 %v1245
    %v1285 = vunpack.c.l.b16 %v1246
    %v1286 = vunpack.c.l.b16 %v1247
    %v1287 = vunpack.c.l.b16 %v1248
    %v1288 = vunpack.c.l.b16 %v1249
    %v1289 = vunpack.c.l.b16 %v1250
    %v1290 = vunpack.c.l.b16 %v1251
    %v1291 = vpack.c.b16 %v1276, %v1275
    %v1292 = vpack.c.b16 %v1278, %v1277
    %v1293 = vpack.c.b16 %v1280, %v1279
    %v1294 = vpack.c.b16 %v1282, %v1281
    %v1295 = vpack.c.b16 %v1284, %v1283
    %v1296 = vpack.c.b16 %v1286, %v1285
    %v1297 = vpack.c.b16 %v1288, %v1287
    %v1298 = vpack.c.b16 %v1290, %v1289
    %1307 = vmatprep.subr.bf16.mxu0 0
    %1308 = vmatpush1.bf16.msra.mxu0 %v1291
    %1309 = vmatprep.subr.bf16.mxu0 0
    %1310 = vmatpush1.bf16.msra.mxu0 %v1292
    %1311 = vmatprep.subr.bf16.mxu0 0
    %1312 = vmatpush1.bf16.msra.mxu0 %v1293
    %1313 = vmatprep.subr.bf16.mxu0 0
    %1314 = vmatpush1.bf16.msra.mxu0 %v1294
    %1315 = vmatprep.subr.bf16.mxu0 0
    %1316 = vmatpush1.bf16.msra.mxu0 %v1295
    %1317 = vmatprep.subr.bf16.mxu0 0
    %1318 = vmatpush1.bf16.msra.mxu0 %v1296
    %1319 = vmatprep.subr.bf16.mxu0 0
    %1320 = vmatpush1.bf16.msra.mxu0 %v1297
    %1321 = vmatprep.subr.bf16.mxu0 0
    %1322 = vmatpush1.bf16.msra.mxu0 %v1298
    %1323 = vmatprep.subr.bf16.mxu0 0
    %1324 = vmatpush1.bf16.msra.mxu0 0
    %1325 = vmatprep.subr.bf16.mxu0 0
    %1326 = vmatpush1.bf16.msra.mxu0 0
    %1327 = vmatprep.subr.bf16.mxu0 0
    %1328 = vmatpush1.bf16.msra.mxu0 0
    %1329 = vmatprep.subr.bf16.mxu0 0
    %1330 = vmatpush1.bf16.msra.mxu0 0
    %1331 = vmatprep.subr.bf16.mxu0 0
    %1332 = vmatpush1.bf16.msra.mxu0 0
    %1333 = vmatprep.subr.bf16.mxu0 0
    %1334 = vmatpush1.bf16.msra.mxu0 0
    %1335 = vmatprep.subr.bf16.mxu0 0
    %1336 = vmatpush1.bf16.msra.mxu0 0
    %1337 = vmatprep.subr.bf16.mxu0 0
    %1338 = vmatpush1.bf16.msra.mxu0 0
    %1339 = vmatprep.mubr.bf16.mxu0 0
    %1340 = vmatmul.mubr.bf16.gmra.mrb[0].mxu0 %v1235
    %v1341 = vpop.f32.mrb[0].mxu0
    %v1342 = vadd.f32 %v1257, %v1341
    %v1343 = vpop.f32.mrb[0].mxu0
    %v1344 = vpop.f32.mrb[0].mxu0
    %v1345 = vadd.f32 %v1257, %v1344
    %v1346 = vpop.f32.mrb[0].mxu0
    %1347 = vdwg.mxu0
    %v1348 = vadd.f32 %v1342, %v1147
    %v1349 = vadd.f32 %v1345, %v1148
    %v1350 = vld [vmem:[%s16] sm:$0x1]
    %v1351 = vld [vmem:[%s17] sm:$0x1]
    %v1352 = vsel %vm184, %v1348, 0.0
    %1353 = vadd.xlane.f32.xlu0 %v1352
    %v1354 = vpop.xlane.xlu0 %1353
    %v1355 = vsel %vm184, %v1349, 0.0
    %1356 = vadd.xlane.f32.xlu0 %v1355
    %v1357 = vpop.xlane.xlu0 %1356
    %v1358 = vmul.f32 %v1354, %v191
    %v1359 = vmul.f32 %v1357, %v191
    %v1360 = vsub.f32 %v1348, %v1358
    %v1361 = vsub.f32 %v1349, %v1359
    %v1362 = vmul.f32 %v1360, %v1360
    %v1363 = vmul.f32 %v1361, %v1361
    %v1364 = vsel %vm184, %v1362, 0.0
    %1365 = vadd.xlane.f32.xlu0 %v1364
    %v1366 = vpop.xlane.xlu0 %1365
    %v1367 = vsel %vm184, %v1363, 0.0
    %1368 = vadd.xlane.f32.xlu0 %v1367
    %v1369 = vpop.xlane.xlu0 %1368
    %v1370 = vmul.f32 %v1366, %v191
    %v1371 = vmul.f32 %v1369, %v191
    %v1372 = vadd.f32 %v1370, 1e-12
    %v1373 = vadd.f32 %v1371, 1e-12
    %v1374 = vrsqrt.pop %v1372
    %v1375 = vrsqrt.pop %v1373
    %v1376 = vmul.f32 %v1360, %v1374
    %v1377 = vmul.f32 %v1361, %v1375
    %v1379 = vlaneseq
    %v1380 = vshrl.u32 %v1379, 7
    %v1381 = vsub.s32 0, %v1380
    %v1382 = vrot.slane %v1350, %v1381
    %v1384 = vmul.f32 %v1376, %v1382
    %v1385 = vmul.f32 %v1377, %v1382
    %v1387 = vlaneseq
    %v1388 = vshrl.u32 %v1387, 7
    %v1389 = vsub.s32 0, %v1388
    %v1390 = vrot.slane %v1351, %v1389
    %v1392 = vadd.f32 %v1384, %v1390
    %v1393 = vadd.f32 %v1385, %v1390
    %v1394 = vpack.c.bf16 %v1393, %v1392
    %s1395 = scalar_lea.vmem %s6, 96
    %v1396 = vld [vmem:[%s1395] sm:$0xff]
    %v1397 = vld [vmem:[%s1395 + $0x8] sm:$0xff]
    %v1398 = vld [vmem:[%s1395 + $0x10] sm:$0xff]
    %v1399 = vld [vmem:[%s1395 + $0x18] sm:$0xff]
    %v1400 = vld [vmem:[%s1395 + $0x20] sm:$0xff]
    %v1401 = vld [vmem:[%s1395 + $0x28] sm:$0xff]
    %v1402 = vld [vmem:[%s1395 + $0x30] sm:$0xff]
    %v1403 = vld [vmem:[%s1395 + $0x38] sm:$0xff]
    %v1404 = vld [vmem:[%s1395 + $0x40] sm:$0xff]
    %v1405 = vld [vmem:[%s1395 + $0x48] sm:$0xff]
    %v1406 = vld [vmem:[%s1395 + $0x50] sm:$0xff]
    %v1407 = vld [vmem:[%s1395 + $0x58] sm:$0xff]
    %s1408 = scalar_lea.vmem %s7, 6
    %v1409 = vld [vmem:[%s1408] sm:$0x3f]
    %v1411 = vlaneseq
    %v1412 = vshrl.u32 %v1411, 7
    %v1413 = vsub.s32 0, %v1412
    %v1414 = vrot.slane %v1409, %v1413
    %v1415 = vlaneseq
    %v1416 = vshrl.u32 %v1415, 7
    %v1417 = vsub.s32 1, %v1416
    %v1418 = vrot.slane %v1409, %v1417
    %v1419 = vlaneseq
    %v1420 = vshrl.u32 %v1419, 7
    %v1421 = vsub.s32 2, %v1420
    %v1422 = vrot.slane %v1409, %v1421
    %v1423 = vlaneseq
    %v1424 = vshrl.u32 %v1423, 7
    %v1425 = vsub.s32 3, %v1424
    %v1426 = vrot.slane %v1409, %v1425
    %v1427 = vlaneseq
    %v1428 = vshrl.u32 %v1427, 7
    %v1429 = vsub.s32 4, %v1428
    %v1430 = vrot.slane %v1409, %v1429
    %v1431 = vlaneseq
    %v1432 = vshrl.u32 %v1431, 7
    %v1433 = vsub.s32 5, %v1432
    %v1434 = vrot.slane %v1409, %v1433
    %v1453 = vunpack.c.l.b16 %v1396
    %v1454 = vunpack.c.h.b16 %v1396
    %v1455 = vunpack.c.l.b16 %v1397
    %v1456 = vunpack.c.h.b16 %v1397
    %v1457 = vunpack.c.l.b16 %v1398
    %v1458 = vunpack.c.h.b16 %v1398
    %v1459 = vunpack.c.l.b16 %v1399
    %v1460 = vunpack.c.h.b16 %v1399
    %v1461 = vunpack.c.l.b16 %v1400
    %v1462 = vunpack.c.h.b16 %v1400
    %v1463 = vunpack.c.l.b16 %v1401
    %v1464 = vunpack.c.h.b16 %v1401
    %v1465 = vunpack.c.l.b16 %v1402
    %v1466 = vunpack.c.h.b16 %v1402
    %v1467 = vunpack.c.l.b16 %v1403
    %v1468 = vunpack.c.h.b16 %v1403
    %v1469 = vunpack.c.l.b16 %v1404
    %v1470 = vunpack.c.h.b16 %v1404
    %v1471 = vunpack.c.l.b16 %v1405
    %v1472 = vunpack.c.h.b16 %v1405
    %v1473 = vunpack.c.l.b16 %v1406
    %v1474 = vunpack.c.h.b16 %v1406
    %v1475 = vunpack.c.l.b16 %v1407
    %v1476 = vunpack.c.h.b16 %v1407
    %v1477 = vpack.c.b16 %v1459, %v1453
    %v1478 = vpack.c.b16 %v1460, %v1454
    %v1479 = vpack.c.b16 %v1461, %v1455
    %v1480 = vpack.c.b16 %v1462, %v1456
    %v1481 = vpack.c.b16 %v1463, %v1457
    %v1482 = vpack.c.b16 %v1464, %v1458
    %v1483 = vpack.c.b16 %v1471, %v1465
    %v1484 = vpack.c.b16 %v1472, %v1466
    %v1485 = vpack.c.b16 %v1473, %v1467
    %v1486 = vpack.c.b16 %v1474, %v1468
    %v1487 = vpack.c.b16 %v1475, %v1469
    %v1488 = vpack.c.b16 %v1476, %v1470
    %v1502 = vsel %vm184, %v1394, 0
    %1504 = vmatprep.subr.bf16.mxu0 %v1478
    %1505 = vmatpush1.bf16.msra.mxu0 %v1477
    %1506 = vmatprep.subr.bf16.mxu0 %v1484
    %1507 = vmatpush1.bf16.msra.mxu0 %v1483
    %1508 = vmatprep.subr.bf16.mxu0 0
    %1509 = vmatpush1.bf16.msra.mxu0 0
    %1510 = vmatprep.subr.bf16.mxu0 0
    %1511 = vmatpush1.bf16.msra.mxu0 0
    %1512 = vmatprep.subr.bf16.mxu0 0
    %1513 = vmatpush1.bf16.msra.mxu0 0
    %1514 = vmatprep.subr.bf16.mxu0 0
    %1515 = vmatpush1.bf16.msra.mxu0 0
    %1516 = vmatprep.subr.bf16.mxu0 0
    %1517 = vmatpush1.bf16.msra.mxu0 0
    %1518 = vmatprep.subr.bf16.mxu0 0
    %1519 = vmatpush1.bf16.msra.mxu0 0
    %1520 = vmatprep.subr.bf16.mxu0 0
    %1521 = vmatpush1.bf16.msra.mxu0 0
    %1522 = vmatprep.subr.bf16.mxu0 0
    %1523 = vmatpush1.bf16.msra.mxu0 0
    %1524 = vmatprep.subr.bf16.mxu0 0
    %1525 = vmatpush1.bf16.msra.mxu0 0
    %1526 = vmatprep.subr.bf16.mxu0 0
    %1527 = vmatpush1.bf16.msra.mxu0 0
    %1528 = vmatprep.subr.bf16.mxu0 0
    %1529 = vmatpush1.bf16.msra.mxu0 0
    %1530 = vmatprep.subr.bf16.mxu0 0
    %1531 = vmatpush1.bf16.msra.mxu0 0
    %1532 = vmatprep.subr.bf16.mxu0 0
    %1533 = vmatpush1.bf16.msra.mxu0 0
    %1534 = vmatprep.subr.bf16.mxu0 0
    %1535 = vmatpush1.bf16.msra.mxu0 0
    %1536 = vmatprep.mubr.bf16.mxu0 0
    %1537 = vmatmul.mubr.bf16.gmra.mrb[0].mxu0 %v1502
    %v1538 = vpop.f32.mrb[0].mxu0
    %v1539 = vadd.f32 %v1414, %v1538
    %v1540 = vpop.f32.mrb[0].mxu0
    %v1541 = vadd.f32 %v1418, %v1540
    %v1542 = vpop.f32.mrb[0].mxu0
    %v1543 = vadd.f32 %v1414, %v1542
    %v1544 = vpop.f32.mrb[0].mxu0
    %v1545 = vadd.f32 %v1418, %v1544
    %1546 = vdwg.mxu0
    %1547 = vmatprep.subr.bf16.mxu0 %v1480
    %1548 = vmatpush1.bf16.msra.mxu0 %v1479
    %1549 = vmatprep.subr.bf16.mxu0 %v1486
    %1550 = vmatpush1.bf16.msra.mxu0 %v1485
    %1551 = vmatprep.subr.bf16.mxu0 0
    %1552 = vmatpush1.bf16.msra.mxu0 0
    %1553 = vmatprep.subr.bf16.mxu0 0
    %1554 = vmatpush1.bf16.msra.mxu0 0
    %1555 = vmatprep.subr.bf16.mxu0 0
    %1556 = vmatpush1.bf16.msra.mxu0 0
    %1557 = vmatprep.subr.bf16.mxu0 0
    %1558 = vmatpush1.bf16.msra.mxu0 0
    %1559 = vmatprep.subr.bf16.mxu0 0
    %1560 = vmatpush1.bf16.msra.mxu0 0
    %1561 = vmatprep.subr.bf16.mxu0 0
    %1562 = vmatpush1.bf16.msra.mxu0 0
    %1563 = vmatprep.subr.bf16.mxu0 0
    %1564 = vmatpush1.bf16.msra.mxu0 0
    %1565 = vmatprep.subr.bf16.mxu0 0
    %1566 = vmatpush1.bf16.msra.mxu0 0
    %1567 = vmatprep.subr.bf16.mxu0 0
    %1568 = vmatpush1.bf16.msra.mxu0 0
    %1569 = vmatprep.subr.bf16.mxu0 0
    %1570 = vmatpush1.bf16.msra.mxu0 0
    %1571 = vmatprep.subr.bf16.mxu0 0
    %1572 = vmatpush1.bf16.msra.mxu0 0
    %1573 = vmatprep.subr.bf16.mxu0 0
    %1574 = vmatpush1.bf16.msra.mxu0 0
    %1575 = vmatprep.subr.bf16.mxu0 0
    %1576 = vmatpush1.bf16.msra.mxu0 0
    %1577 = vmatprep.subr.bf16.mxu0 0
    %1578 = vmatpush1.bf16.msra.mxu0 0
    %1579 = vmatprep.mubr.bf16.mxu0 0
    %1580 = vmatmul.mubr.bf16.gmra.mrb[0].mxu0 %v1502
    %v1581 = vpop.f32.mrb[0].mxu0
    %v1582 = vadd.f32 %v1422, %v1581
    %v1583 = vpop.f32.mrb[0].mxu0
    %v1584 = vadd.f32 %v1426, %v1583
    %v1585 = vpop.f32.mrb[0].mxu0
    %v1586 = vadd.f32 %v1422, %v1585
    %v1587 = vpop.f32.mrb[0].mxu0
    %v1588 = vadd.f32 %v1426, %v1587
    %1589 = vdwg.mxu0
    %1590 = vmatprep.subr.bf16.mxu0 %v1482
    %1591 = vmatpush1.bf16.msra.mxu0 %v1481
    %1592 = vmatprep.subr.bf16.mxu0 %v1488
    %1593 = vmatpush1.bf16.msra.mxu0 %v1487
    %1594 = vmatprep.subr.bf16.mxu0 0
    %1595 = vmatpush1.bf16.msra.mxu0 0
    %1596 = vmatprep.subr.bf16.mxu0 0
    %1597 = vmatpush1.bf16.msra.mxu0 0
    %1598 = vmatprep.subr.bf16.mxu0 0
    %1599 = vmatpush1.bf16.msra.mxu0 0
    %1600 = vmatprep.subr.bf16.mxu0 0
    %1601 = vmatpush1.bf16.msra.mxu0 0
    %1602 = vmatprep.subr.bf16.mxu0 0
    %1603 = vmatpush1.bf16.msra.mxu0 0
    %1604 = vmatprep.subr.bf16.mxu0 0
    %1605 = vmatpush1.bf16.msra.mxu0 0
    %1606 = vmatprep.subr.bf16.mxu0 0
    %1607 = vmatpush1.bf16.msra.mxu0 0
    %1608 = vmatprep.subr.bf16.mxu0 0
    %1609 = vmatpush1.bf16.msra.mxu0 0
    %1610 = vmatprep.subr.bf16.mxu0 0
    %1611 = vmatpush1.bf16.msra.mxu0 0
    %1612 = vmatprep.subr.bf16.mxu0 0
    %1613 = vmatpush1.bf16.msra.mxu0 0
    %1614 = vmatprep.subr.bf16.mxu0 0
    %1615 = vmatpush1.bf16.msra.mxu0 0
    %1616 = vmatprep.subr.bf16.mxu0 0
    %1617 = vmatpush1.bf16.msra.mxu0 0
    %1618 = vmatprep.subr.bf16.mxu0 0
    %1619 = vmatpush1.bf16.msra.mxu0 0
    %1620 = vmatprep.subr.bf16.mxu0 0
    %1621 = vmatpush1.bf16.msra.mxu0 0
    %1622 = vmatprep.mubr.bf16.mxu0 0
    %1623 = vmatmul.mubr.bf16.gmra.mrb[0].mxu0 %v1502
    %v1624 = vpop.f32.mrb[0].mxu0
    %v1625 = vadd.f32 %v1430, %v1624
    %v1626 = vpop.f32.mrb[0].mxu0
    %v1627 = vadd.f32 %v1434, %v1626
    %v1628 = vpop.f32.mrb[0].mxu0
    %v1629 = vadd.f32 %v1430, %v1628
    %v1630 = vpop.f32.mrb[0].mxu0
    %v1631 = vadd.f32 %v1434, %v1630
    %1632 = vdwg.mxu0
    %v1633 = vpack.c.bf16 %v1539, %v1539
    %v1634 = vpack.c.bf16 %v1543, %v1543
    %v1635 = vpack.c.bf16 %v1541, %v1541
    %v1636 = vpack.c.bf16 %v1545, %v1545
    %v1637 = vpack.c.bf16 %v1582, %v1582
    %v1638 = vpack.c.bf16 %v1586, %v1586
    %v1639 = vpack.c.bf16 %v1584, %v1584
    %v1640 = vpack.c.bf16 %v1588, %v1588
    %v1641 = vpack.c.bf16 %v1625, %v1625
    %v1642 = vpack.c.bf16 %v1629, %v1629
    %v1643 = vpack.c.bf16 %v1627, %v1627
    %v1644 = vpack.c.bf16 %v1631, %v1631
    %1645 = vmatprep.subr.bf16.mxu0 0
    %1646 = vmatpush1.bf16.xpose.msra.mxu0 %v1637
    %1647 = vmatprep.subr.bf16.mxu0 0
    %1648 = vmatpush1.bf16.xpose.msra.mxu0 0
    %1649 = vmatprep.subr.bf16.mxu0 0
    %1650 = vmatpush1.bf16.xpose.msra.mxu0 0
    %1651 = vmatprep.subr.bf16.mxu0 0
    %1652 = vmatpush1.bf16.xpose.msra.mxu0 0
    %1653 = vmatprep.subr.bf16.mxu0 0
    %1654 = vmatpush1.bf16.xpose.msra.mxu0 0
    %1655 = vmatprep.subr.bf16.mxu0 0
    %1656 = vmatpush1.bf16.xpose.msra.mxu0 0
    %1657 = vmatprep.subr.bf16.mxu0 0
    %1658 = vmatpush1.bf16.xpose.msra.mxu0 0
    %1659 = vmatprep.subr.bf16.mxu0 0
    %1660 = vmatpush1.bf16.xpose.msra.mxu0 0
    %1661 = vmatprep.subr.bf16.mxu0 0
    %1662 = vmatpush1.bf16.xpose.msra.mxu0 0
    %1663 = vmatprep.subr.bf16.mxu0 0
    %1664 = vmatpush1.bf16.xpose.msra.mxu0 0
    %1665 = vmatprep.subr.bf16.mxu0 0
    %1666 = vmatpush1.bf16.xpose.msra.mxu0 0
    %1667 = vmatprep.subr.bf16.mxu0 0
    %1668 = vmatpush1.bf16.xpose.msra.mxu0 0
    %1669 = vmatprep.subr.bf16.mxu0 0
    %1670 = vmatpush1.bf16.xpose.msra.mxu0 0
    %1671 = vmatprep.subr.bf16.mxu0 0
    %1672 = vmatpush1.bf16.xpose.msra.mxu0 0
    %1673 = vmatprep.subr.bf16.mxu0 0
    %1674 = vmatpush1.bf16.xpose.msra.mxu0 0
    %1675 = vmatprep.subr.bf16.mxu0 0
    %1676 = vmatpush1.bf16.xpose.msra.mxu0 0
    %1677 = vmatprep.mubr.bf16.mxu0 0
    %1678 = vmatmul.mubr.bf16.gmra.mrb[0].mxu0 %v1633
    %v1679 = vpop.f32.mrb[0].mxu0
    %v1680 = vadd.f32 %v514, %v1679
    %v1681 = vpop.f32.mrb[0].mxu0
    %v1682 = vpop.f32.mrb[0].mxu0
    %v1683 = vpop.f32.mrb[0].mxu0
    %1684 = vdwg.mxu0
    %1685 = vmatprep.subr.bf16.mxu0 0
    %1686 = vmatpush1.bf16.xpose.msra.mxu0 %v1638
    %1687 = vmatprep.subr.bf16.mxu0 0
    %1688 = vmatpush1.bf16.xpose.msra.mxu0 0
    %1689 = vmatprep.subr.bf16.mxu0 0
    %1690 = vmatpush1.bf16.xpose.msra.mxu0 0
    %1691 = vmatprep.subr.bf16.mxu0 0
    %1692 = vmatpush1.bf16.xpose.msra.mxu0 0
    %1693 = vmatprep.subr.bf16.mxu0 0
    %1694 = vmatpush1.bf16.xpose.msra.mxu0 0
    %1695 = vmatprep.subr.bf16.mxu0 0
    %1696 = vmatpush1.bf16.xpose.msra.mxu0 0
    %1697 = vmatprep.subr.bf16.mxu0 0
    %1698 = vmatpush1.bf16.xpose.msra.mxu0 0
    %1699 = vmatprep.subr.bf16.mxu0 0
    %1700 = vmatpush1.bf16.xpose.msra.mxu0 0
    %1701 = vmatprep.subr.bf16.mxu0 0
    %1702 = vmatpush1.bf16.xpose.msra.mxu0 0
    %1703 = vmatprep.subr.bf16.mxu0 0
    %1704 = vmatpush1.bf16.xpose.msra.mxu0 0
    %1705 = vmatprep.subr.bf16.mxu0 0
    %1706 = vmatpush1.bf16.xpose.msra.mxu0 0
    %1707 = vmatprep.subr.bf16.mxu0 0
    %1708 = vmatpush1.bf16.xpose.msra.mxu0 0
    %1709 = vmatprep.subr.bf16.mxu0 0
    %1710 = vmatpush1.bf16.xpose.msra.mxu0 0
    %1711 = vmatprep.subr.bf16.mxu0 0
    %1712 = vmatpush1.bf16.xpose.msra.mxu0 0
    %1713 = vmatprep.subr.bf16.mxu0 0
    %1714 = vmatpush1.bf16.xpose.msra.mxu0 0
    %1715 = vmatprep.subr.bf16.mxu0 0
    %1716 = vmatpush1.bf16.xpose.msra.mxu0 0
    %1717 = vmatprep.mubr.bf16.mxu0 0
    %1718 = vmatmul.mubr.bf16.gmra.mrb[0].mxu0 %v1634
    %v1719 = vpop.f32.mrb[0].mxu0
    %v1720 = vadd.f32 %v518, %v1719
    %v1721 = vpop.f32.mrb[0].mxu0
    %v1722 = vpop.f32.mrb[0].mxu0
    %v1723 = vpop.f32.mrb[0].mxu0
    %1724 = vdwg.mxu0
    %1725 = vmatprep.subr.bf16.mxu0 0
    %1726 = vmatpush1.bf16.xpose.msra.mxu0 %v1639
    %1727 = vmatprep.subr.bf16.mxu0 0
    %1728 = vmatpush1.bf16.xpose.msra.mxu0 0
    %1729 = vmatprep.subr.bf16.mxu0 0
    %1730 = vmatpush1.bf16.xpose.msra.mxu0 0
    %1731 = vmatprep.subr.bf16.mxu0 0
    %1732 = vmatpush1.bf16.xpose.msra.mxu0 0
    %1733 = vmatprep.subr.bf16.mxu0 0
    %1734 = vmatpush1.bf16.xpose.msra.mxu0 0
    %1735 = vmatprep.subr.bf16.mxu0 0
    %1736 = vmatpush1.bf16.xpose.msra.mxu0 0
    %1737 = vmatprep.subr.bf16.mxu0 0
    %1738 = vmatpush1.bf16.xpose.msra.mxu0 0
    %1739 = vmatprep.subr.bf16.mxu0 0
    %1740 = vmatpush1.bf16.xpose.msra.mxu0 0
    %1741 = vmatprep.subr.bf16.mxu0 0
    %1742 = vmatpush1.bf16.xpose.msra.mxu0 0
    %1743 = vmatprep.subr.bf16.mxu0 0
    %1744 = vmatpush1.bf16.xpose.msra.mxu0 0
    %1745 = vmatprep.subr.bf16.mxu0 0
    %1746 = vmatpush1.bf16.xpose.msra.mxu0 0
    %1747 = vmatprep.subr.bf16.mxu0 0
    %1748 = vmatpush1.bf16.xpose.msra.mxu0 0
    %1749 = vmatprep.subr.bf16.mxu0 0
    %1750 = vmatpush1.bf16.xpose.msra.mxu0 0
    %1751 = vmatprep.subr.bf16.mxu0 0
    %1752 = vmatpush1.bf16.xpose.msra.mxu0 0
    %1753 = vmatprep.subr.bf16.mxu0 0
    %1754 = vmatpush1.bf16.xpose.msra.mxu0 0
    %1755 = vmatprep.subr.bf16.mxu0 0
    %1756 = vmatpush1.bf16.xpose.msra.mxu0 0
    %1757 = vmatprep.mubr.bf16.mxu0 0
    %1758 = vmatmul.mubr.bf16.gmra.mrb[0].mxu0 %v1635
    %v1759 = vpop.f32.mrb[0].mxu0
    %v1760 = vadd.f32 %v522, %v1759
    %v1761 = vpop.f32.mrb[0].mxu0
    %v1762 = vpop.f32.mrb[0].mxu0
    %v1763 = vpop.f32.mrb[0].mxu0
    %1764 = vdwg.mxu0
    %1765 = vmatprep.subr.bf16.mxu0 0
    %1766 = vmatpush1.bf16.xpose.msra.mxu0 %v1640
    %1767 = vmatprep.subr.bf16.mxu0 0
    %1768 = vmatpush1.bf16.xpose.msra.mxu0 0
    %1769 = vmatprep.subr.bf16.mxu0 0
    %1770 = vmatpush1.bf16.xpose.msra.mxu0 0
    %1771 = vmatprep.subr.bf16.mxu0 0
    %1772 = vmatpush1.bf16.xpose.msra.mxu0 0
    %1773 = vmatprep.subr.bf16.mxu0 0
    %1774 = vmatpush1.bf16.xpose.msra.mxu0 0
    %1775 = vmatprep.subr.bf16.mxu0 0
    %1776 = vmatpush1.bf16.xpose.msra.mxu0 0
    %1777 = vmatprep.subr.bf16.mxu0 0
    %1778 = vmatpush1.bf16.xpose.msra.mxu0 0
    %1779 = vmatprep.subr.bf16.mxu0 0
    %1780 = vmatpush1.bf16.xpose.msra.mxu0 0
    %1781 = vmatprep.subr.bf16.mxu0 0
    %1782 = vmatpush1.bf16.xpose.msra.mxu0 0
    %1783 = vmatprep.subr.bf16.mxu0 0
    %1784 = vmatpush1.bf16.xpose.msra.mxu0 0
    %1785 = vmatprep.subr.bf16.mxu0 0
    %1786 = vmatpush1.bf16.xpose.msra.mxu0 0
    %1787 = vmatprep.subr.bf16.mxu0 0
    %1788 = vmatpush1.bf16.xpose.msra.mxu0 0
    %1789 = vmatprep.subr.bf16.mxu0 0
    %1790 = vmatpush1.bf16.xpose.msra.mxu0 0
    %1791 = vmatprep.subr.bf16.mxu0 0
    %1792 = vmatpush1.bf16.xpose.msra.mxu0 0
    %1793 = vmatprep.subr.bf16.mxu0 0
    %1794 = vmatpush1.bf16.xpose.msra.mxu0 0
    %1795 = vmatprep.subr.bf16.mxu0 0
    %1796 = vmatpush1.bf16.xpose.msra.mxu0 0
    %1797 = vmatprep.mubr.bf16.mxu0 0
    %1798 = vmatmul.mubr.bf16.gmra.mrb[0].mxu0 %v1636
    %v1799 = vpop.f32.mrb[0].mxu0
    %v1800 = vadd.f32 %v526, %v1799
    %v1801 = vpop.f32.mrb[0].mxu0
    %v1802 = vpop.f32.mrb[0].mxu0
    %v1803 = vpop.f32.mrb[0].mxu0
    %1804 = vdwg.mxu0
    %v1805 = vsel %vm691, %v1680, -inf
    %1806 = vmax.xlane.f32.xlu0 %v1805
    %v1807 = vpop.xlane.xlu0 %1806
    %v1808 = vsel %vm691, %v1720, -inf
    %1809 = vmax.xlane.f32.xlu0 %v1808
    %v1810 = vpop.xlane.xlu0 %1809
    %v1811 = vsel %vm691, %v1760, -inf
    %1812 = vmax.xlane.f32.xlu0 %v1811
    %v1813 = vpop.xlane.xlu0 %1812
    %v1814 = vsel %vm691, %v1800, -inf
    %1815 = vmax.xlane.f32.xlu0 %v1814
    %v1816 = vpop.xlane.xlu0 %1815
    %v1817 = vsub.f32 %v1680, %v1807
    %v1818 = vsub.f32 %v1720, %v1810
    %v1819 = vsub.f32 %v1760, %v1813
    %v1820 = vsub.f32 %v1800, %v1816
    %v1821 = vmul.f32 %v1817, 1.442695
    %v1822 = vpow.pop %v1821
    %v1823 = vmul.f32 %v1818, 1.442695
    %v1824 = vpow.pop %v1823
    %v1825 = vmul.f32 %v1819, 1.442695
    %v1826 = vpow.pop %v1825
    %v1827 = vmul.f32 %v1820, 1.442695
    %v1828 = vpow.pop %v1827
    %v1829 = vsel %vm691, %v1822, 0.0
    %1830 = vadd.xlane.f32.xlu0 %v1829
    %v1831 = vpop.xlane.xlu0 %1830
    %v1832 = vsel %vm691, %v1824, 0.0
    %1833 = vadd.xlane.f32.xlu0 %v1832
    %v1834 = vpop.xlane.xlu0 %1833
    %v1835 = vsel %vm691, %v1826, 0.0
    %1836 = vadd.xlane.f32.xlu0 %v1835
    %v1837 = vpop.xlane.xlu0 %1836
    %v1838 = vsel %vm691, %v1828, 0.0
    %1839 = vadd.xlane.f32.xlu0 %v1838
    %v1840 = vpop.xlane.xlu0 %1839
    %v1841 = vrcp.pop %v1831
    %v1842 = vrcp.pop %v1834
    %v1843 = vrcp.pop %v1837
    %v1844 = vrcp.pop %v1840
    %v1845 = vmul.f32 %v1822, %v1841
    %v1846 = vmul.f32 %v1824, %v1842
    %v1847 = vmul.f32 %v1826, %v1843
    %v1848 = vmul.f32 %v1828, %v1844
    %v1849 = vpack.c.bf16 %v1845, %v1845
    %v1850 = vpack.c.bf16 %v1846, %v1846
    %v1851 = vpack.c.bf16 %v1847, %v1847
    %v1852 = vpack.c.bf16 %v1848, %v1848
    %v1854 = vsel %vm691, %v1849, 0
    %v1857 = vsel %vm743, %v1641, 0
    %1859 = vmatprep.subr.bf16.mxu0 0
    %1860 = vmatpush1.bf16.msra.mxu0 %v1857
    %1861 = vmatprep.subr.bf16.mxu0 0
    %1862 = vmatpush1.bf16.msra.mxu0 0
    %1863 = vmatprep.subr.bf16.mxu0 0
    %1864 = vmatpush1.bf16.msra.mxu0 0
    %1865 = vmatprep.subr.bf16.mxu0 0
    %1866 = vmatpush1.bf16.msra.mxu0 0
    %1867 = vmatprep.subr.bf16.mxu0 0
    %1868 = vmatpush1.bf16.msra.mxu0 0
    %1869 = vmatprep.subr.bf16.mxu0 0
    %1870 = vmatpush1.bf16.msra.mxu0 0
    %1871 = vmatprep.subr.bf16.mxu0 0
    %1872 = vmatpush1.bf16.msra.mxu0 0
    %1873 = vmatprep.subr.bf16.mxu0 0
    %1874 = vmatpush1.bf16.msra.mxu0 0
    %1875 = vmatprep.subr.bf16.mxu0 0
    %1876 = vmatpush1.bf16.msra.mxu0 0
    %1877 = vmatprep.subr.bf16.mxu0 0
    %1878 = vmatpush1.bf16.msra.mxu0 0
    %1879 = vmatprep.subr.bf16.mxu0 0
    %1880 = vmatpush1.bf16.msra.mxu0 0
    %1881 = vmatprep.subr.bf16.mxu0 0
    %1882 = vmatpush1.bf16.msra.mxu0 0
    %1883 = vmatprep.subr.bf16.mxu0 0
    %1884 = vmatpush1.bf16.msra.mxu0 0
    %1885 = vmatprep.subr.bf16.mxu0 0
    %1886 = vmatpush1.bf16.msra.mxu0 0
    %1887 = vmatprep.subr.bf16.mxu0 0
    %1888 = vmatpush1.bf16.msra.mxu0 0
    %1889 = vmatprep.subr.bf16.mxu0 0
    %1890 = vmatpush1.bf16.msra.mxu0 0
    %1891 = vmatprep.mubr.bf16.mxu0 0
    %1892 = vmatmul.mubr.bf16.gmra.mrb[0].mxu0 %v1854
    %v1893 = vpop.f32.mrb[0].mxu0
    %v1894 = vadd.f32 0.0, %v1893
    %v1895 = vpop.f32.mrb[0].mxu0
    %v1896 = vpop.f32.mrb[0].mxu0
    %v1897 = vpop.f32.mrb[0].mxu0
    %1898 = vdwg.mxu0
    %v1900 = vsel %vm691, %v1850, 0
    %v1903 = vsel %vm743, %v1642, 0
    %1905 = vmatprep.subr.bf16.mxu0 0
    %1906 = vmatpush1.bf16.msra.mxu0 %v1903
    %1907 = vmatprep.subr.bf16.mxu0 0
    %1908 = vmatpush1.bf16.msra.mxu0 0
    %1909 = vmatprep.subr.bf16.mxu0 0
    %1910 = vmatpush1.bf16.msra.mxu0 0
    %1911 = vmatprep.subr.bf16.mxu0 0
    %1912 = vmatpush1.bf16.msra.mxu0 0
    %1913 = vmatprep.subr.bf16.mxu0 0
    %1914 = vmatpush1.bf16.msra.mxu0 0
    %1915 = vmatprep.subr.bf16.mxu0 0
    %1916 = vmatpush1.bf16.msra.mxu0 0
    %1917 = vmatprep.subr.bf16.mxu0 0
    %1918 = vmatpush1.bf16.msra.mxu0 0
    %1919 = vmatprep.subr.bf16.mxu0 0
    %1920 = vmatpush1.bf16.msra.mxu0 0
    %1921 = vmatprep.subr.bf16.mxu0 0
    %1922 = vmatpush1.bf16.msra.mxu0 0
    %1923 = vmatprep.subr.bf16.mxu0 0
    %1924 = vmatpush1.bf16.msra.mxu0 0
    %1925 = vmatprep.subr.bf16.mxu0 0
    %1926 = vmatpush1.bf16.msra.mxu0 0
    %1927 = vmatprep.subr.bf16.mxu0 0
    %1928 = vmatpush1.bf16.msra.mxu0 0
    %1929 = vmatprep.subr.bf16.mxu0 0
    %1930 = vmatpush1.bf16.msra.mxu0 0
    %1931 = vmatprep.subr.bf16.mxu0 0
    %1932 = vmatpush1.bf16.msra.mxu0 0
    %1933 = vmatprep.subr.bf16.mxu0 0
    %1934 = vmatpush1.bf16.msra.mxu0 0
    %1935 = vmatprep.subr.bf16.mxu0 0
    %1936 = vmatpush1.bf16.msra.mxu0 0
    %1937 = vmatprep.mubr.bf16.mxu0 0
    %1938 = vmatmul.mubr.bf16.gmra.mrb[0].mxu0 %v1900
    %v1939 = vpop.f32.mrb[0].mxu0
    %v1940 = vadd.f32 0.0, %v1939
    %v1941 = vpop.f32.mrb[0].mxu0
    %v1942 = vpop.f32.mrb[0].mxu0
    %v1943 = vpop.f32.mrb[0].mxu0
    %1944 = vdwg.mxu0
    %v1946 = vsel %vm691, %v1851, 0
    %v1949 = vsel %vm743, %v1643, 0
    %1951 = vmatprep.subr.bf16.mxu0 0
    %1952 = vmatpush1.bf16.msra.mxu0 %v1949
    %1953 = vmatprep.subr.bf16.mxu0 0
    %1954 = vmatpush1.bf16.msra.mxu0 0
    %1955 = vmatprep.subr.bf16.mxu0 0
    %1956 = vmatpush1.bf16.msra.mxu0 0
    %1957 = vmatprep.subr.bf16.mxu0 0
    %1958 = vmatpush1.bf16.msra.mxu0 0
    %1959 = vmatprep.subr.bf16.mxu0 0
    %1960 = vmatpush1.bf16.msra.mxu0 0
    %1961 = vmatprep.subr.bf16.mxu0 0
    %1962 = vmatpush1.bf16.msra.mxu0 0
    %1963 = vmatprep.subr.bf16.mxu0 0
    %1964 = vmatpush1.bf16.msra.mxu0 0
    %1965 = vmatprep.subr.bf16.mxu0 0
    %1966 = vmatpush1.bf16.msra.mxu0 0
    %1967 = vmatprep.subr.bf16.mxu0 0
    %1968 = vmatpush1.bf16.msra.mxu0 0
    %1969 = vmatprep.subr.bf16.mxu0 0
    %1970 = vmatpush1.bf16.msra.mxu0 0
    %1971 = vmatprep.subr.bf16.mxu0 0
    %1972 = vmatpush1.bf16.msra.mxu0 0
    %1973 = vmatprep.subr.bf16.mxu0 0
    %1974 = vmatpush1.bf16.msra.mxu0 0
    %1975 = vmatprep.subr.bf16.mxu0 0
    %1976 = vmatpush1.bf16.msra.mxu0 0
    %1977 = vmatprep.subr.bf16.mxu0 0
    %1978 = vmatpush1.bf16.msra.mxu0 0
    %1979 = vmatprep.subr.bf16.mxu0 0
    %1980 = vmatpush1.bf16.msra.mxu0 0
    %1981 = vmatprep.subr.bf16.mxu0 0
    %1982 = vmatpush1.bf16.msra.mxu0 0
    %1983 = vmatprep.mubr.bf16.mxu0 0
    %1984 = vmatmul.mubr.bf16.gmra.mrb[0].mxu0 %v1946
    %v1985 = vpop.f32.mrb[0].mxu0
    %v1986 = vadd.f32 0.0, %v1985
    %v1987 = vpop.f32.mrb[0].mxu0
    %v1988 = vpop.f32.mrb[0].mxu0
    %v1989 = vpop.f32.mrb[0].mxu0
    %1990 = vdwg.mxu0
    %v1992 = vsel %vm691, %v1852, 0
    %v1995 = vsel %vm743, %v1644, 0
    %1997 = vmatprep.subr.bf16.mxu0 0
    %1998 = vmatpush1.bf16.msra.mxu0 %v1995
    %1999 = vmatprep.subr.bf16.mxu0 0
    %2000 = vmatpush1.bf16.msra.mxu0 0
    %2001 = vmatprep.subr.bf16.mxu0 0
    %2002 = vmatpush1.bf16.msra.mxu0 0
    %2003 = vmatprep.subr.bf16.mxu0 0
    %2004 = vmatpush1.bf16.msra.mxu0 0
    %2005 = vmatprep.subr.bf16.mxu0 0
    %2006 = vmatpush1.bf16.msra.mxu0 0
    %2007 = vmatprep.subr.bf16.mxu0 0
    %2008 = vmatpush1.bf16.msra.mxu0 0
    %2009 = vmatprep.subr.bf16.mxu0 0
    %2010 = vmatpush1.bf16.msra.mxu0 0
    %2011 = vmatprep.subr.bf16.mxu0 0
    %2012 = vmatpush1.bf16.msra.mxu0 0
    %2013 = vmatprep.subr.bf16.mxu0 0
    %2014 = vmatpush1.bf16.msra.mxu0 0
    %2015 = vmatprep.subr.bf16.mxu0 0
    %2016 = vmatpush1.bf16.msra.mxu0 0
    %2017 = vmatprep.subr.bf16.mxu0 0
    %2018 = vmatpush1.bf16.msra.mxu0 0
    %2019 = vmatprep.subr.bf16.mxu0 0
    %2020 = vmatpush1.bf16.msra.mxu0 0
    %2021 = vmatprep.subr.bf16.mxu0 0
    %2022 = vmatpush1.bf16.msra.mxu0 0
    %2023 = vmatprep.subr.bf16.mxu0 0
    %2024 = vmatpush1.bf16.msra.mxu0 0
    %2025 = vmatprep.subr.bf16.mxu0 0
    %2026 = vmatpush1.bf16.msra.mxu0 0
    %2027 = vmatprep.subr.bf16.mxu0 0
    %2028 = vmatpush1.bf16.msra.mxu0 0
    %2029 = vmatprep.mubr.bf16.mxu0 0
    %2030 = vmatmul.mubr.bf16.gmra.mrb[0].mxu0 %v1992
    %v2031 = vpop.f32.mrb[0].mxu0
    %v2032 = vadd.f32 0.0, %v2031
    %v2033 = vpop.f32.mrb[0].mxu0
    %v2034 = vpop.f32.mrb[0].mxu0
    %v2035 = vpop.f32.mrb[0].mxu0
    %2036 = vdwg.mxu0
    %v2037 = vpack.c.bf16 %v1940, %v1894
    %v2038 = vpack.c.bf16 %v2032, %v1986
    %s2039 = scalar_lea.vmem %s8, 128
    %v2040 = vld [vmem:[%s2039] sm:$0xf]
    %v2041 = vld [vmem:[%s2039 + $0x4] sm:$0xf]
    %v2042 = vld [vmem:[%s2039 + $0x8] sm:$0xf]
    %v2043 = vld [vmem:[%s2039 + $0xc] sm:$0xf]
    %v2044 = vld [vmem:[%s2039 + $0x10] sm:$0xf]
    %v2045 = vld [vmem:[%s2039 + $0x14] sm:$0xf]
    %v2046 = vld [vmem:[%s2039 + $0x18] sm:$0xf]
    %v2047 = vld [vmem:[%s2039 + $0x1c] sm:$0xf]
    %v2048 = vld [vmem:[%s2039 + $0x20] sm:$0xf]
    %v2049 = vld [vmem:[%s2039 + $0x24] sm:$0xf]
    %v2050 = vld [vmem:[%s2039 + $0x28] sm:$0xf]
    %v2051 = vld [vmem:[%s2039 + $0x2c] sm:$0xf]
    %v2052 = vld [vmem:[%s2039 + $0x30] sm:$0xf]
    %v2053 = vld [vmem:[%s2039 + $0x34] sm:$0xf]
    %v2054 = vld [vmem:[%s2039 + $0x38] sm:$0xf]
    %v2055 = vld [vmem:[%s2039 + $0x3c] sm:$0xf]
    %v2056 = vld [vmem:[%s2039 + $0x40] sm:$0xf]
    %v2057 = vld [vmem:[%s2039 + $0x44] sm:$0xf]
    %v2058 = vld [vmem:[%s2039 + $0x48] sm:$0xf]
    %v2059 = vld [vmem:[%s2039 + $0x4c] sm:$0xf]
    %v2060 = vld [vmem:[%s2039 + $0x50] sm:$0xf]
    %v2061 = vld [vmem:[%s2039 + $0x54] sm:$0xf]
    %v2062 = vld [vmem:[%s2039 + $0x58] sm:$0xf]
    %v2063 = vld [vmem:[%s2039 + $0x5c] sm:$0xf]
    %v2064 = vld [vmem:[%s2039 + $0x60] sm:$0xf]
    %v2065 = vld [vmem:[%s2039 + $0x64] sm:$0xf]
    %v2066 = vld [vmem:[%s2039 + $0x68] sm:$0xf]
    %v2067 = vld [vmem:[%s2039 + $0x6c] sm:$0xf]
    %v2068 = vld [vmem:[%s2039 + $0x70] sm:$0xf]
    %v2069 = vld [vmem:[%s2039 + $0x74] sm:$0xf]
    %v2070 = vld [vmem:[%s2039 + $0x78] sm:$0xf]
    %v2071 = vld [vmem:[%s2039 + $0x7c] sm:$0xf]
    %s2072 = scalar_lea.vmem %s9, 1
    %v2073 = vld [vmem:[%s2072] sm:$0x1]
    %v2075 = vlaneseq
    %v2076 = vshrl.u32 %v2075, 7
    %v2077 = vsub.s32 0, %v2076
    %v2078 = vrot.slane %v2073, %v2077
    %v2112 = vunpack.c.l.b16 %v2040
    %v2113 = vunpack.c.l.b16 %v2041
    %v2114 = vunpack.c.l.b16 %v2042
    %v2115 = vunpack.c.l.b16 %v2043
    %v2116 = vunpack.c.l.b16 %v2044
    %v2117 = vunpack.c.l.b16 %v2045
    %v2118 = vunpack.c.l.b16 %v2046
    %v2119 = vunpack.c.l.b16 %v2047
    %v2120 = vunpack.c.l.b16 %v2048
    %v2121 = vunpack.c.l.b16 %v2049
    %v2122 = vunpack.c.l.b16 %v2050
    %v2123 = vunpack.c.l.b16 %v2051
    %v2124 = vunpack.c.l.b16 %v2052
    %v2125 = vunpack.c.l.b16 %v2053
    %v2126 = vunpack.c.l.b16 %v2054
    %v2127 = vunpack.c.l.b16 %v2055
    %v2128 = vunpack.c.l.b16 %v2056
    %v2129 = vunpack.c.l.b16 %v2057
    %v2130 = vunpack.c.l.b16 %v2058
    %v2131 = vunpack.c.l.b16 %v2059
    %v2132 = vunpack.c.l.b16 %v2060
    %v2133 = vunpack.c.l.b16 %v2061
    %v2134 = vunpack.c.l.b16 %v2062
    %v2135 = vunpack.c.l.b16 %v2063
    %v2136 = vunpack.c.l.b16 %v2064
    %v2137 = vunpack.c.l.b16 %v2065
    %v2138 = vunpack.c.l.b16 %v2066
    %v2139 = vunpack.c.l.b16 %v2067
    %v2140 = vunpack.c.l.b16 %v2068
    %v2141 = vunpack.c.l.b16 %v2069
    %v2142 = vunpack.c.l.b16 %v2070
    %v2143 = vunpack.c.l.b16 %v2071
    %v2144 = vpack.c.b16 %v2113, %v2112
    %v2145 = vpack.c.b16 %v2115, %v2114
    %v2146 = vpack.c.b16 %v2117, %v2116
    %v2147 = vpack.c.b16 %v2119, %v2118
    %v2148 = vpack.c.b16 %v2121, %v2120
    %v2149 = vpack.c.b16 %v2123, %v2122
    %v2150 = vpack.c.b16 %v2125, %v2124
    %v2151 = vpack.c.b16 %v2127, %v2126
    %v2152 = vpack.c.b16 %v2129, %v2128
    %v2153 = vpack.c.b16 %v2131, %v2130
    %v2154 = vpack.c.b16 %v2133, %v2132
    %v2155 = vpack.c.b16 %v2135, %v2134
    %v2156 = vpack.c.b16 %v2137, %v2136
    %v2157 = vpack.c.b16 %v2139, %v2138
    %v2158 = vpack.c.b16 %v2141, %v2140
    %v2159 = vpack.c.b16 %v2143, %v2142
    %2176 = vmatprep.subr.bf16.mxu0 0
    %2177 = vmatpush1.bf16.msra.mxu0 %v2144
    %2178 = vmatprep.subr.bf16.mxu0 0
    %2179 = vmatpush1.bf16.msra.mxu0 %v2145
    %2180 = vmatprep.subr.bf16.mxu0 0
    %2181 = vmatpush1.bf16.msra.mxu0 %v2146
    %2182 = vmatprep.subr.bf16.mxu0 0
    %2183 = vmatpush1.bf16.msra.mxu0 %v2147
    %2184 = vmatprep.subr.bf16.mxu0 0
    %2185 = vmatpush1.bf16.msra.mxu0 %v2148
    %2186 = vmatprep.subr.bf16.mxu0 0
    %2187 = vmatpush1.bf16.msra.mxu0 %v2149
    %2188 = vmatprep.subr.bf16.mxu0 0
    %2189 = vmatpush1.bf16.msra.mxu0 %v2150
    %2190 = vmatprep.subr.bf16.mxu0 0
    %2191 = vmatpush1.bf16.msra.mxu0 %v2151
    %2192 = vmatprep.subr.bf16.mxu0 0
    %2193 = vmatpush1.bf16.msra.mxu0 %v2152
    %2194 = vmatprep.subr.bf16.mxu0 0
    %2195 = vmatpush1.bf16.msra.mxu0 %v2153
    %2196 = vmatprep.subr.bf16.mxu0 0
    %2197 = vmatpush1.bf16.msra.mxu0 %v2154
    %2198 = vmatprep.subr.bf16.mxu0 0
    %2199 = vmatpush1.bf16.msra.mxu0 %v2155
    %2200 = vmatprep.subr.bf16.mxu0 0
    %2201 = vmatpush1.bf16.msra.mxu0 %v2156
    %2202 = vmatprep.subr.bf16.mxu0 0
    %2203 = vmatpush1.bf16.msra.mxu0 %v2157
    %2204 = vmatprep.subr.bf16.mxu0 0
    %2205 = vmatpush1.bf16.msra.mxu0 %v2158
    %2206 = vmatprep.subr.bf16.mxu0 0
    %2207 = vmatpush1.bf16.msra.mxu0 %v2159
    %2208 = vmatprep.mubr.bf16.mxu0 %v2038
    %2209 = vmatmul.mubr.bf16.gmra.mrb[0].mxu0 %v2037
    %v2210 = vpop.f32.mrb[0].mxu0
    %v2211 = vadd.f32 %v2078, %v2210
    %v2212 = vpop.f32.mrb[0].mxu0
    %v2213 = vpop.f32.mrb[0].mxu0
    %v2214 = vadd.f32 %v2078, %v2213
    %v2215 = vpop.f32.mrb[0].mxu0
    %2216 = vdwg.mxu0
    %v2217 = vadd.f32 %v2211, %v1392
    %v2218 = vadd.f32 %v2214, %v1393
    %s2219 = scalar_lea.vmem %s10, 1
    %v2220 = vld [vmem:[%s2219] sm:$0x1]
    %s2221 = scalar_lea.vmem %s11, 1
    %v2222 = vld [vmem:[%s2221] sm:$0x1]
    %v2223 = vsel %vm184, %v2217, 0.0
    %2224 = vadd.xlane.f32.xlu0 %v2223
    %v2225 = vpop.xlane.xlu0 %2224
    %v2226 = vsel %vm184, %v2218, 0.0
    %2227 = vadd.xlane.f32.xlu0 %v2226
    %v2228 = vpop.xlane.xlu0 %2227
    %v2229 = vmul.f32 %v2225, %v191
    %v2230 = vmul.f32 %v2228, %v191
    %v2231 = vsub.f32 %v2217, %v2229
    %v2232 = vsub.f32 %v2218, %v2230
    %v2233 = vmul.f32 %v2231, %v2231
    %v2234 = vmul.f32 %v2232, %v2232
    %v2235 = vsel %vm184, %v2233, 0.0
    %2236 = vadd.xlane.f32.xlu0 %v2235
    %v2237 = vpop.xlane.xlu0 %2236
    %v2238 = vsel %vm184, %v2234, 0.0
    %2239 = vadd.xlane.f32.xlu0 %v2238
    %v2240 = vpop.xlane.xlu0 %2239
    %v2241 = vmul.f32 %v2237, %v191
    %v2242 = vmul.f32 %v2240, %v191
    %v2243 = vadd.f32 %v2241, 1e-12
    %v2244 = vadd.f32 %v2242, 1e-12
    %v2245 = vrsqrt.pop %v2243
    %v2246 = vrsqrt.pop %v2244
    %v2247 = vmul.f32 %v2231, %v2245
    %v2248 = vmul.f32 %v2232, %v2246
    %v2250 = vlaneseq
    %v2251 = vshrl.u32 %v2250, 7
    %v2252 = vsub.s32 0, %v2251
    %v2253 = vrot.slane %v2220, %v2252
    %v2255 = vmul.f32 %v2247, %v2253
    %v2256 = vmul.f32 %v2248, %v2253
    %v2258 = vlaneseq
    %v2259 = vshrl.u32 %v2258, 7
    %v2260 = vsub.s32 0, %v2259
    %v2261 = vrot.slane %v2222, %v2260
    %v2263 = vadd.f32 %v2255, %v2261
    %v2264 = vadd.f32 %v2256, %v2261
    %v2265 = vpack.c.bf16 %v2264, %v2263
    %s2266 = scalar_lea.vmem %s12, 16
    %v2267 = vld [vmem:[%s2266] sm:$0xf]
    %v2268 = vld [vmem:[%s2266 + $0x4] sm:$0xf]
    %v2269 = vld [vmem:[%s2266 + $0x8] sm:$0xf]
    %v2270 = vld [vmem:[%s2266 + $0xc] sm:$0xf]
    %s2271 = scalar_lea.vmem %s13, 1
    %v2272 = vld [vmem:[%s2271] sm:$0x1]
    %v2274 = vlaneseq
    %v2275 = vshrl.u32 %v2274, 7
    %v2276 = vsub.s32 0, %v2275
    %v2277 = vrot.slane %v2272, %v2276
    %v2283 = vunpack.c.l.b16 %v2267
    %v2284 = vunpack.c.l.b16 %v2268
    %v2285 = vunpack.c.l.b16 %v2269
    %v2286 = vunpack.c.l.b16 %v2270
    %v2287 = vpack.c.b16 %v2284, %v2283
    %v2288 = vpack.c.b16 %v2286, %v2285
    %v2292 = vsel %vm184, %v2265, 0
    %2294 = vmatprep.subr.bf16.mxu0 0
    %2295 = vmatpush1.bf16.msra.mxu0 %v2287
    %2296 = vmatprep.subr.bf16.mxu0 0
    %2297 = vmatpush1.bf16.msra.mxu0 %v2288
    %2298 = vmatprep.subr.bf16.mxu0 0
    %2299 = vmatpush1.bf16.msra.mxu0 0
    %2300 = vmatprep.subr.bf16.mxu0 0
    %2301 = vmatpush1.bf16.msra.mxu0 0
    %2302 = vmatprep.subr.bf16.mxu0 0
    %2303 = vmatpush1.bf16.msra.mxu0 0
    %2304 = vmatprep.subr.bf16.mxu0 0
    %2305 = vmatpush1.bf16.msra.mxu0 0
    %2306 = vmatprep.subr.bf16.mxu0 0
    %2307 = vmatpush1.bf16.msra.mxu0 0
    %2308 = vmatprep.subr.bf16.mxu0 0
    %2309 = vmatpush1.bf16.msra.mxu0 0
    %2310 = vmatprep.subr.bf16.mxu0 0
    %2311 = vmatpush1.bf16.msra.mxu0 0
    %2312 = vmatprep.subr.bf16.mxu0 0
    %2313 = vmatpush1.bf16.msra.mxu0 0
    %2314 = vmatprep.subr.bf16.mxu0 0
    %2315 = vmatpush1.bf16.msra.mxu0 0
    %2316 = vmatprep.subr.bf16.mxu0 0
    %2317 = vmatpush1.bf16.msra.mxu0 0
    %2318 = vmatprep.subr.bf16.mxu0 0
    %2319 = vmatpush1.bf16.msra.mxu0 0
    %2320 = vmatprep.subr.bf16.mxu0 0
    %2321 = vmatpush1.bf16.msra.mxu0 0
    %2322 = vmatprep.subr.bf16.mxu0 0
    %2323 = vmatpush1.bf16.msra.mxu0 0
    %2324 = vmatprep.subr.bf16.mxu0 0
    %2325 = vmatpush1.bf16.msra.mxu0 0
    %2326 = vmatprep.mubr.bf16.mxu0 0
    %2327 = vmatmul.mubr.bf16.gmra.mrb[0].mxu0 %v2292
    %v2328 = vpop.f32.mrb[0].mxu0
    %v2329 = vadd.f32 %v2277, %v2328
    %v2330 = vpop.f32.mrb[0].mxu0
    %v2331 = vpop.f32.mrb[0].mxu0
    %v2332 = vadd.f32 %v2277, %v2331
    %v2333 = vpop.f32.mrb[0].mxu0
    %2334 = vdwg.mxu0
    %v2335 = vmul.f32 %v2329, %v2329
    %v2336 = vmul.f32 %v2332, %v2332
    %v2337 = vmul.f32 %v2329, %v2335
    %v2338 = vmul.f32 %v2332, %v2336
    %v2339 = vmul.f32 %v2337, 0.044715
    %v2340 = vmul.f32 %v2338, 0.044715
    %v2341 = vadd.f32 %v2329, %v2339
    %v2342 = vadd.f32 %v2332, %v2340
    %v2343 = vmul.f32 %v2341, 0.7978846
    %v2344 = vmul.f32 %v2342, 0.7978846
    %v2345 = vtanh.pop %v2343
    %v2346 = vtanh.pop %v2344
    %v2347 = vadd.f32 %v2345, 1.0
    %v2348 = vadd.f32 %v2346, 1.0
    %v2349 = vmul.f32 %v2347, 0.5
    %v2350 = vmul.f32 %v2348, 0.5
    %v2351 = vmul.f32 %v2329, %v2349
    %v2352 = vmul.f32 %v2332, %v2350
    %v2353 = vpack.c.bf16 %v2352, %v2351
    %s2354 = scalar_lea.vmem %s14, 64
    %v2355 = vld [vmem:[%s2354] sm:$0xf]
    %v2356 = vld [vmem:[%s2354 + $0x4] sm:$0xf]
    %v2357 = vld [vmem:[%s2354 + $0x8] sm:$0xf]
    %v2358 = vld [vmem:[%s2354 + $0xc] sm:$0xf]
    %v2359 = vld [vmem:[%s2354 + $0x10] sm:$0xf]
    %v2360 = vld [vmem:[%s2354 + $0x14] sm:$0xf]
    %v2361 = vld [vmem:[%s2354 + $0x18] sm:$0xf]
    %v2362 = vld [vmem:[%s2354 + $0x1c] sm:$0xf]
    %v2363 = vld [vmem:[%s2354 + $0x20] sm:$0xf]
    %v2364 = vld [vmem:[%s2354 + $0x24] sm:$0xf]
    %v2365 = vld [vmem:[%s2354 + $0x28] sm:$0xf]
    %v2366 = vld [vmem:[%s2354 + $0x2c] sm:$0xf]
    %v2367 = vld [vmem:[%s2354 + $0x30] sm:$0xf]
    %v2368 = vld [vmem:[%s2354 + $0x34] sm:$0xf]
    %v2369 = vld [vmem:[%s2354 + $0x38] sm:$0xf]
    %v2370 = vld [vmem:[%s2354 + $0x3c] sm:$0xf]
    %s2371 = scalar_lea.vmem %s15, 1
    %v2372 = vld [vmem:[%s2371] sm:$0x1]
    %v2374 = vlaneseq
    %v2375 = vshrl.u32 %v2374, 7
    %v2376 = vsub.s32 0, %v2375
    %v2377 = vrot.slane %v2372, %v2376
    %v2395 = vunpack.c.l.b16 %v2355
    %v2396 = vunpack.c.l.b16 %v2356
    %v2397 = vunpack.c.l.b16 %v2357
    %v2398 = vunpack.c.l.b16 %v2358
    %v2399 = vunpack.c.l.b16 %v2359
    %v2400 = vunpack.c.l.b16 %v2360
    %v2401 = vunpack.c.l.b16 %v2361
    %v2402 = vunpack.c.l.b16 %v2362
    %v2403 = vunpack.c.l.b16 %v2363
    %v2404 = vunpack.c.l.b16 %v2364
    %v2405 = vunpack.c.l.b16 %v2365
    %v2406 = vunpack.c.l.b16 %v2366
    %v2407 = vunpack.c.l.b16 %v2367
    %v2408 = vunpack.c.l.b16 %v2368
    %v2409 = vunpack.c.l.b16 %v2369
    %v2410 = vunpack.c.l.b16 %v2370
    %v2411 = vpack.c.b16 %v2396, %v2395
    %v2412 = vpack.c.b16 %v2398, %v2397
    %v2413 = vpack.c.b16 %v2400, %v2399
    %v2414 = vpack.c.b16 %v2402, %v2401
    %v2415 = vpack.c.b16 %v2404, %v2403
    %v2416 = vpack.c.b16 %v2406, %v2405
    %v2417 = vpack.c.b16 %v2408, %v2407
    %v2418 = vpack.c.b16 %v2410, %v2409
    %2427 = vmatprep.subr.bf16.mxu0 0
    %2428 = vmatpush1.bf16.msra.mxu0 %v2411
    %2429 = vmatprep.subr.bf16.mxu0 0
    %2430 = vmatpush1.bf16.msra.mxu0 %v2412
    %2431 = vmatprep.subr.bf16.mxu0 0
    %2432 = vmatpush1.bf16.msra.mxu0 %v2413
    %2433 = vmatprep.subr.bf16.mxu0 0
    %2434 = vmatpush1.bf16.msra.mxu0 %v2414
    %2435 = vmatprep.subr.bf16.mxu0 0
    %2436 = vmatpush1.bf16.msra.mxu0 %v2415
    %2437 = vmatprep.subr.bf16.mxu0 0
    %2438 = vmatpush1.bf16.msra.mxu0 %v2416
    %2439 = vmatprep.subr.bf16.mxu0 0
    %2440 = vmatpush1.bf16.msra.mxu0 %v2417
    %2441 = vmatprep.subr.bf16.mxu0 0
    %2442 = vmatpush1.bf16.msra.mxu0 %v2418
    %2443 = vmatprep.subr.bf16.mxu0 0
    %2444 = vmatpush1.bf16.msra.mxu0 0
    %2445 = vmatprep.subr.bf16.mxu0 0
    %2446 = vmatpush1.bf16.msra.mxu0 0
    %2447 = vmatprep.subr.bf16.mxu0 0
    %2448 = vmatpush1.bf16.msra.mxu0 0
    %2449 = vmatprep.subr.bf16.mxu0 0
    %2450 = vmatpush1.bf16.msra.mxu0 0
    %2451 = vmatprep.subr.bf16.mxu0 0
    %2452 = vmatpush1.bf16.msra.mxu0 0
    %2453 = vmatprep.subr.bf16.mxu0 0
    %2454 = vmatpush1.bf16.msra.mxu0 0
    %2455 = vmatprep.subr.bf16.mxu0 0
    %2456 = vmatpush1.bf16.msra.mxu0 0
    %2457 = vmatprep.subr.bf16.mxu0 0
    %2458 = vmatpush1.bf16.msra.mxu0 0
    %2459 = vmatprep.mubr.bf16.mxu0 0
    %2460 = vmatmul.mubr.bf16.gmra.mrb[0].mxu0 %v2353
    %v2461 = vpop.f32.mrb[0].mxu0
    %v2462 = vadd.f32 %v2377, %v2461
    %v2463 = vpop.f32.mrb[0].mxu0
    %v2464 = vpop.f32.mrb[0].mxu0
    %v2465 = vadd.f32 %v2377, %v2464
    %v2466 = vpop.f32.mrb[0].mxu0
    %2467 = vdwg.mxu0
    %v2468 = vadd.f32 %v2462, %v2263
    %v2469 = vadd.f32 %v2465, %v2264
    %s2470 = scalar_lea.vmem %s16, 1
    %v2471 = vld [vmem:[%s2470] sm:$0x1]
    %s2472 = scalar_lea.vmem %s17, 1
    %v2473 = vld [vmem:[%s2472] sm:$0x1]
    %v2474 = vsel %vm184, %v2468, 0.0
    %2475 = vadd.xlane.f32.xlu0 %v2474
    %v2476 = vpop.xlane.xlu0 %2475
    %v2477 = vsel %vm184, %v2469, 0.0
    %2478 = vadd.xlane.f32.xlu0 %v2477
    %v2479 = vpop.xlane.xlu0 %2478
    %v2480 = vmul.f32 %v2476, %v191
    %v2481 = vmul.f32 %v2479, %v191
    %v2482 = vsub.f32 %v2468, %v2480
    %v2483 = vsub.f32 %v2469, %v2481
    %v2484 = vmul.f32 %v2482, %v2482
    %v2485 = vmul.f32 %v2483, %v2483
    %v2486 = vsel %vm184, %v2484, 0.0
    %2487 = vadd.xlane.f32.xlu0 %v2486
    %v2488 = vpop.xlane.xlu0 %2487
    %v2489 = vsel %vm184, %v2485, 0.0
    %2490 = vadd.xlane.f32.xlu0 %v2489
    %v2491 = vpop.xlane.xlu0 %2490
    %v2492 = vmul.f32 %v2488, %v191
    %v2493 = vmul.f32 %v2491, %v191
    %v2494 = vadd.f32 %v2492, 1e-12
    %v2495 = vadd.f32 %v2493, 1e-12
    %v2496 = vrsqrt.pop %v2494
    %v2497 = vrsqrt.pop %v2495
    %v2498 = vmul.f32 %v2482, %v2496
    %v2499 = vmul.f32 %v2483, %v2497
    %v2501 = vlaneseq
    %v2502 = vshrl.u32 %v2501, 7
    %v2503 = vsub.s32 0, %v2502
    %v2504 = vrot.slane %v2471, %v2503
    %v2506 = vmul.f32 %v2498, %v2504
    %v2507 = vmul.f32 %v2499, %v2504
    %v2509 = vlaneseq
    %v2510 = vshrl.u32 %v2509, 7
    %v2511 = vsub.s32 0, %v2510
    %v2512 = vrot.slane %v2473, %v2511
    %v2514 = vadd.f32 %v2506, %v2512
    %v2515 = vadd.f32 %v2507, %v2512
    %v2516 = vpack.c.bf16 %v2515, %v2514
    %v2517 = vld [vmem:[%s18] sm:$0xf]
    %v2518 = vld [vmem:[%s18 + $0x4] sm:$0xf]
    %v2519 = vld [vmem:[%s18 + $0x8] sm:$0xf]
    %v2520 = vld [vmem:[%s18 + $0xc] sm:$0xf]
    %v2521 = vld [vmem:[%s19] sm:$0x1]
    %v2523 = vlaneseq
    %v2524 = vshrl.u32 %v2523, 7
    %v2525 = vsub.s32 0, %v2524
    %v2526 = vrot.slane %v2521, %v2525
    %v2532 = vunpack.c.l.b16 %v2517
    %v2533 = vunpack.c.l.b16 %v2518
    %v2534 = vunpack.c.l.b16 %v2519
    %v2535 = vunpack.c.l.b16 %v2520
    %v2536 = vpack.c.b16 %v2533, %v2532
    %v2537 = vpack.c.b16 %v2535, %v2534
    %v2541 = vsel %vm184, %v2516, 0
    %2543 = vmatprep.subr.bf16.mxu0 0
    %2544 = vmatpush1.bf16.msra.mxu0 %v2536
    %2545 = vmatprep.subr.bf16.mxu0 0
    %2546 = vmatpush1.bf16.msra.mxu0 %v2537
    %2547 = vmatprep.subr.bf16.mxu0 0
    %2548 = vmatpush1.bf16.msra.mxu0 0
    %2549 = vmatprep.subr.bf16.mxu0 0
    %2550 = vmatpush1.bf16.msra.mxu0 0
    %2551 = vmatprep.subr.bf16.mxu0 0
    %2552 = vmatpush1.bf16.msra.mxu0 0
    %2553 = vmatprep.subr.bf16.mxu0 0
    %2554 = vmatpush1.bf16.msra.mxu0 0
    %2555 = vmatprep.subr.bf16.mxu0 0
    %2556 = vmatpush1.bf16.msra.mxu0 0
    %2557 = vmatprep.subr.bf16.mxu0 0
    %2558 = vmatpush1.bf16.msra.mxu0 0
    %2559 = vmatprep.subr.bf16.mxu0 0
    %2560 = vmatpush1.bf16.msra.mxu0 0
    %2561 = vmatprep.subr.bf16.mxu0 0
    %2562 = vmatpush1.bf16.msra.mxu0 0
    %2563 = vmatprep.subr.bf16.mxu0 0
    %2564 = vmatpush1.bf16.msra.mxu0 0
    %2565 = vmatprep.subr.bf16.mxu0 0
    %2566 = vmatpush1.bf16.msra.mxu0 0
    %2567 = vmatprep.subr.bf16.mxu0 0
    %2568 = vmatpush1.bf16.msra.mxu0 0
    %2569 = vmatprep.subr.bf16.mxu0 0
    %2570 = vmatpush1.bf16.msra.mxu0 0
    %2571 = vmatprep.subr.bf16.mxu0 0
    %2572 = vmatpush1.bf16.msra.mxu0 0
    %2573 = vmatprep.subr.bf16.mxu0 0
    %2574 = vmatpush1.bf16.msra.mxu0 0
    %2575 = vmatprep.mubr.bf16.mxu0 0
    %2576 = vmatmul.mubr.bf16.gmra.mrb[0].mxu0 %v2541
    %v2577 = vpop.f32.mrb[0].mxu0
    %v2578 = vadd.f32 %v2526, %v2577
    %v2579 = vpop.f32.mrb[0].mxu0
    %v2580 = vpop.f32.mrb[0].mxu0
    %v2581 = vadd.f32 %v2526, %v2580
    %v2582 = vpop.f32.mrb[0].mxu0
    %2583 = vdwg.mxu0
    %v2584 = vmax.f32 %v2578, 0.0
    %v2585 = vmax.f32 %v2581, 0.0
    %v2586 = vpack.c.bf16 %v2585, %v2584
    %v2587 = vld [vmem:[%s20] sm:$0xf]
    %v2588 = vld [vmem:[%s20 + $0x4] sm:$0xf]
    %v2589 = vld [vmem:[%s20 + $0x8] sm:$0xf]
    %v2590 = vld [vmem:[%s20 + $0xc] sm:$0xf]
    %v2591 = vld [vmem:[%s20 + $0x10] sm:$0xf]
    %v2592 = vld [vmem:[%s20 + $0x14] sm:$0xf]
    %v2593 = vld [vmem:[%s20 + $0x18] sm:$0xf]
    %v2594 = vld [vmem:[%s20 + $0x1c] sm:$0xf]
    %v2595 = vld [vmem:[%s20 + $0x20] sm:$0xf]
    %v2596 = vld [vmem:[%s20 + $0x24] sm:$0xf]
    %v2597 = vld [vmem:[%s20 + $0x28] sm:$0xf]
    %v2598 = vld [vmem:[%s20 + $0x2c] sm:$0xf]
    %v2599 = vld [vmem:[%s20 + $0x30] sm:$0xf]
    %v2600 = vld [vmem:[%s20 + $0x34] sm:$0xf]
    %v2601 = vld [vmem:[%s20 + $0x38] sm:$0xf]
    %v2602 = vld [vmem:[%s20 + $0x3c] sm:$0xf]
    %v2603 = vld [vmem:[%s21] sm:$0x1]
    %v2605 = vlaneseq
    %v2606 = vshrl.u32 %v2605, 7
    %v2607 = vsub.s32 0, %v2606
    %v2608 = vrot.slane %v2603, %v2607
    %v2626 = vunpack.c.l.b16 %v2587
    %v2627 = vunpack.c.l.b16 %v2588
    %v2628 = vunpack.c.l.b16 %v2589
    %v2629 = vunpack.c.l.b16 %v2590
    %v2630 = vunpack.c.l.b16 %v2591
    %v2631 = vunpack.c.l.b16 %v2592
    %v2632 = vunpack.c.l.b16 %v2593
    %v2633 = vunpack.c.l.b16 %v2594
    %v2634 = vunpack.c.l.b16 %v2595
    %v2635 = vunpack.c.l.b16 %v2596
    %v2636 = vunpack.c.l.b16 %v2597
    %v2637 = vunpack.c.l.b16 %v2598
    %v2638 = vunpack.c.l.b16 %v2599
    %v2639 = vunpack.c.l.b16 %v2600
    %v2640 = vunpack.c.l.b16 %v2601
    %v2641 = vunpack.c.l.b16 %v2602
    %v2642 = vpack.c.b16 %v2627, %v2626
    %v2643 = vpack.c.b16 %v2629, %v2628
    %v2644 = vpack.c.b16 %v2631, %v2630
    %v2645 = vpack.c.b16 %v2633, %v2632
    %v2646 = vpack.c.b16 %v2635, %v2634
    %v2647 = vpack.c.b16 %v2637, %v2636
    %v2648 = vpack.c.b16 %v2639, %v2638
    %v2649 = vpack.c.b16 %v2641, %v2640
    %2658 = vmatprep.subr.bf16.mxu0 0
    %2659 = vmatpush1.bf16.msra.mxu0 %v2642
    %2660 = vmatprep.subr.bf16.mxu0 0
    %2661 = vmatpush1.bf16.msra.mxu0 %v2643
    %2662 = vmatprep.subr.bf16.mxu0 0
    %2663 = vmatpush1.bf16.msra.mxu0 %v2644
    %2664 = vmatprep.subr.bf16.mxu0 0
    %2665 = vmatpush1.bf16.msra.mxu0 %v2645
    %2666 = vmatprep.subr.bf16.mxu0 0
    %2667 = vmatpush1.bf16.msra.mxu0 %v2646
    %2668 = vmatprep.subr.bf16.mxu0 0
    %2669 = vmatpush1.bf16.msra.mxu0 %v2647
    %2670 = vmatprep.subr.bf16.mxu0 0
    %2671 = vmatpush1.bf16.msra.mxu0 %v2648
    %2672 = vmatprep.subr.bf16.mxu0 0
    %2673 = vmatpush1.bf16.msra.mxu0 %v2649
    %2674 = vmatprep.subr.bf16.mxu0 0
    %2675 = vmatpush1.bf16.msra.mxu0 0
    %2676 = vmatprep.subr.bf16.mxu0 0
    %2677 = vmatpush1.bf16.msra.mxu0 0
    %2678 = vmatprep.subr.bf16.mxu0 0
    %2679 = vmatpush1.bf16.msra.mxu0 0
    %2680 = vmatprep.subr.bf16.mxu0 0
    %2681 = vmatpush1.bf16.msra.mxu0 0
    %2682 = vmatprep.subr.bf16.mxu0 0
    %2683 = vmatpush1.bf16.msra.mxu0 0
    %2684 = vmatprep.subr.bf16.mxu0 0
    %2685 = vmatpush1.bf16.msra.mxu0 0
    %2686 = vmatprep.subr.bf16.mxu0 0
    %2687 = vmatpush1.bf16.msra.mxu0 0
    %2688 = vmatprep.subr.bf16.mxu0 0
    %2689 = vmatpush1.bf16.msra.mxu0 0
    %2690 = vmatprep.mubr.bf16.mxu0 0
    %2691 = vmatmul.mubr.bf16.gmra.mrb[0].mxu0 %v2586
    %v2692 = vpop.f32.mrb[0].mxu0
    %v2693 = vadd.f32 %v2608, %v2692
    %v2694 = vpop.f32.mrb[0].mxu0
    %v2695 = vpop.f32.mrb[0].mxu0
    %v2696 = vadd.f32 %v2608, %v2695
    %v2697 = vpop.f32.mrb[0].mxu0
    %2698 = vdwg.mxu0
    %2699 = vst [vmem:[#allocation2] sm:$0x1] %v2693
    %2700 = vst [vmem:[#allocation2 + $0x1] sm:$0x1] %v2696
    // Predicated region
    $region90: #{bert_forward.1} parent=1 // pred_check
      _
    $region91: #{bert_forward.1} parent=1 // pred_check_branch
      %2702 = sbr.rel (0) target = $region93
    $region92: #{bert_forward.1} parent=1 // pred_region
      %s2704 = ssub.s32 32, 32
      %2705 = vsyncadd [#allocation3], %s2704
      %s2707 = sshll.u32 [#allocation2], 4
      %s2708 = int_to_ptr.vmem [resolvable:$true] %s2707
      %2710 = dma.vmem_to_hbm [thread:$0]  %s2708, 32, %s22, [#allocation3]
    $region93: #{bert_forward.1} parent=1 // pred_fallthru
      _
    // Predicated region
    $region94: #{bert_forward.1} parent=1 // pred_check
      _
    $region95: #{bert_forward.1} parent=1 // pred_check_branch
      %2712 = sbr.rel (0) target = $region97
    $region96: #{bert_forward.1} parent=1 // pred_region
      %2713 = dma.done [#allocation3], 32
    $region97: #{bert_forward.1} parent=1 // pred_fallthru
      _
    %2714 = vsyncpa [#allocation3], 1

</llo_original>
